<compile_context>
chip_gen: v5e
topology: v5e:2x2
jax: 0.10.0
libtpu: 0.0.40
codegen_flags: <defaults>
</compile_context>

<pallas_src>
import functools

import jax
import jax.numpy as jnp
from jax import lax
from jax.experimental import pallas as pl
from jax.experimental.pallas import tpu as pltpu


def _layer_norm(v, g, b, eps=1e-5):
    mu = jnp.mean(v, axis=-1, keepdims=True)
    var = jnp.mean(jnp.square(v - mu), axis=-1, keepdims=True)
    return (v - mu) * lax.rsqrt(var + eps) * g + b


def model_kernel(x_ref, w_in_ref, b_in_ref,
                 w_qkv_ref, b_qkv_ref, w_o_ref, b_o_ref,
                 w1_ref, b1_ref, w2_ref, b2_ref,
                 ln_ref, gnbn_ref, w_head_ref, b_head_ref,
                 out_ref, *, num_heads, n_type, n_date):
    TB, S, input_dim = x_ref.shape          # batch tile of this grid step
    N = TB * S
    H = num_heads
    L, D, d_inner = w1_ref.shape
    Dh = D // H

    # Fold batch into the row (sublane) dimension for all dense layers.
    x = x_ref[...].reshape(N, input_dim)

    # inlinear + ReLU
    h = jnp.dot(x, w_in_ref[...], preferred_element_type=jnp.float32) + b_in_ref[...]
    h = jnp.maximum(h, 0.0)

    for l in range(L):
        ln_l = ln_ref[l]  # (4, D): [gamma1, beta1, gamma2, beta2]

        # --- multi-head self-attention ---------------------------------------
        # Per-head projections use pre-split weight stacks, so there is no lane
        # slicing of activations and no concat; the output projection is
        # accumulated per head (== concat(heads) @ Wo).  Softmax scale is
        # already folded into the Q weights/bias.
        attn = jnp.zeros((N, D), jnp.float32)
        for hd in range(H):
            iq = (3 * l + 0) * H + hd
            ik = (3 * l + 1) * H + hd
            iv = (3 * l + 2) * H + hd
            qh = (jnp.dot(h, w_qkv_ref[iq], preferred_element_type=jnp.float32)
                  + b_qkv_ref[iq]).reshape(TB, S, Dh)
            kh = (jnp.dot(h, w_qkv_ref[ik], preferred_element_type=jnp.float32)
                  + b_qkv_ref[ik]).reshape(TB, S, Dh)
            vh = (jnp.dot(h, w_qkv_ref[iv], preferred_element_type=jnp.float32)
                  + b_qkv_ref[iv]).reshape(TB, S, Dh)

            s = jnp.einsum('bqd,bkd->bqk', qh, kh,
                           preferred_element_type=jnp.float32)
            s = s - jnp.max(s, axis=-1, keepdims=True)
            p = jnp.exp(s)
            p = p * pl.reciprocal(jnp.sum(p, axis=-1, keepdims=True), approx=False)
            ctx = jnp.einsum('bqk,bkd->bqd', p, vh,
                             preferred_element_type=jnp.float32)
            attn = attn + jnp.dot(ctx.reshape(N, Dh), w_o_ref[l * H + hd],
                                  preferred_element_type=jnp.float32)
        attn = attn + b_o_ref[l]

        # residual + norm1
        h = _layer_norm(h + attn, ln_l[0:1], ln_l[1:2])

        # --- feed-forward (relu activation) ----------------------------------
        ff = jnp.dot(h, w1_ref[l], preferred_element_type=jnp.float32) + b1_ref[l]
        ff = jnp.maximum(ff, 0.0)
        ff = jnp.dot(ff, w2_ref[l], preferred_element_type=jnp.float32) + b2_ref[l]

        # residual + norm2
        h = _layer_norm(h + ff, ln_l[2:3], ln_l[3:4])

    # final encoder norm
    gnbn = gnbn_ref[...]
    h = _layer_norm(h, gnbn[0:1], gnbn[1:2])

    # max-pool over the sequence axis, then ReLU
    pooled = jnp.maximum(jnp.max(h.reshape(TB, S, D), axis=1), 0.0)  # (TB, D)

    # fused classification heads (lane-dense, padded to a multiple of 128)
    logits = (jnp.dot(pooled, w_head_ref[...], preferred_element_type=jnp.float32)
              + b_head_ref[...])  # (TB, P)
    P = logits.shape[-1]

    # merged segment log-softmax: one exp + one log over the whole tile.
    lanes = lax.broadcasted_iota(jnp.int32, (TB, P), 1)
    mask_t = lanes < n_type
    mask_d = jnp.logical_and(lanes >= n_type, lanes < n_type + n_date)
    valid = jnp.logical_or(mask_t, mask_d)

    neg = jnp.float32(-1e30)
    m_t = jnp.max(jnp.where(mask_t, logits, neg), axis=-1, keepdims=True)
    m_d = jnp.max(jnp.where(mask_d, logits, neg), axis=-1, keepdims=True)
    m = jnp.where(mask_t, m_t, m_d)                       # per-lane segment max
    e = jnp.exp(jnp.where(valid, logits, neg) - m)        # single exp; 0 on pad lanes
    s_t = jnp.sum(jnp.where(mask_t, e, 0.0), axis=-1, keepdims=True)
    s_d = jnp.sum(jnp.where(mask_d, e, 0.0), axis=-1, keepdims=True)
    lse = m + jnp.log(jnp.where(mask_t, s_t, s_d))
    result = jnp.where(valid, logits - lse, 0.0)

    out_ref[...] = result.reshape(TB, 1, P)


def prepare_params(params, *, num_heads):
    """One-time weight repack (call once at model-setup time, NOT per forward):
      - attention scale folded into Q weights/bias,
      - per-head Q/K/V weight stack (L*3*H, D, Dh) and out-proj stack (L*H, Dh, D),
      - per-layer LayerNorm params stacked, final norm stacked,
      - classification heads fused and padded to a 128-lane multiple."""
    L, D, _ = params['wo'].shape
    H = num_heads
    Dh = D // H
    scale = float(Dh) ** -0.5

    def split_w(w):   # (L, D, D) -> (L, H, D, Dh) ; heads contiguous along features
        return jnp.transpose(w.reshape(L, D, H, Dh), (0, 2, 1, 3))

    def split_b(b):   # (L, 1, D) -> (L, H, 1, Dh)
        return jnp.transpose(b.reshape(L, 1, H, Dh), (0, 2, 1, 3))

    w_qkv = jnp.stack([split_w(params['wq'] * scale),
                       split_w(params['wk']),
                       split_w(params['wv'])], axis=1).reshape(L * 3 * H, D, Dh)
    b_qkv = jnp.stack([split_b(params['bq'] * scale),
                       split_b(params['bk']),
                       split_b(params['bv'])], axis=1).reshape(L * 3 * H, 1, Dh)
    w_o = params['wo'].reshape(L, H, Dh, D).reshape(L * H, Dh, D)

    ln = jnp.concatenate([params['g1'], params['be1'],
                          params['g2'], params['be2']], axis=1)        # (L, 4, D)
    gnbn = jnp.concatenate([params['gn'], params['bn']], axis=0)       # (2, D)

    n_type = params['wt'].shape[1]
    n_date = params['wd'].shape[1]
    n_out = n_type + n_date
    P = max(128, ((n_out + 127) // 128) * 128)
    w_head = jnp.pad(jnp.concatenate([params['wt'], params['wd']], axis=-1),
                     ((0, 0), (0, P - n_out)))                         # (D, P)
    b_head = jnp.pad(jnp.concatenate([params['bt'], params['bd']], axis=-1),
                     ((0, 0), (0, P - n_out)))                         # (1, P)

    weights = (params['w_in'], params['b_in'],
               w_qkv, b_qkv, w_o, params['bo'],
               params['w1'], params['b1'], params['w2'], params['b2'],
               ln, gnbn, w_head, b_head)
    meta = dict(num_heads=H, n_type=n_type, n_date=n_date, n_layers=L,
                d_model=D, d_inner=params['w1'].shape[-1], padded_out=P)
    return weights, meta


def transformer_model(x, weights, meta, *, batch_tile=None):
    B, S, input_dim = x.shape
    n_type, n_date, P = meta['n_type'], meta['n_date'], meta['padded_out']
    H, L, D, DI = meta['num_heads'], meta['n_layers'], meta['d_model'], meta['d_inner']

    # At most 2 grid steps by default: one per v7x TensorCore (parallel semantics);
    # on v5e/v6e (1 TC) this just adds one ~0.35us step of overhead.
    if batch_tile is None:
        batch_tile = max(1, (B + 1) // 2)
    TB = min(batch_tile, B)
    grid = (pl.cdiv(B, TB),)

    def const_spec(arr):
        nd = arr.ndim
        return pl.BlockSpec(arr.shape, lambda i, _nd=nd: (0,) * _nd)

    in_specs = [pl.BlockSpec((TB, S, input_dim), lambda i: (i, 0, 0))]
    in_specs += [const_spec(w) for w in weights]
    out_specs = pl.BlockSpec((TB, 1, P), lambda i: (i, 0, 0))
    out_shape = jax.ShapeDtypeStruct((B, 1, P), jnp.float32)

    # Rough cost estimate so XLA can schedule around the custom call.
    flops = int(2 * B * S * (input_dim * D + L * (4 * D * D + 2 * S * D + 2 * D * DI))
                + 2 * B * D * P)
    transcendentals = int(B * (L * H * S * S + P))
    bytes_accessed = int(4 * (x.size + sum(int(w.size) for w in weights) + B * P))

    kernel = functools.partial(model_kernel, num_heads=H,
                               n_type=n_type, n_date=n_date)
    out = pl.pallas_call(
        kernel,
        grid=grid,
        in_specs=in_specs,
        out_specs=out_specs,
        out_shape=out_shape,
        compiler_params=pltpu.CompilerParams(
            dimension_semantics=("parallel",)),
        cost_estimate=pl.CostEstimate(flops=flops,
                                      transcendentals=transcendentals,
                                      bytes_accessed=bytes_accessed),
    )(x, *weights)

    out = out[:, 0, :]
    return {'type': out[:, :n_type], 'date': out[:, n_type:n_type + n_date]}


if __name__ == "__main__":
    # Small shapes consistent with the module:
    #   input_dim=12, n_type=5, n_date=7, window_size=(2,4) -> seq len S = 8,
    #   d_model=32, n_head=2, n_layers=3, d_inner=32, batch=2.
    B, S, input_dim = 2, 8, 12
    d_model, n_head, n_layers, d_inner = 32, 2, 3, 32
    n_type, n_date = 5, 7

    key = jax.random.PRNGKey(0)
    ks = jax.random.split(key, 16)

    def init(k, shape, scale=0.05):
        return (scale * jax.random.normal(k, shape)).astype(jnp.float32)

    params = {
        'w_in': init(ks[0], (input_dim, d_model)),
        'b_in': init(ks[1], (1, d_model)),
        # per-layer stacked attention weights (in_features, out_features layout; x @ W)
        'wq': init(ks[2], (n_layers, d_model, d_model)),
        'bq': jnp.zeros((n_layers, 1, d_model), jnp.float32),
        'wk': init(ks[3], (n_layers, d_model, d_model)),
        'bk': jnp.zeros((n_layers, 1, d_model), jnp.float32),
        'wv': init(ks[4], (n_layers, d_model, d_model)),
        'bv': jnp.zeros((n_layers, 1, d_model), jnp.float32),
        'wo': init(ks[5], (n_layers, d_model, d_model)),
        'bo': jnp.zeros((n_layers, 1, d_model), jnp.float32),
        # per-layer feed-forward
        'w1': init(ks[6], (n_layers, d_model, d_inner)),
        'b1': init(ks[7], (n_layers, 1, d_inner)),
        'w2': init(ks[8], (n_layers, d_inner, d_model)),
        'b2': init(ks[9], (n_layers, 1, d_model)),
        # per-layer layer norms
        'g1': jnp.ones((n_layers, 1, d_model), jnp.float32),
        'be1': jnp.zeros((n_layers, 1, d_model), jnp.float32),
        'g2': jnp.ones((n_layers, 1, d_model), jnp.float32),
        'be2': jnp.zeros((n_layers, 1, d_model), jnp.float32),
        # final encoder norm
        'gn': jnp.ones((1, d_model), jnp.float32),
        'bn': jnp.zeros((1, d_model), jnp.float32),
        # heads
        'wt': init(ks[10], (d_model, n_type)),
        'bt': init(ks[11], (1, n_type)),
        'wd': init(ks[12], (d_model, n_date)),
        'bd': init(ks[13], (1, n_date)),
    }

    x = jax.random.normal(ks[15], (B, S, input_dim), dtype=jnp.float32)

    # One-time weight repack (outside the call path), then run the kernel.
    weights, meta = prepare_params(params, num_heads=n_head)
    out = transformer_model(x, weights, meta)
    jax.block_until_ready(out)
    assert out['type'].shape == (B, n_type)
    assert out['date'].shape == (B, n_date)
    assert bool(jnp.all(jnp.isfinite(out['type']))) and bool(jnp.all(jnp.isfinite(out['date'])))
    print("KERNEL_OK")
</pallas_src>

<mosaic_0001>
module attributes {stable_mosaic.version = 11 : i64} {
  func.func @model_kernel(%arg0: i32, %arg1: memref<1x8x12xf32, #tpu.memory_space<vmem>>, %arg2: memref<12x32xf32, #tpu.memory_space<vmem>>, %arg3: memref<1x32xf32, #tpu.memory_space<vmem>>, %arg4: memref<18x32x16xf32, #tpu.memory_space<vmem>>, %arg5: memref<18x1x16xf32, #tpu.memory_space<vmem>>, %arg6: memref<6x16x32xf32, #tpu.memory_space<vmem>>, %arg7: memref<3x1x32xf32, #tpu.memory_space<vmem>>, %arg8: memref<3x32x32xf32, #tpu.memory_space<vmem>>, %arg9: memref<3x1x32xf32, #tpu.memory_space<vmem>>, %arg10: memref<3x32x32xf32, #tpu.memory_space<vmem>>, %arg11: memref<3x1x32xf32, #tpu.memory_space<vmem>>, %arg12: memref<3x4x32xf32, #tpu.memory_space<vmem>>, %arg13: memref<2x32xf32, #tpu.memory_space<vmem>>, %arg14: memref<32x128xf32, #tpu.memory_space<vmem>>, %arg15: memref<1x128xf32, #tpu.memory_space<vmem>>, %arg16: memref<1x1x128xf32, #tpu.memory_space<vmem>>) attributes {dimension_semantics = [#tpu.dimension_semantics<parallel>], iteration_bounds = array<i64: 2>, scalar_prefetch = 0 : i64, scratch_operands = 0 : i64, tpu.core_type = #tpu.core_type<tc>, window_params = [{transform_indices = @transform_0, window_bounds = array<i64: 1, 8, 12>}, {pipeline_mode = #tpu.pipeline_mode<synchronous>, transform_indices = @transform_1, window_bounds = array<i64: 12, 32>}, {pipeline_mode = #tpu.pipeline_mode<synchronous>, transform_indices = @transform_2, window_bounds = array<i64: 1, 32>}, {pipeline_mode = #tpu.pipeline_mode<synchronous>, transform_indices = @transform_3, window_bounds = array<i64: 18, 32, 16>}, {pipeline_mode = #tpu.pipeline_mode<synchronous>, transform_indices = @transform_4, window_bounds = array<i64: 18, 1, 16>}, {pipeline_mode = #tpu.pipeline_mode<synchronous>, transform_indices = @transform_5, window_bounds = array<i64: 6, 16, 32>}, {pipeline_mode = #tpu.pipeline_mode<synchronous>, transform_indices = @transform_6, window_bounds = array<i64: 3, 1, 32>}, {pipeline_mode = #tpu.pipeline_mode<synchronous>, transform_indices = @transform_7, window_bounds = array<i64: 3, 32, 32>}, {pipeline_mode = #tpu.pipeline_mode<synchronous>, transform_indices = @transform_8, window_bounds = array<i64: 3, 1, 32>}, {pipeline_mode = #tpu.pipeline_mode<synchronous>, transform_indices = @transform_9, window_bounds = array<i64: 3, 32, 32>}, {pipeline_mode = #tpu.pipeline_mode<synchronous>, transform_indices = @transform_10, window_bounds = array<i64: 3, 1, 32>}, {pipeline_mode = #tpu.pipeline_mode<synchronous>, transform_indices = @transform_11, window_bounds = array<i64: 3, 4, 32>}, {pipeline_mode = #tpu.pipeline_mode<synchronous>, transform_indices = @transform_12, window_bounds = array<i64: 2, 32>}, {pipeline_mode = #tpu.pipeline_mode<synchronous>, transform_indices = @transform_13, window_bounds = array<i64: 32, 128>}, {pipeline_mode = #tpu.pipeline_mode<synchronous>, transform_indices = @transform_14, window_bounds = array<i64: 1, 128>}, {transform_indices = @transform_15, window_bounds = array<i64: 1, 1, 128>}]} {
    %c0 = arith.constant 0 : index
    %c0_0 = arith.constant 0 : index
    %c0_1 = arith.constant 0 : index
    %0 = vector.load %arg1[%c0, %c0_0, %c0_1] : memref<1x8x12xf32, #tpu.memory_space<vmem>>, vector<1x8x12xf32>
    %1 = vector.shape_cast %0 : vector<1x8x12xf32> to vector<8x12xf32>
    %c0_2 = arith.constant 0 : index
    %c0_3 = arith.constant 0 : index
    %2 = vector.load %arg2[%c0_2, %c0_3] : memref<12x32xf32, #tpu.memory_space<vmem>>, vector<12x32xf32>
    %cst = arith.constant dense<0.000000e+00> : vector<8x32xf32>
    %3 = tpu.matmul %1, %2, %cst {dimension_numbers = #tpu.dot_dimension_numbers<[1], [0], [0], [1], [0, 0, 1, 1], [], []>} : vector<8x12xf32>, vector<12x32xf32>, vector<8x32xf32> -> vector<8x32xf32>
    %c0_4 = arith.constant 0 : index
    %c0_5 = arith.constant 0 : index
    %4 = vector.load %arg3[%c0_4, %c0_5] : memref<1x32xf32, #tpu.memory_space<vmem>>, vector<1x32xf32>
    %5 = vector.broadcast %4 : vector<1x32xf32> to vector<8x32xf32>
    %6 = arith.addf %3, %5 : vector<8x32xf32>
    %cst_6 = arith.constant 0.000000e+00 : f32
    %7 = vector.broadcast %cst_6 : f32 to vector<8x32xf32>
    %8 = arith.maximumf %6, %7 : vector<8x32xf32>
    %c0_7 = arith.constant 0 : index
    %c0_8 = arith.constant 0 : index
    %c0_9 = arith.constant 0 : index
    %9 = vector.load %arg12[%c0_7, %c0_8, %c0_9] : memref<3x4x32xf32, #tpu.memory_space<vmem>>, vector<1x4x32xf32>
    %10 = vector.shape_cast %9 : vector<1x4x32xf32> to vector<4x32xf32>
    %cst_10 = arith.constant 0.000000e+00 : f32
    %11 = vector.broadcast %cst_10 : f32 to vector<8x32xf32>
    %c0_11 = arith.constant 0 : index
    %c0_12 = arith.constant 0 : index
    %c0_13 = arith.constant 0 : index
    %12 = vector.load %arg4[%c0_11, %c0_12, %c0_13] : memref<18x32x16xf32, #tpu.memory_space<vmem>>, vector<1x32x16xf32>
    %13 = vector.shape_cast %12 : vector<1x32x16xf32> to vector<32x16xf32>
    %cst_14 = arith.constant dense<0.000000e+00> : vector<8x16xf32>
    %14 = tpu.matmul %8, %13, %cst_14 {dimension_numbers = #tpu.dot_dimension_numbers<[1], [0], [0], [1], [0, 0, 1, 1], [], []>} : vector<8x32xf32>, vector<32x16xf32>, vector<8x16xf32> -> vector<8x16xf32>
    %c0_15 = arith.constant 0 : index
    %c0_16 = arith.constant 0 : index
    %c0_17 = arith.constant 0 : index
    %15 = vector.load %arg5[%c0_15, %c0_16, %c0_17] : memref<18x1x16xf32, #tpu.memory_space<vmem>>, vector<1x1x16xf32>
    %16 = vector.shape_cast %15 : vector<1x1x16xf32> to vector<1x16xf32>
    %17 = vector.broadcast %16 : vector<1x16xf32> to vector<8x16xf32>
    %18 = arith.addf %14, %17 : vector<8x16xf32>
    %19 = vector.shape_cast %18 : vector<8x16xf32> to vector<1x8x16xf32>
    %c2 = arith.constant 2 : index
    %c0_18 = arith.constant 0 : index
    %c0_19 = arith.constant 0 : index
    %20 = vector.load %arg4[%c2, %c0_18, %c0_19] : memref<18x32x16xf32, #tpu.memory_space<vmem>>, vector<1x32x16xf32>
    %21 = vector.shape_cast %20 : vector<1x32x16xf32> to vector<32x16xf32>
    %cst_20 = arith.constant dense<0.000000e+00> : vector<8x16xf32>
    %22 = tpu.matmul %8, %21, %cst_20 {dimension_numbers = #tpu.dot_dimension_numbers<[1], [0], [0], [1], [0, 0, 1, 1], [], []>} : vector<8x32xf32>, vector<32x16xf32>, vector<8x16xf32> -> vector<8x16xf32>
    %c2_21 = arith.constant 2 : index
    %c0_22 = arith.constant 0 : index
    %c0_23 = arith.constant 0 : index
    %23 = vector.load %arg5[%c2_21, %c0_22, %c0_23] : memref<18x1x16xf32, #tpu.memory_space<vmem>>, vector<1x1x16xf32>
    %24 = vector.shape_cast %23 : vector<1x1x16xf32> to vector<1x16xf32>
    %25 = vector.broadcast %24 : vector<1x16xf32> to vector<8x16xf32>
    %26 = arith.addf %22, %25 : vector<8x16xf32>
    %27 = vector.shape_cast %26 : vector<8x16xf32> to vector<1x8x16xf32>
    %c4 = arith.constant 4 : index
    %c0_24 = arith.constant 0 : index
    %c0_25 = arith.constant 0 : index
    %28 = vector.load %arg4[%c4, %c0_24, %c0_25] : memref<18x32x16xf32, #tpu.memory_space<vmem>>, vector<1x32x16xf32>
    %29 = vector.shape_cast %28 : vector<1x32x16xf32> to vector<32x16xf32>
    %cst_26 = arith.constant dense<0.000000e+00> : vector<8x16xf32>
    %30 = tpu.matmul %8, %29, %cst_26 {dimension_numbers = #tpu.dot_dimension_numbers<[1], [0], [0], [1], [0, 0, 1, 1], [], []>} : vector<8x32xf32>, vector<32x16xf32>, vector<8x16xf32> -> vector<8x16xf32>
    %c4_27 = arith.constant 4 : index
    %c0_28 = arith.constant 0 : index
    %c0_29 = arith.constant 0 : index
    %31 = vector.load %arg5[%c4_27, %c0_28, %c0_29] : memref<18x1x16xf32, #tpu.memory_space<vmem>>, vector<1x1x16xf32>
    %32 = vector.shape_cast %31 : vector<1x1x16xf32> to vector<1x16xf32>
    %33 = vector.broadcast %32 : vector<1x16xf32> to vector<8x16xf32>
    %34 = arith.addf %30, %33 : vector<8x16xf32>
    %35 = vector.shape_cast %34 : vector<8x16xf32> to vector<1x8x16xf32>
    "tpu.trace_start"() <{level = 10 : i32, message = "bqd,bkd->bqk"}> : () -> ()
    %cst_30 = arith.constant dense<0.000000e+00> : vector<1x8x8xf32>
    %36 = tpu.matmul %19, %27, %cst_30 {dimension_numbers = #tpu.dot_dimension_numbers<[2], [2], [1], [1], [0, 0, 0, 1, 1, 1], [0], [0]>} : vector<1x8x16xf32>, vector<1x8x16xf32>, vector<1x8x8xf32> -> vector<1x8x8xf32>
    "tpu.trace_stop"() : () -> ()
    %cst_31 = arith.constant dense<0xFF800000> : vector<1x8xf32>
    %37 = vector.multi_reduction <maximumf>, %36, %cst_31 [2] : vector<1x8x8xf32> to vector<1x8xf32>
    %38 = vector.shape_cast %37 : vector<1x8xf32> to vector<1x8x1xf32>
    %39 = vector.broadcast %38 : vector<1x8x1xf32> to vector<1x8x8xf32>
    %40 = arith.subf %36, %39 : vector<1x8x8xf32>
    %41 = math.exp %40 : vector<1x8x8xf32>
    %cst_32 = arith.constant dense<0.000000e+00> : vector<1x8xf32>
    %42 = vector.multi_reduction <add>, %41, %cst_32 [2] : vector<1x8x8xf32> to vector<1x8xf32>
    %43 = vector.shape_cast %42 : vector<1x8xf32> to vector<1x8x1xf32>
    %44 = tpu.reciprocal %43 : vector<1x8x1xf32> -> vector<1x8x1xf32>
    %45 = vector.broadcast %44 : vector<1x8x1xf32> to vector<1x8x8xf32>
    %46 = arith.mulf %41, %45 : vector<1x8x8xf32>
    "tpu.trace_start"() <{level = 10 : i32, message = "bqk,bkd->bqd"}> : () -> ()
    %cst_33 = arith.constant dense<0.000000e+00> : vector<1x8x16xf32>
    %47 = tpu.matmul %46, %35, %cst_33 {dimension_numbers = #tpu.dot_dimension_numbers<[2], [1], [1], [2], [0, 0, 0, 1, 1, 2], [0], [0]>} : vector<1x8x8xf32>, vector<1x8x16xf32>, vector<1x8x16xf32> -> vector<1x8x16xf32>
    "tpu.trace_stop"() : () -> ()
    %48 = vector.shape_cast %47 : vector<1x8x16xf32> to vector<8x16xf32>
    %c0_34 = arith.constant 0 : index
    %c0_35 = arith.constant 0 : index
    %c0_36 = arith.constant 0 : index
    %49 = vector.load %arg6[%c0_34, %c0_35, %c0_36] : memref<6x16x32xf32, #tpu.memory_space<vmem>>, vector<1x16x32xf32>
    %50 = vector.shape_cast %49 : vector<1x16x32xf32> to vector<16x32xf32>
    %cst_37 = arith.constant dense<0.000000e+00> : vector<8x32xf32>
    %51 = tpu.matmul %48, %50, %cst_37 {dimension_numbers = #tpu.dot_dimension_numbers<[1], [0], [0], [1], [0, 0, 1, 1], [], []>} : vector<8x16xf32>, vector<16x32xf32>, vector<8x32xf32> -> vector<8x32xf32>
    %52 = arith.addf %11, %51 : vector<8x32xf32>
    %c1 = arith.constant 1 : index
    %c0_38 = arith.constant 0 : index
    %c0_39 = arith.constant 0 : index
    %53 = vector.load %arg4[%c1, %c0_38, %c0_39] : memref<18x32x16xf32, #tpu.memory_space<vmem>>, vector<1x32x16xf32>
    %54 = vector.shape_cast %53 : vector<1x32x16xf32> to vector<32x16xf32>
    %cst_40 = arith.constant dense<0.000000e+00> : vector<8x16xf32>
    %55 = tpu.matmul %8, %54, %cst_40 {dimension_numbers = #tpu.dot_dimension_numbers<[1], [0], [0], [1], [0, 0, 1, 1], [], []>} : vector<8x32xf32>, vector<32x16xf32>, vector<8x16xf32> -> vector<8x16xf32>
    %c1_41 = arith.constant 1 : index
    %c0_42 = arith.constant 0 : index
    %c0_43 = arith.constant 0 : index
    %56 = vector.load %arg5[%c1_41, %c0_42, %c0_43] : memref<18x1x16xf32, #tpu.memory_space<vmem>>, vector<1x1x16xf32>
    %57 = vector.shape_cast %56 : vector<1x1x16xf32> to vector<1x16xf32>
    %58 = vector.broadcast %57 : vector<1x16xf32> to vector<8x16xf32>
    %59 = arith.addf %55, %58 : vector<8x16xf32>
    %60 = vector.shape_cast %59 : vector<8x16xf32> to vector<1x8x16xf32>
    %c3 = arith.constant 3 : index
    %c0_44 = arith.constant 0 : index
    %c0_45 = arith.constant 0 : index
    %61 = vector.load %arg4[%c3, %c0_44, %c0_45] : memref<18x32x16xf32, #tpu.memory_space<vmem>>, vector<1x32x16xf32>
    %62 = vector.shape_cast %61 : vector<1x32x16xf32> to vector<32x16xf32>
    %cst_46 = arith.constant dense<0.000000e+00> : vector<8x16xf32>
    %63 = tpu.matmul %8, %62, %cst_46 {dimension_numbers = #tpu.dot_dimension_numbers<[1], [0], [0], [1], [0, 0, 1, 1], [], []>} : vector<8x32xf32>, vector<32x16xf32>, vector<8x16xf32> -> vector<8x16xf32>
    %c3_47 = arith.constant 3 : index
    %c0_48 = arith.constant 0 : index
    %c0_49 = arith.constant 0 : index
    %64 = vector.load %arg5[%c3_47, %c0_48, %c0_49] : memref<18x1x16xf32, #tpu.memory_space<vmem>>, vector<1x1x16xf32>
    %65 = vector.shape_cast %64 : vector<1x1x16xf32> to vector<1x16xf32>
    %66 = vector.broadcast %65 : vector<1x16xf32> to vector<8x16xf32>
    %67 = arith.addf %63, %66 : vector<8x16xf32>
    %68 = vector.shape_cast %67 : vector<8x16xf32> to vector<1x8x16xf32>
    %c5 = arith.constant 5 : index
    %c0_50 = arith.constant 0 : index
    %c0_51 = arith.constant 0 : index
    %69 = vector.load %arg4[%c5, %c0_50, %c0_51] : memref<18x32x16xf32, #tpu.memory_space<vmem>>, vector<1x32x16xf32>
    %70 = vector.shape_cast %69 : vector<1x32x16xf32> to vector<32x16xf32>
    %cst_52 = arith.constant dense<0.000000e+00> : vector<8x16xf32>
    %71 = tpu.matmul %8, %70, %cst_52 {dimension_numbers = #tpu.dot_dimension_numbers<[1], [0], [0], [1], [0, 0, 1, 1], [], []>} : vector<8x32xf32>, vector<32x16xf32>, vector<8x16xf32> -> vector<8x16xf32>
    %c5_53 = arith.constant 5 : index
    %c0_54 = arith.constant 0 : index
    %c0_55 = arith.constant 0 : index
    %72 = vector.load %arg5[%c5_53, %c0_54, %c0_55] : memref<18x1x16xf32, #tpu.memory_space<vmem>>, vector<1x1x16xf32>
    %73 = vector.shape_cast %72 : vector<1x1x16xf32> to vector<1x16xf32>
    %74 = vector.broadcast %73 : vector<1x16xf32> to vector<8x16xf32>
    %75 = arith.addf %71, %74 : vector<8x16xf32>
    %76 = vector.shape_cast %75 : vector<8x16xf32> to vector<1x8x16xf32>
    "tpu.trace_start"() <{level = 10 : i32, message = "bqd,bkd->bqk"}> : () -> ()
    %cst_56 = arith.constant dense<0.000000e+00> : vector<1x8x8xf32>
    %77 = tpu.matmul %60, %68, %cst_56 {dimension_numbers = #tpu.dot_dimension_numbers<[2], [2], [1], [1], [0, 0, 0, 1, 1, 1], [0], [0]>} : vector<1x8x16xf32>, vector<1x8x16xf32>, vector<1x8x8xf32> -> vector<1x8x8xf32>
    "tpu.trace_stop"() : () -> ()
    %cst_57 = arith.constant dense<0xFF800000> : vector<1x8xf32>
    %78 = vector.multi_reduction <maximumf>, %77, %cst_57 [2] : vector<1x8x8xf32> to vector<1x8xf32>
    %79 = vector.shape_cast %78 : vector<1x8xf32> to vector<1x8x1xf32>
    %80 = vector.broadcast %79 : vector<1x8x1xf32> to vector<1x8x8xf32>
    %81 = arith.subf %77, %80 : vector<1x8x8xf32>
    %82 = math.exp %81 : vector<1x8x8xf32>
    %cst_58 = arith.constant dense<0.000000e+00> : vector<1x8xf32>
    %83 = vector.multi_reduction <add>, %82, %cst_58 [2] : vector<1x8x8xf32> to vector<1x8xf32>
    %84 = vector.shape_cast %83 : vector<1x8xf32> to vector<1x8x1xf32>
    %85 = tpu.reciprocal %84 : vector<1x8x1xf32> -> vector<1x8x1xf32>
    %86 = vector.broadcast %85 : vector<1x8x1xf32> to vector<1x8x8xf32>
    %87 = arith.mulf %82, %86 : vector<1x8x8xf32>
    "tpu.trace_start"() <{level = 10 : i32, message = "bqk,bkd->bqd"}> : () -> ()
    %cst_59 = arith.constant dense<0.000000e+00> : vector<1x8x16xf32>
    %88 = tpu.matmul %87, %76, %cst_59 {dimension_numbers = #tpu.dot_dimension_numbers<[2], [1], [1], [2], [0, 0, 0, 1, 1, 2], [0], [0]>} : vector<1x8x8xf32>, vector<1x8x16xf32>, vector<1x8x16xf32> -> vector<1x8x16xf32>
    "tpu.trace_stop"() : () -> ()
    %89 = vector.shape_cast %88 : vector<1x8x16xf32> to vector<8x16xf32>
    %c1_60 = arith.constant 1 : index
    %c0_61 = arith.constant 0 : index
    %c0_62 = arith.constant 0 : index
    %90 = vector.load %arg6[%c1_60, %c0_61, %c0_62] : memref<6x16x32xf32, #tpu.memory_space<vmem>>, vector<1x16x32xf32>
    %91 = vector.shape_cast %90 : vector<1x16x32xf32> to vector<16x32xf32>
    %cst_63 = arith.constant dense<0.000000e+00> : vector<8x32xf32>
    %92 = tpu.matmul %89, %91, %cst_63 {dimension_numbers = #tpu.dot_dimension_numbers<[1], [0], [0], [1], [0, 0, 1, 1], [], []>} : vector<8x16xf32>, vector<16x32xf32>, vector<8x32xf32> -> vector<8x32xf32>
    %93 = arith.addf %52, %92 : vector<8x32xf32>
    %c0_64 = arith.constant 0 : index
    %c0_65 = arith.constant 0 : index
    %c0_66 = arith.constant 0 : index
    %94 = vector.load %arg7[%c0_64, %c0_65, %c0_66] : memref<3x1x32xf32, #tpu.memory_space<vmem>>, vector<1x1x32xf32>
    %95 = vector.shape_cast %94 : vector<1x1x32xf32> to vector<1x32xf32>
    %96 = vector.broadcast %95 : vector<1x32xf32> to vector<8x32xf32>
    %97 = arith.addf %93, %96 : vector<8x32xf32>
    %98 = arith.addf %8, %97 : vector<8x32xf32>
    %99 = vector.extract_strided_slice %10 {offsets = [0, 0], sizes = [1, 32], strides = [1, 1]} : vector<4x32xf32> to vector<1x32xf32>
    %100 = vector.extract_strided_slice %10 {offsets = [1, 0], sizes = [1, 32], strides = [1, 1]} : vector<4x32xf32> to vector<1x32xf32>
    %cst_67 = arith.constant dense<0.000000e+00> : vector<8xf32>
    %101 = vector.multi_reduction <add>, %98, %cst_67 [1] : vector<8x32xf32> to vector<8xf32>
    %102 = vector.shape_cast %101 : vector<8xf32> to vector<8x1xf32>
    %cst_68 = arith.constant 3.200000e+01 : f32
    %103 = vector.broadcast %cst_68 : f32 to vector<8x1xf32>
    %104 = arith.divf %102, %103 : vector<8x1xf32>
    %105 = vector.broadcast %104 : vector<8x1xf32> to vector<8x32xf32>
    %106 = arith.subf %98, %105 : vector<8x32xf32>
    %107 = arith.mulf %106, %106 : vector<8x32xf32>
    %cst_69 = arith.constant dense<0.000000e+00> : vector<8xf32>
    %108 = vector.multi_reduction <add>, %107, %cst_69 [1] : vector<8x32xf32> to vector<8xf32>
    %109 = vector.shape_cast %108 : vector<8xf32> to vector<8x1xf32>
    %cst_70 = arith.constant 3.200000e+01 : f32
    %110 = vector.broadcast %cst_70 : f32 to vector<8x1xf32>
    %111 = arith.divf %109, %110 : vector<8x1xf32>
    %112 = vector.broadcast %104 : vector<8x1xf32> to vector<8x32xf32>
    %113 = arith.subf %98, %112 : vector<8x32xf32>
    %cst_71 = arith.constant 9.99999974E-6 : f32
    %114 = vector.broadcast %cst_71 : f32 to vector<8x1xf32>
    %115 = arith.addf %111, %114 : vector<8x1xf32>
    %116 = math.rsqrt %115 : vector<8x1xf32>
    %117 = vector.broadcast %116 : vector<8x1xf32> to vector<8x32xf32>
    %118 = arith.mulf %113, %117 : vector<8x32xf32>
    %119 = vector.broadcast %99 : vector<1x32xf32> to vector<8x32xf32>
    %120 = arith.mulf %118, %119 : vector<8x32xf32>
    %121 = vector.broadcast %100 : vector<1x32xf32> to vector<8x32xf32>
    %122 = arith.addf %120, %121 : vector<8x32xf32>
    %c0_72 = arith.constant 0 : index
    %c0_73 = arith.constant 0 : index
    %c0_74 = arith.constant 0 : index
    %123 = vector.load %arg8[%c0_72, %c0_73, %c0_74] : memref<3x32x32xf32, #tpu.memory_space<vmem>>, vector<1x32x32xf32>
    %124 = vector.shape_cast %123 : vector<1x32x32xf32> to vector<32x32xf32>
    %cst_75 = arith.constant dense<0.000000e+00> : vector<8x32xf32>
    %125 = tpu.matmul %122, %124, %cst_75 {dimension_numbers = #tpu.dot_dimension_numbers<[1], [0], [0], [1], [0, 0, 1, 1], [], []>} : vector<8x32xf32>, vector<32x32xf32>, vector<8x32xf32> -> vector<8x32xf32>
    %c0_76 = arith.constant 0 : index
    %c0_77 = arith.constant 0 : index
    %c0_78 = arith.constant 0 : index
    %126 = vector.load %arg9[%c0_76, %c0_77, %c0_78] : memref<3x1x32xf32, #tpu.memory_space<vmem>>, vector<1x1x32xf32>
    %127 = vector.shape_cast %126 : vector<1x1x32xf32> to vector<1x32xf32>
    %128 = vector.broadcast %127 : vector<1x32xf32> to vector<8x32xf32>
    %129 = arith.addf %125, %128 : vector<8x32xf32>
    %cst_79 = arith.constant 0.000000e+00 : f32
    %130 = vector.broadcast %cst_79 : f32 to vector<8x32xf32>
    %131 = arith.maximumf %129, %130 : vector<8x32xf32>
    %c0_80 = arith.constant 0 : index
    %c0_81 = arith.constant 0 : index
    %c0_82 = arith.constant 0 : index
    %132 = vector.load %arg10[%c0_80, %c0_81, %c0_82] : memref<3x32x32xf32, #tpu.memory_space<vmem>>, vector<1x32x32xf32>
    %133 = vector.shape_cast %132 : vector<1x32x32xf32> to vector<32x32xf32>
    %cst_83 = arith.constant dense<0.000000e+00> : vector<8x32xf32>
    %134 = tpu.matmul %131, %133, %cst_83 {dimension_numbers = #tpu.dot_dimension_numbers<[1], [0], [0], [1], [0, 0, 1, 1], [], []>} : vector<8x32xf32>, vector<32x32xf32>, vector<8x32xf32> -> vector<8x32xf32>
    %c0_84 = arith.constant 0 : index
    %c0_85 = arith.constant 0 : index
    %c0_86 = arith.constant 0 : index
    %135 = vector.load %arg11[%c0_84, %c0_85, %c0_86] : memref<3x1x32xf32, #tpu.memory_space<vmem>>, vector<1x1x32xf32>
    %136 = vector.shape_cast %135 : vector<1x1x32xf32> to vector<1x32xf32>
    %137 = vector.broadcast %136 : vector<1x32xf32> to vector<8x32xf32>
    %138 = arith.addf %134, %137 : vector<8x32xf32>
    %139 = arith.addf %122, %138 : vector<8x32xf32>
    %140 = vector.extract_strided_slice %10 {offsets = [2, 0], sizes = [1, 32], strides = [1, 1]} : vector<4x32xf32> to vector<1x32xf32>
    %141 = vector.extract_strided_slice %10 {offsets = [3, 0], sizes = [1, 32], strides = [1, 1]} : vector<4x32xf32> to vector<1x32xf32>
    %cst_87 = arith.constant dense<0.000000e+00> : vector<8xf32>
    %142 = vector.multi_reduction <add>, %139, %cst_87 [1] : vector<8x32xf32> to vector<8xf32>
    %143 = vector.shape_cast %142 : vector<8xf32> to vector<8x1xf32>
    %cst_88 = arith.constant 3.200000e+01 : f32
    %144 = vector.broadcast %cst_88 : f32 to vector<8x1xf32>
    %145 = arith.divf %143, %144 : vector<8x1xf32>
    %146 = vector.broadcast %145 : vector<8x1xf32> to vector<8x32xf32>
    %147 = arith.subf %139, %146 : vector<8x32xf32>
    %148 = arith.mulf %147, %147 : vector<8x32xf32>
    %cst_89 = arith.constant dense<0.000000e+00> : vector<8xf32>
    %149 = vector.multi_reduction <add>, %148, %cst_89 [1] : vector<8x32xf32> to vector<8xf32>
    %150 = vector.shape_cast %149 : vector<8xf32> to vector<8x1xf32>
    %cst_90 = arith.constant 3.200000e+01 : f32
    %151 = vector.broadcast %cst_90 : f32 to vector<8x1xf32>
    %152 = arith.divf %150, %151 : vector<8x1xf32>
    %153 = vector.broadcast %145 : vector<8x1xf32> to vector<8x32xf32>
    %154 = arith.subf %139, %153 : vector<8x32xf32>
    %cst_91 = arith.constant 9.99999974E-6 : f32
    %155 = vector.broadcast %cst_91 : f32 to vector<8x1xf32>
    %156 = arith.addf %152, %155 : vector<8x1xf32>
    %157 = math.rsqrt %156 : vector<8x1xf32>
    %158 = vector.broadcast %157 : vector<8x1xf32> to vector<8x32xf32>
    %159 = arith.mulf %154, %158 : vector<8x32xf32>
    %160 = vector.broadcast %140 : vector<1x32xf32> to vector<8x32xf32>
    %161 = arith.mulf %159, %160 : vector<8x32xf32>
    %162 = vector.broadcast %141 : vector<1x32xf32> to vector<8x32xf32>
    %163 = arith.addf %161, %162 : vector<8x32xf32>
    %c1_92 = arith.constant 1 : index
    %c0_93 = arith.constant 0 : index
    %c0_94 = arith.constant 0 : index
    %164 = vector.load %arg12[%c1_92, %c0_93, %c0_94] : memref<3x4x32xf32, #tpu.memory_space<vmem>>, vector<1x4x32xf32>
    %165 = vector.shape_cast %164 : vector<1x4x32xf32> to vector<4x32xf32>
    %cst_95 = arith.constant 0.000000e+00 : f32
    %166 = vector.broadcast %cst_95 : f32 to vector<8x32xf32>
    %c6 = arith.constant 6 : index
    %c0_96 = arith.constant 0 : index
    %c0_97 = arith.constant 0 : index
    %167 = vector.load %arg4[%c6, %c0_96, %c0_97] : memref<18x32x16xf32, #tpu.memory_space<vmem>>, vector<1x32x16xf32>
    %168 = vector.shape_cast %167 : vector<1x32x16xf32> to vector<32x16xf32>
    %cst_98 = arith.constant dense<0.000000e+00> : vector<8x16xf32>
    %169 = tpu.matmul %163, %168, %cst_98 {dimension_numbers = #tpu.dot_dimension_numbers<[1], [0], [0], [1], [0, 0, 1, 1], [], []>} : vector<8x32xf32>, vector<32x16xf32>, vector<8x16xf32> -> vector<8x16xf32>
    %c6_99 = arith.constant 6 : index
    %c0_100 = arith.constant 0 : index
    %c0_101 = arith.constant 0 : index
    %170 = vector.load %arg5[%c6_99, %c0_100, %c0_101] : memref<18x1x16xf32, #tpu.memory_space<vmem>>, vector<1x1x16xf32>
    %171 = vector.shape_cast %170 : vector<1x1x16xf32> to vector<1x16xf32>
    %172 = vector.broadcast %171 : vector<1x16xf32> to vector<8x16xf32>
    %173 = arith.addf %169, %172 : vector<8x16xf32>
    %174 = vector.shape_cast %173 : vector<8x16xf32> to vector<1x8x16xf32>
    %c8 = arith.constant 8 : index
    %c0_102 = arith.constant 0 : index
    %c0_103 = arith.constant 0 : index
    %175 = vector.load %arg4[%c8, %c0_102, %c0_103] : memref<18x32x16xf32, #tpu.memory_space<vmem>>, vector<1x32x16xf32>
    %176 = vector.shape_cast %175 : vector<1x32x16xf32> to vector<32x16xf32>
    %cst_104 = arith.constant dense<0.000000e+00> : vector<8x16xf32>
    %177 = tpu.matmul %163, %176, %cst_104 {dimension_numbers = #tpu.dot_dimension_numbers<[1], [0], [0], [1], [0, 0, 1, 1], [], []>} : vector<8x32xf32>, vector<32x16xf32>, vector<8x16xf32> -> vector<8x16xf32>
    %c8_105 = arith.constant 8 : index
    %c0_106 = arith.constant 0 : index
    %c0_107 = arith.constant 0 : index
    %178 = vector.load %arg5[%c8_105, %c0_106, %c0_107] : memref<18x1x16xf32, #tpu.memory_space<vmem>>, vector<1x1x16xf32>
    %179 = vector.shape_cast %178 : vector<1x1x16xf32> to vector<1x16xf32>
    %180 = vector.broadcast %179 : vector<1x16xf32> to vector<8x16xf32>
    %181 = arith.addf %177, %180 : vector<8x16xf32>
    %182 = vector.shape_cast %181 : vector<8x16xf32> to vector<1x8x16xf32>
    %c10 = arith.constant 10 : index
    %c0_108 = arith.constant 0 : index
    %c0_109 = arith.constant 0 : index
    %183 = vector.load %arg4[%c10, %c0_108, %c0_109] : memref<18x32x16xf32, #tpu.memory_space<vmem>>, vector<1x32x16xf32>
    %184 = vector.shape_cast %183 : vector<1x32x16xf32> to vector<32x16xf32>
    %cst_110 = arith.constant dense<0.000000e+00> : vector<8x16xf32>
    %185 = tpu.matmul %163, %184, %cst_110 {dimension_numbers = #tpu.dot_dimension_numbers<[1], [0], [0], [1], [0, 0, 1, 1], [], []>} : vector<8x32xf32>, vector<32x16xf32>, vector<8x16xf32> -> vector<8x16xf32>
    %c10_111 = arith.constant 10 : index
    %c0_112 = arith.constant 0 : index
    %c0_113 = arith.constant 0 : index
    %186 = vector.load %arg5[%c10_111, %c0_112, %c0_113] : memref<18x1x16xf32, #tpu.memory_space<vmem>>, vector<1x1x16xf32>
    %187 = vector.shape_cast %186 : vector<1x1x16xf32> to vector<1x16xf32>
    %188 = vector.broadcast %187 : vector<1x16xf32> to vector<8x16xf32>
    %189 = arith.addf %185, %188 : vector<8x16xf32>
    %190 = vector.shape_cast %189 : vector<8x16xf32> to vector<1x8x16xf32>
    "tpu.trace_start"() <{level = 10 : i32, message = "bqd,bkd->bqk"}> : () -> ()
    %cst_114 = arith.constant dense<0.000000e+00> : vector<1x8x8xf32>
    %191 = tpu.matmul %174, %182, %cst_114 {dimension_numbers = #tpu.dot_dimension_numbers<[2], [2], [1], [1], [0, 0, 0, 1, 1, 1], [0], [0]>} : vector<1x8x16xf32>, vector<1x8x16xf32>, vector<1x8x8xf32> -> vector<1x8x8xf32>
    "tpu.trace_stop"() : () -> ()
    %cst_115 = arith.constant dense<0xFF800000> : vector<1x8xf32>
    %192 = vector.multi_reduction <maximumf>, %191, %cst_115 [2] : vector<1x8x8xf32> to vector<1x8xf32>
    %193 = vector.shape_cast %192 : vector<1x8xf32> to vector<1x8x1xf32>
    %194 = vector.broadcast %193 : vector<1x8x1xf32> to vector<1x8x8xf32>
    %195 = arith.subf %191, %194 : vector<1x8x8xf32>
    %196 = math.exp %195 : vector<1x8x8xf32>
    %cst_116 = arith.constant dense<0.000000e+00> : vector<1x8xf32>
    %197 = vector.multi_reduction <add>, %196, %cst_116 [2] : vector<1x8x8xf32> to vector<1x8xf32>
    %198 = vector.shape_cast %197 : vector<1x8xf32> to vector<1x8x1xf32>
    %199 = tpu.reciprocal %198 : vector<1x8x1xf32> -> vector<1x8x1xf32>
    %200 = vector.broadcast %199 : vector<1x8x1xf32> to vector<1x8x8xf32>
    %201 = arith.mulf %196, %200 : vector<1x8x8xf32>
    "tpu.trace_start"() <{level = 10 : i32, message = "bqk,bkd->bqd"}> : () -> ()
    %cst_117 = arith.constant dense<0.000000e+00> : vector<1x8x16xf32>
    %202 = tpu.matmul %201, %190, %cst_117 {dimension_numbers = #tpu.dot_dimension_numbers<[2], [1], [1], [2], [0, 0, 0, 1, 1, 2], [0], [0]>} : vector<1x8x8xf32>, vector<1x8x16xf32>, vector<1x8x16xf32> -> vector<1x8x16xf32>
    "tpu.trace_stop"() : () -> ()
    %203 = vector.shape_cast %202 : vector<1x8x16xf32> to vector<8x16xf32>
    %c2_118 = arith.constant 2 : index
    %c0_119 = arith.constant 0 : index
    %c0_120 = arith.constant 0 : index
    %204 = vector.load %arg6[%c2_118, %c0_119, %c0_120] : memref<6x16x32xf32, #tpu.memory_space<vmem>>, vector<1x16x32xf32>
    %205 = vector.shape_cast %204 : vector<1x16x32xf32> to vector<16x32xf32>
    %cst_121 = arith.constant dense<0.000000e+00> : vector<8x32xf32>
    %206 = tpu.matmul %203, %205, %cst_121 {dimension_numbers = #tpu.dot_dimension_numbers<[1], [0], [0], [1], [0, 0, 1, 1], [], []>} : vector<8x16xf32>, vector<16x32xf32>, vector<8x32xf32> -> vector<8x32xf32>
    %207 = arith.addf %166, %206 : vector<8x32xf32>
    %c7 = arith.constant 7 : index
    %c0_122 = arith.constant 0 : index
    %c0_123 = arith.constant 0 : index
    %208 = vector.load %arg4[%c7, %c0_122, %c0_123] : memref<18x32x16xf32, #tpu.memory_space<vmem>>, vector<1x32x16xf32>
    %209 = vector.shape_cast %208 : vector<1x32x16xf32> to vector<32x16xf32>
    %cst_124 = arith.constant dense<0.000000e+00> : vector<8x16xf32>
    %210 = tpu.matmul %163, %209, %cst_124 {dimension_numbers = #tpu.dot_dimension_numbers<[1], [0], [0], [1], [0, 0, 1, 1], [], []>} : vector<8x32xf32>, vector<32x16xf32>, vector<8x16xf32> -> vector<8x16xf32>
    %c7_125 = arith.constant 7 : index
    %c0_126 = arith.constant 0 : index
    %c0_127 = arith.constant 0 : index
    %211 = vector.load %arg5[%c7_125, %c0_126, %c0_127] : memref<18x1x16xf32, #tpu.memory_space<vmem>>, vector<1x1x16xf32>
    %212 = vector.shape_cast %211 : vector<1x1x16xf32> to vector<1x16xf32>
    %213 = vector.broadcast %212 : vector<1x16xf32> to vector<8x16xf32>
    %214 = arith.addf %210, %213 : vector<8x16xf32>
    %215 = vector.shape_cast %214 : vector<8x16xf32> to vector<1x8x16xf32>
    %c9 = arith.constant 9 : index
    %c0_128 = arith.constant 0 : index
    %c0_129 = arith.constant 0 : index
    %216 = vector.load %arg4[%c9, %c0_128, %c0_129] : memref<18x32x16xf32, #tpu.memory_space<vmem>>, vector<1x32x16xf32>
    %217 = vector.shape_cast %216 : vector<1x32x16xf32> to vector<32x16xf32>
    %cst_130 = arith.constant dense<0.000000e+00> : vector<8x16xf32>
    %218 = tpu.matmul %163, %217, %cst_130 {dimension_numbers = #tpu.dot_dimension_numbers<[1], [0], [0], [1], [0, 0, 1, 1], [], []>} : vector<8x32xf32>, vector<32x16xf32>, vector<8x16xf32> -> vector<8x16xf32>
    %c9_131 = arith.constant 9 : index
    %c0_132 = arith.constant 0 : index
    %c0_133 = arith.constant 0 : index
    %219 = vector.load %arg5[%c9_131, %c0_132, %c0_133] : memref<18x1x16xf32, #tpu.memory_space<vmem>>, vector<1x1x16xf32>
    %220 = vector.shape_cast %219 : vector<1x1x16xf32> to vector<1x16xf32>
    %221 = vector.broadcast %220 : vector<1x16xf32> to vector<8x16xf32>
    %222 = arith.addf %218, %221 : vector<8x16xf32>
    %223 = vector.shape_cast %222 : vector<8x16xf32> to vector<1x8x16xf32>
    %c11 = arith.constant 11 : index
    %c0_134 = arith.constant 0 : index
    %c0_135 = arith.constant 0 : index
    %224 = vector.load %arg4[%c11, %c0_134, %c0_135] : memref<18x32x16xf32, #tpu.memory_space<vmem>>, vector<1x32x16xf32>
    %225 = vector.shape_cast %224 : vector<1x32x16xf32> to vector<32x16xf32>
    %cst_136 = arith.constant dense<0.000000e+00> : vector<8x16xf32>
    %226 = tpu.matmul %163, %225, %cst_136 {dimension_numbers = #tpu.dot_dimension_numbers<[1], [0], [0], [1], [0, 0, 1, 1], [], []>} : vector<8x32xf32>, vector<32x16xf32>, vector<8x16xf32> -> vector<8x16xf32>
    %c11_137 = arith.constant 11 : index
    %c0_138 = arith.constant 0 : index
    %c0_139 = arith.constant 0 : index
    %227 = vector.load %arg5[%c11_137, %c0_138, %c0_139] : memref<18x1x16xf32, #tpu.memory_space<vmem>>, vector<1x1x16xf32>
    %228 = vector.shape_cast %227 : vector<1x1x16xf32> to vector<1x16xf32>
    %229 = vector.broadcast %228 : vector<1x16xf32> to vector<8x16xf32>
    %230 = arith.addf %226, %229 : vector<8x16xf32>
    %231 = vector.shape_cast %230 : vector<8x16xf32> to vector<1x8x16xf32>
    "tpu.trace_start"() <{level = 10 : i32, message = "bqd,bkd->bqk"}> : () -> ()
    %cst_140 = arith.constant dense<0.000000e+00> : vector<1x8x8xf32>
    %232 = tpu.matmul %215, %223, %cst_140 {dimension_numbers = #tpu.dot_dimension_numbers<[2], [2], [1], [1], [0, 0, 0, 1, 1, 1], [0], [0]>} : vector<1x8x16xf32>, vector<1x8x16xf32>, vector<1x8x8xf32> -> vector<1x8x8xf32>
    "tpu.trace_stop"() : () -> ()
    %cst_141 = arith.constant dense<0xFF800000> : vector<1x8xf32>
    %233 = vector.multi_reduction <maximumf>, %232, %cst_141 [2] : vector<1x8x8xf32> to vector<1x8xf32>
    %234 = vector.shape_cast %233 : vector<1x8xf32> to vector<1x8x1xf32>
    %235 = vector.broadcast %234 : vector<1x8x1xf32> to vector<1x8x8xf32>
    %236 = arith.subf %232, %235 : vector<1x8x8xf32>
    %237 = math.exp %236 : vector<1x8x8xf32>
    %cst_142 = arith.constant dense<0.000000e+00> : vector<1x8xf32>
    %238 = vector.multi_reduction <add>, %237, %cst_142 [2] : vector<1x8x8xf32> to vector<1x8xf32>
    %239 = vector.shape_cast %238 : vector<1x8xf32> to vector<1x8x1xf32>
    %240 = tpu.reciprocal %239 : vector<1x8x1xf32> -> vector<1x8x1xf32>
    %241 = vector.broadcast %240 : vector<1x8x1xf32> to vector<1x8x8xf32>
    %242 = arith.mulf %237, %241 : vector<1x8x8xf32>
    "tpu.trace_start"() <{level = 10 : i32, message = "bqk,bkd->bqd"}> : () -> ()
    %cst_143 = arith.constant dense<0.000000e+00> : vector<1x8x16xf32>
    %243 = tpu.matmul %242, %231, %cst_143 {dimension_numbers = #tpu.dot_dimension_numbers<[2], [1], [1], [2], [0, 0, 0, 1, 1, 2], [0], [0]>} : vector<1x8x8xf32>, vector<1x8x16xf32>, vector<1x8x16xf32> -> vector<1x8x16xf32>
    "tpu.trace_stop"() : () -> ()
    %244 = vector.shape_cast %243 : vector<1x8x16xf32> to vector<8x16xf32>
    %c3_144 = arith.constant 3 : index
    %c0_145 = arith.constant 0 : index
    %c0_146 = arith.constant 0 : index
    %245 = vector.load %arg6[%c3_144, %c0_145, %c0_146] : memref<6x16x32xf32, #tpu.memory_space<vmem>>, vector<1x16x32xf32>
    %246 = vector.shape_cast %245 : vector<1x16x32xf32> to vector<16x32xf32>
    %cst_147 = arith.constant dense<0.000000e+00> : vector<8x32xf32>
    %247 = tpu.matmul %244, %246, %cst_147 {dimension_numbers = #tpu.dot_dimension_numbers<[1], [0], [0], [1], [0, 0, 1, 1], [], []>} : vector<8x16xf32>, vector<16x32xf32>, vector<8x32xf32> -> vector<8x32xf32>
    %248 = arith.addf %207, %247 : vector<8x32xf32>
    %c1_148 = arith.constant 1 : index
    %c0_149 = arith.constant 0 : index
    %c0_150 = arith.constant 0 : index
    %249 = vector.load %arg7[%c1_148, %c0_149, %c0_150] : memref<3x1x32xf32, #tpu.memory_space<vmem>>, vector<1x1x32xf32>
    %250 = vector.shape_cast %249 : vector<1x1x32xf32> to vector<1x32xf32>
    %251 = vector.broadcast %250 : vector<1x32xf32> to vector<8x32xf32>
    %252 = arith.addf %248, %251 : vector<8x32xf32>
    %253 = arith.addf %163, %252 : vector<8x32xf32>
    %254 = vector.extract_strided_slice %165 {offsets = [0, 0], sizes = [1, 32], strides = [1, 1]} : vector<4x32xf32> to vector<1x32xf32>
    %255 = vector.extract_strided_slice %165 {offsets = [1, 0], sizes = [1, 32], strides = [1, 1]} : vector<4x32xf32> to vector<1x32xf32>
    %cst_151 = arith.constant dense<0.000000e+00> : vector<8xf32>
    %256 = vector.multi_reduction <add>, %253, %cst_151 [1] : vector<8x32xf32> to vector<8xf32>
    %257 = vector.shape_cast %256 : vector<8xf32> to vector<8x1xf32>
    %cst_152 = arith.constant 3.200000e+01 : f32
    %258 = vector.broadcast %cst_152 : f32 to vector<8x1xf32>
    %259 = arith.divf %257, %258 : vector<8x1xf32>
    %260 = vector.broadcast %259 : vector<8x1xf32> to vector<8x32xf32>
    %261 = arith.subf %253, %260 : vector<8x32xf32>
    %262 = arith.mulf %261, %261 : vector<8x32xf32>
    %cst_153 = arith.constant dense<0.000000e+00> : vector<8xf32>
    %263 = vector.multi_reduction <add>, %262, %cst_153 [1] : vector<8x32xf32> to vector<8xf32>
    %264 = vector.shape_cast %263 : vector<8xf32> to vector<8x1xf32>
    %cst_154 = arith.constant 3.200000e+01 : f32
    %265 = vector.broadcast %cst_154 : f32 to vector<8x1xf32>
    %266 = arith.divf %264, %265 : vector<8x1xf32>
    %267 = vector.broadcast %259 : vector<8x1xf32> to vector<8x32xf32>
    %268 = arith.subf %253, %267 : vector<8x32xf32>
    %cst_155 = arith.constant 9.99999974E-6 : f32
    %269 = vector.broadcast %cst_155 : f32 to vector<8x1xf32>
    %270 = arith.addf %266, %269 : vector<8x1xf32>
    %271 = math.rsqrt %270 : vector<8x1xf32>
    %272 = vector.broadcast %271 : vector<8x1xf32> to vector<8x32xf32>
    %273 = arith.mulf %268, %272 : vector<8x32xf32>
    %274 = vector.broadcast %254 : vector<1x32xf32> to vector<8x32xf32>
    %275 = arith.mulf %273, %274 : vector<8x32xf32>
    %276 = vector.broadcast %255 : vector<1x32xf32> to vector<8x32xf32>
    %277 = arith.addf %275, %276 : vector<8x32xf32>
    %c1_156 = arith.constant 1 : index
    %c0_157 = arith.constant 0 : index
    %c0_158 = arith.constant 0 : index
    %278 = vector.load %arg8[%c1_156, %c0_157, %c0_158] : memref<3x32x32xf32, #tpu.memory_space<vmem>>, vector<1x32x32xf32>
    %279 = vector.shape_cast %278 : vector<1x32x32xf32> to vector<32x32xf32>
    %cst_159 = arith.constant dense<0.000000e+00> : vector<8x32xf32>
    %280 = tpu.matmul %277, %279, %cst_159 {dimension_numbers = #tpu.dot_dimension_numbers<[1], [0], [0], [1], [0, 0, 1, 1], [], []>} : vector<8x32xf32>, vector<32x32xf32>, vector<8x32xf32> -> vector<8x32xf32>
    %c1_160 = arith.constant 1 : index
    %c0_161 = arith.constant 0 : index
    %c0_162 = arith.constant 0 : index
    %281 = vector.load %arg9[%c1_160, %c0_161, %c0_162] : memref<3x1x32xf32, #tpu.memory_space<vmem>>, vector<1x1x32xf32>
    %282 = vector.shape_cast %281 : vector<1x1x32xf32> to vector<1x32xf32>
    %283 = vector.broadcast %282 : vector<1x32xf32> to vector<8x32xf32>
    %284 = arith.addf %280, %283 : vector<8x32xf32>
    %cst_163 = arith.constant 0.000000e+00 : f32
    %285 = vector.broadcast %cst_163 : f32 to vector<8x32xf32>
    %286 = arith.maximumf %284, %285 : vector<8x32xf32>
    %c1_164 = arith.constant 1 : index
    %c0_165 = arith.constant 0 : index
    %c0_166 = arith.constant 0 : index
    %287 = vector.load %arg10[%c1_164, %c0_165, %c0_166] : memref<3x32x32xf32, #tpu.memory_space<vmem>>, vector<1x32x32xf32>
    %288 = vector.shape_cast %287 : vector<1x32x32xf32> to vector<32x32xf32>
    %cst_167 = arith.constant dense<0.000000e+00> : vector<8x32xf32>
    %289 = tpu.matmul %286, %288, %cst_167 {dimension_numbers = #tpu.dot_dimension_numbers<[1], [0], [0], [1], [0, 0, 1, 1], [], []>} : vector<8x32xf32>, vector<32x32xf32>, vector<8x32xf32> -> vector<8x32xf32>
    %c1_168 = arith.constant 1 : index
    %c0_169 = arith.constant 0 : index
    %c0_170 = arith.constant 0 : index
    %290 = vector.load %arg11[%c1_168, %c0_169, %c0_170] : memref<3x1x32xf32, #tpu.memory_space<vmem>>, vector<1x1x32xf32>
    %291 = vector.shape_cast %290 : vector<1x1x32xf32> to vector<1x32xf32>
    %292 = vector.broadcast %291 : vector<1x32xf32> to vector<8x32xf32>
    %293 = arith.addf %289, %292 : vector<8x32xf32>
    %294 = arith.addf %277, %293 : vector<8x32xf32>
    %295 = vector.extract_strided_slice %165 {offsets = [2, 0], sizes = [1, 32], strides = [1, 1]} : vector<4x32xf32> to vector<1x32xf32>
    %296 = vector.extract_strided_slice %165 {offsets = [3, 0], sizes = [1, 32], strides = [1, 1]} : vector<4x32xf32> to vector<1x32xf32>
    %cst_171 = arith.constant dense<0.000000e+00> : vector<8xf32>
    %297 = vector.multi_reduction <add>, %294, %cst_171 [1] : vector<8x32xf32> to vector<8xf32>
    %298 = vector.shape_cast %297 : vector<8xf32> to vector<8x1xf32>
    %cst_172 = arith.constant 3.200000e+01 : f32
    %299 = vector.broadcast %cst_172 : f32 to vector<8x1xf32>
    %300 = arith.divf %298, %299 : vector<8x1xf32>
    %301 = vector.broadcast %300 : vector<8x1xf32> to vector<8x32xf32>
    %302 = arith.subf %294, %301 : vector<8x32xf32>
    %303 = arith.mulf %302, %302 : vector<8x32xf32>
    %cst_173 = arith.constant dense<0.000000e+00> : vector<8xf32>
    %304 = vector.multi_reduction <add>, %303, %cst_173 [1] : vector<8x32xf32> to vector<8xf32>
    %305 = vector.shape_cast %304 : vector<8xf32> to vector<8x1xf32>
    %cst_174 = arith.constant 3.200000e+01 : f32
    %306 = vector.broadcast %cst_174 : f32 to vector<8x1xf32>
    %307 = arith.divf %305, %306 : vector<8x1xf32>
    %308 = vector.broadcast %300 : vector<8x1xf32> to vector<8x32xf32>
    %309 = arith.subf %294, %308 : vector<8x32xf32>
    %cst_175 = arith.constant 9.99999974E-6 : f32
    %310 = vector.broadcast %cst_175 : f32 to vector<8x1xf32>
    %311 = arith.addf %307, %310 : vector<8x1xf32>
    %312 = math.rsqrt %311 : vector<8x1xf32>
    %313 = vector.broadcast %312 : vector<8x1xf32> to vector<8x32xf32>
    %314 = arith.mulf %309, %313 : vector<8x32xf32>
    %315 = vector.broadcast %295 : vector<1x32xf32> to vector<8x32xf32>
    %316 = arith.mulf %314, %315 : vector<8x32xf32>
    %317 = vector.broadcast %296 : vector<1x32xf32> to vector<8x32xf32>
    %318 = arith.addf %316, %317 : vector<8x32xf32>
    %c2_176 = arith.constant 2 : index
    %c0_177 = arith.constant 0 : index
    %c0_178 = arith.constant 0 : index
    %319 = vector.load %arg12[%c2_176, %c0_177, %c0_178] : memref<3x4x32xf32, #tpu.memory_space<vmem>>, vector<1x4x32xf32>
    %320 = vector.shape_cast %319 : vector<1x4x32xf32> to vector<4x32xf32>
    %cst_179 = arith.constant 0.000000e+00 : f32
    %321 = vector.broadcast %cst_179 : f32 to vector<8x32xf32>
    %c12 = arith.constant 12 : index
    %c0_180 = arith.constant 0 : index
    %c0_181 = arith.constant 0 : index
    %322 = vector.load %arg4[%c12, %c0_180, %c0_181] : memref<18x32x16xf32, #tpu.memory_space<vmem>>, vector<1x32x16xf32>
    %323 = vector.shape_cast %322 : vector<1x32x16xf32> to vector<32x16xf32>
    %cst_182 = arith.constant dense<0.000000e+00> : vector<8x16xf32>
    %324 = tpu.matmul %318, %323, %cst_182 {dimension_numbers = #tpu.dot_dimension_numbers<[1], [0], [0], [1], [0, 0, 1, 1], [], []>} : vector<8x32xf32>, vector<32x16xf32>, vector<8x16xf32> -> vector<8x16xf32>
    %c12_183 = arith.constant 12 : index
    %c0_184 = arith.constant 0 : index
    %c0_185 = arith.constant 0 : index
    %325 = vector.load %arg5[%c12_183, %c0_184, %c0_185] : memref<18x1x16xf32, #tpu.memory_space<vmem>>, vector<1x1x16xf32>
    %326 = vector.shape_cast %325 : vector<1x1x16xf32> to vector<1x16xf32>
    %327 = vector.broadcast %326 : vector<1x16xf32> to vector<8x16xf32>
    %328 = arith.addf %324, %327 : vector<8x16xf32>
    %329 = vector.shape_cast %328 : vector<8x16xf32> to vector<1x8x16xf32>
    %c14 = arith.constant 14 : index
    %c0_186 = arith.constant 0 : index
    %c0_187 = arith.constant 0 : index
    %330 = vector.load %arg4[%c14, %c0_186, %c0_187] : memref<18x32x16xf32, #tpu.memory_space<vmem>>, vector<1x32x16xf32>
    %331 = vector.shape_cast %330 : vector<1x32x16xf32> to vector<32x16xf32>
    %cst_188 = arith.constant dense<0.000000e+00> : vector<8x16xf32>
    %332 = tpu.matmul %318, %331, %cst_188 {dimension_numbers = #tpu.dot_dimension_numbers<[1], [0], [0], [1], [0, 0, 1, 1], [], []>} : vector<8x32xf32>, vector<32x16xf32>, vector<8x16xf32> -> vector<8x16xf32>
    %c14_189 = arith.constant 14 : index
    %c0_190 = arith.constant 0 : index
    %c0_191 = arith.constant 0 : index
    %333 = vector.load %arg5[%c14_189, %c0_190, %c0_191] : memref<18x1x16xf32, #tpu.memory_space<vmem>>, vector<1x1x16xf32>
    %334 = vector.shape_cast %333 : vector<1x1x16xf32> to vector<1x16xf32>
    %335 = vector.broadcast %334 : vector<1x16xf32> to vector<8x16xf32>
    %336 = arith.addf %332, %335 : vector<8x16xf32>
    %337 = vector.shape_cast %336 : vector<8x16xf32> to vector<1x8x16xf32>
    %c16 = arith.constant 16 : index
    %c0_192 = arith.constant 0 : index
    %c0_193 = arith.constant 0 : index
    %338 = vector.load %arg4[%c16, %c0_192, %c0_193] : memref<18x32x16xf32, #tpu.memory_space<vmem>>, vector<1x32x16xf32>
    %339 = vector.shape_cast %338 : vector<1x32x16xf32> to vector<32x16xf32>
    %cst_194 = arith.constant dense<0.000000e+00> : vector<8x16xf32>
    %340 = tpu.matmul %318, %339, %cst_194 {dimension_numbers = #tpu.dot_dimension_numbers<[1], [0], [0], [1], [0, 0, 1, 1], [], []>} : vector<8x32xf32>, vector<32x16xf32>, vector<8x16xf32> -> vector<8x16xf32>
    %c16_195 = arith.constant 16 : index
    %c0_196 = arith.constant 0 : index
    %c0_197 = arith.constant 0 : index
    %341 = vector.load %arg5[%c16_195, %c0_196, %c0_197] : memref<18x1x16xf32, #tpu.memory_space<vmem>>, vector<1x1x16xf32>
    %342 = vector.shape_cast %341 : vector<1x1x16xf32> to vector<1x16xf32>
    %343 = vector.broadcast %342 : vector<1x16xf32> to vector<8x16xf32>
    %344 = arith.addf %340, %343 : vector<8x16xf32>
    %345 = vector.shape_cast %344 : vector<8x16xf32> to vector<1x8x16xf32>
    "tpu.trace_start"() <{level = 10 : i32, message = "bqd,bkd->bqk"}> : () -> ()
    %cst_198 = arith.constant dense<0.000000e+00> : vector<1x8x8xf32>
    %346 = tpu.matmul %329, %337, %cst_198 {dimension_numbers = #tpu.dot_dimension_numbers<[2], [2], [1], [1], [0, 0, 0, 1, 1, 1], [0], [0]>} : vector<1x8x16xf32>, vector<1x8x16xf32>, vector<1x8x8xf32> -> vector<1x8x8xf32>
    "tpu.trace_stop"() : () -> ()
    %cst_199 = arith.constant dense<0xFF800000> : vector<1x8xf32>
    %347 = vector.multi_reduction <maximumf>, %346, %cst_199 [2] : vector<1x8x8xf32> to vector<1x8xf32>
    %348 = vector.shape_cast %347 : vector<1x8xf32> to vector<1x8x1xf32>
    %349 = vector.broadcast %348 : vector<1x8x1xf32> to vector<1x8x8xf32>
    %350 = arith.subf %346, %349 : vector<1x8x8xf32>
    %351 = math.exp %350 : vector<1x8x8xf32>
    %cst_200 = arith.constant dense<0.000000e+00> : vector<1x8xf32>
    %352 = vector.multi_reduction <add>, %351, %cst_200 [2] : vector<1x8x8xf32> to vector<1x8xf32>
    %353 = vector.shape_cast %352 : vector<1x8xf32> to vector<1x8x1xf32>
    %354 = tpu.reciprocal %353 : vector<1x8x1xf32> -> vector<1x8x1xf32>
    %355 = vector.broadcast %354 : vector<1x8x1xf32> to vector<1x8x8xf32>
    %356 = arith.mulf %351, %355 : vector<1x8x8xf32>
    "tpu.trace_start"() <{level = 10 : i32, message = "bqk,bkd->bqd"}> : () -> ()
    %cst_201 = arith.constant dense<0.000000e+00> : vector<1x8x16xf32>
    %357 = tpu.matmul %356, %345, %cst_201 {dimension_numbers = #tpu.dot_dimension_numbers<[2], [1], [1], [2], [0, 0, 0, 1, 1, 2], [0], [0]>} : vector<1x8x8xf32>, vector<1x8x16xf32>, vector<1x8x16xf32> -> vector<1x8x16xf32>
    "tpu.trace_stop"() : () -> ()
    %358 = vector.shape_cast %357 : vector<1x8x16xf32> to vector<8x16xf32>
    %c4_202 = arith.constant 4 : index
    %c0_203 = arith.constant 0 : index
    %c0_204 = arith.constant 0 : index
    %359 = vector.load %arg6[%c4_202, %c0_203, %c0_204] : memref<6x16x32xf32, #tpu.memory_space<vmem>>, vector<1x16x32xf32>
    %360 = vector.shape_cast %359 : vector<1x16x32xf32> to vector<16x32xf32>
    %cst_205 = arith.constant dense<0.000000e+00> : vector<8x32xf32>
    %361 = tpu.matmul %358, %360, %cst_205 {dimension_numbers = #tpu.dot_dimension_numbers<[1], [0], [0], [1], [0, 0, 1, 1], [], []>} : vector<8x16xf32>, vector<16x32xf32>, vector<8x32xf32> -> vector<8x32xf32>
    %362 = arith.addf %321, %361 : vector<8x32xf32>
    %c13 = arith.constant 13 : index
    %c0_206 = arith.constant 0 : index
    %c0_207 = arith.constant 0 : index
    %363 = vector.load %arg4[%c13, %c0_206, %c0_207] : memref<18x32x16xf32, #tpu.memory_space<vmem>>, vector<1x32x16xf32>
    %364 = vector.shape_cast %363 : vector<1x32x16xf32> to vector<32x16xf32>
    %cst_208 = arith.constant dense<0.000000e+00> : vector<8x16xf32>
    %365 = tpu.matmul %318, %364, %cst_208 {dimension_numbers = #tpu.dot_dimension_numbers<[1], [0], [0], [1], [0, 0, 1, 1], [], []>} : vector<8x32xf32>, vector<32x16xf32>, vector<8x16xf32> -> vector<8x16xf32>
    %c13_209 = arith.constant 13 : index
    %c0_210 = arith.constant 0 : index
    %c0_211 = arith.constant 0 : index
    %366 = vector.load %arg5[%c13_209, %c0_210, %c0_211] : memref<18x1x16xf32, #tpu.memory_space<vmem>>, vector<1x1x16xf32>
    %367 = vector.shape_cast %366 : vector<1x1x16xf32> to vector<1x16xf32>
    %368 = vector.broadcast %367 : vector<1x16xf32> to vector<8x16xf32>
    %369 = arith.addf %365, %368 : vector<8x16xf32>
    %370 = vector.shape_cast %369 : vector<8x16xf32> to vector<1x8x16xf32>
    %c15 = arith.constant 15 : index
    %c0_212 = arith.constant 0 : index
    %c0_213 = arith.constant 0 : index
    %371 = vector.load %arg4[%c15, %c0_212, %c0_213] : memref<18x32x16xf32, #tpu.memory_space<vmem>>, vector<1x32x16xf32>
    %372 = vector.shape_cast %371 : vector<1x32x16xf32> to vector<32x16xf32>
    %cst_214 = arith.constant dense<0.000000e+00> : vector<8x16xf32>
    %373 = tpu.matmul %318, %372, %cst_214 {dimension_numbers = #tpu.dot_dimension_numbers<[1], [0], [0], [1], [0, 0, 1, 1], [], []>} : vector<8x32xf32>, vector<32x16xf32>, vector<8x16xf32> -> vector<8x16xf32>
    %c15_215 = arith.constant 15 : index
    %c0_216 = arith.constant 0 : index
    %c0_217 = arith.constant 0 : index
    %374 = vector.load %arg5[%c15_215, %c0_216, %c0_217] : memref<18x1x16xf32, #tpu.memory_space<vmem>>, vector<1x1x16xf32>
    %375 = vector.shape_cast %374 : vector<1x1x16xf32> to vector<1x16xf32>
    %376 = vector.broadcast %375 : vector<1x16xf32> to vector<8x16xf32>
    %377 = arith.addf %373, %376 : vector<8x16xf32>
    %378 = vector.shape_cast %377 : vector<8x16xf32> to vector<1x8x16xf32>
    %c17 = arith.constant 17 : index
    %c0_218 = arith.constant 0 : index
    %c0_219 = arith.constant 0 : index
    %379 = vector.load %arg4[%c17, %c0_218, %c0_219] : memref<18x32x16xf32, #tpu.memory_space<vmem>>, vector<1x32x16xf32>
    %380 = vector.shape_cast %379 : vector<1x32x16xf32> to vector<32x16xf32>
    %cst_220 = arith.constant dense<0.000000e+00> : vector<8x16xf32>
    %381 = tpu.matmul %318, %380, %cst_220 {dimension_numbers = #tpu.dot_dimension_numbers<[1], [0], [0], [1], [0, 0, 1, 1], [], []>} : vector<8x32xf32>, vector<32x16xf32>, vector<8x16xf32> -> vector<8x16xf32>
    %c17_221 = arith.constant 17 : index
    %c0_222 = arith.constant 0 : index
    %c0_223 = arith.constant 0 : index
    %382 = vector.load %arg5[%c17_221, %c0_222, %c0_223] : memref<18x1x16xf32, #tpu.memory_space<vmem>>, vector<1x1x16xf32>
    %383 = vector.shape_cast %382 : vector<1x1x16xf32> to vector<1x16xf32>
    %384 = vector.broadcast %383 : vector<1x16xf32> to vector<8x16xf32>
    %385 = arith.addf %381, %384 : vector<8x16xf32>
    %386 = vector.shape_cast %385 : vector<8x16xf32> to vector<1x8x16xf32>
    "tpu.trace_start"() <{level = 10 : i32, message = "bqd,bkd->bqk"}> : () -> ()
    %cst_224 = arith.constant dense<0.000000e+00> : vector<1x8x8xf32>
    %387 = tpu.matmul %370, %378, %cst_224 {dimension_numbers = #tpu.dot_dimension_numbers<[2], [2], [1], [1], [0, 0, 0, 1, 1, 1], [0], [0]>} : vector<1x8x16xf32>, vector<1x8x16xf32>, vector<1x8x8xf32> -> vector<1x8x8xf32>
    "tpu.trace_stop"() : () -> ()
    %cst_225 = arith.constant dense<0xFF800000> : vector<1x8xf32>
    %388 = vector.multi_reduction <maximumf>, %387, %cst_225 [2] : vector<1x8x8xf32> to vector<1x8xf32>
    %389 = vector.shape_cast %388 : vector<1x8xf32> to vector<1x8x1xf32>
    %390 = vector.broadcast %389 : vector<1x8x1xf32> to vector<1x8x8xf32>
    %391 = arith.subf %387, %390 : vector<1x8x8xf32>
    %392 = math.exp %391 : vector<1x8x8xf32>
    %cst_226 = arith.constant dense<0.000000e+00> : vector<1x8xf32>
    %393 = vector.multi_reduction <add>, %392, %cst_226 [2] : vector<1x8x8xf32> to vector<1x8xf32>
    %394 = vector.shape_cast %393 : vector<1x8xf32> to vector<1x8x1xf32>
    %395 = tpu.reciprocal %394 : vector<1x8x1xf32> -> vector<1x8x1xf32>
    %396 = vector.broadcast %395 : vector<1x8x1xf32> to vector<1x8x8xf32>
    %397 = arith.mulf %392, %396 : vector<1x8x8xf32>
    "tpu.trace_start"() <{level = 10 : i32, message = "bqk,bkd->bqd"}> : () -> ()
    %cst_227 = arith.constant dense<0.000000e+00> : vector<1x8x16xf32>
    %398 = tpu.matmul %397, %386, %cst_227 {dimension_numbers = #tpu.dot_dimension_numbers<[2], [1], [1], [2], [0, 0, 0, 1, 1, 2], [0], [0]>} : vector<1x8x8xf32>, vector<1x8x16xf32>, vector<1x8x16xf32> -> vector<1x8x16xf32>
    "tpu.trace_stop"() : () -> ()
    %399 = vector.shape_cast %398 : vector<1x8x16xf32> to vector<8x16xf32>
    %c5_228 = arith.constant 5 : index
    %c0_229 = arith.constant 0 : index
    %c0_230 = arith.constant 0 : index
    %400 = vector.load %arg6[%c5_228, %c0_229, %c0_230] : memref<6x16x32xf32, #tpu.memory_space<vmem>>, vector<1x16x32xf32>
    %401 = vector.shape_cast %400 : vector<1x16x32xf32> to vector<16x32xf32>
    %cst_231 = arith.constant dense<0.000000e+00> : vector<8x32xf32>
    %402 = tpu.matmul %399, %401, %cst_231 {dimension_numbers = #tpu.dot_dimension_numbers<[1], [0], [0], [1], [0, 0, 1, 1], [], []>} : vector<8x16xf32>, vector<16x32xf32>, vector<8x32xf32> -> vector<8x32xf32>
    %403 = arith.addf %362, %402 : vector<8x32xf32>
    %c2_232 = arith.constant 2 : index
    %c0_233 = arith.constant 0 : index
    %c0_234 = arith.constant 0 : index
    %404 = vector.load %arg7[%c2_232, %c0_233, %c0_234] : memref<3x1x32xf32, #tpu.memory_space<vmem>>, vector<1x1x32xf32>
    %405 = vector.shape_cast %404 : vector<1x1x32xf32> to vector<1x32xf32>
    %406 = vector.broadcast %405 : vector<1x32xf32> to vector<8x32xf32>
    %407 = arith.addf %403, %406 : vector<8x32xf32>
    %408 = arith.addf %318, %407 : vector<8x32xf32>
    %409 = vector.extract_strided_slice %320 {offsets = [0, 0], sizes = [1, 32], strides = [1, 1]} : vector<4x32xf32> to vector<1x32xf32>
    %410 = vector.extract_strided_slice %320 {offsets = [1, 0], sizes = [1, 32], strides = [1, 1]} : vector<4x32xf32> to vector<1x32xf32>
    %cst_235 = arith.constant dense<0.000000e+00> : vector<8xf32>
    %411 = vector.multi_reduction <add>, %408, %cst_235 [1] : vector<8x32xf32> to vector<8xf32>
    %412 = vector.shape_cast %411 : vector<8xf32> to vector<8x1xf32>
    %cst_236 = arith.constant 3.200000e+01 : f32
    %413 = vector.broadcast %cst_236 : f32 to vector<8x1xf32>
    %414 = arith.divf %412, %413 : vector<8x1xf32>
    %415 = vector.broadcast %414 : vector<8x1xf32> to vector<8x32xf32>
    %416 = arith.subf %408, %415 : vector<8x32xf32>
    %417 = arith.mulf %416, %416 : vector<8x32xf32>
    %cst_237 = arith.constant dense<0.000000e+00> : vector<8xf32>
    %418 = vector.multi_reduction <add>, %417, %cst_237 [1] : vector<8x32xf32> to vector<8xf32>
    %419 = vector.shape_cast %418 : vector<8xf32> to vector<8x1xf32>
    %cst_238 = arith.constant 3.200000e+01 : f32
    %420 = vector.broadcast %cst_238 : f32 to vector<8x1xf32>
    %421 = arith.divf %419, %420 : vector<8x1xf32>
    %422 = vector.broadcast %414 : vector<8x1xf32> to vector<8x32xf32>
    %423 = arith.subf %408, %422 : vector<8x32xf32>
    %cst_239 = arith.constant 9.99999974E-6 : f32
    %424 = vector.broadcast %cst_239 : f32 to vector<8x1xf32>
    %425 = arith.addf %421, %424 : vector<8x1xf32>
    %426 = math.rsqrt %425 : vector<8x1xf32>
    %427 = vector.broadcast %426 : vector<8x1xf32> to vector<8x32xf32>
    %428 = arith.mulf %423, %427 : vector<8x32xf32>
    %429 = vector.broadcast %409 : vector<1x32xf32> to vector<8x32xf32>
    %430 = arith.mulf %428, %429 : vector<8x32xf32>
    %431 = vector.broadcast %410 : vector<1x32xf32> to vector<8x32xf32>
    %432 = arith.addf %430, %431 : vector<8x32xf32>
    %c2_240 = arith.constant 2 : index
    %c0_241 = arith.constant 0 : index
    %c0_242 = arith.constant 0 : index
    %433 = vector.load %arg8[%c2_240, %c0_241, %c0_242] : memref<3x32x32xf32, #tpu.memory_space<vmem>>, vector<1x32x32xf32>
    %434 = vector.shape_cast %433 : vector<1x32x32xf32> to vector<32x32xf32>
    %cst_243 = arith.constant dense<0.000000e+00> : vector<8x32xf32>
    %435 = tpu.matmul %432, %434, %cst_243 {dimension_numbers = #tpu.dot_dimension_numbers<[1], [0], [0], [1], [0, 0, 1, 1], [], []>} : vector<8x32xf32>, vector<32x32xf32>, vector<8x32xf32> -> vector<8x32xf32>
    %c2_244 = arith.constant 2 : index
    %c0_245 = arith.constant 0 : index
    %c0_246 = arith.constant 0 : index
    %436 = vector.load %arg9[%c2_244, %c0_245, %c0_246] : memref<3x1x32xf32, #tpu.memory_space<vmem>>, vector<1x1x32xf32>
    %437 = vector.shape_cast %436 : vector<1x1x32xf32> to vector<1x32xf32>
    %438 = vector.broadcast %437 : vector<1x32xf32> to vector<8x32xf32>
    %439 = arith.addf %435, %438 : vector<8x32xf32>
    %cst_247 = arith.constant 0.000000e+00 : f32
    %440 = vector.broadcast %cst_247 : f32 to vector<8x32xf32>
    %441 = arith.maximumf %439, %440 : vector<8x32xf32>
    %c2_248 = arith.constant 2 : index
    %c0_249 = arith.constant 0 : index
    %c0_250 = arith.constant 0 : index
    %442 = vector.load %arg10[%c2_248, %c0_249, %c0_250] : memref<3x32x32xf32, #tpu.memory_space<vmem>>, vector<1x32x32xf32>
    %443 = vector.shape_cast %442 : vector<1x32x32xf32> to vector<32x32xf32>
    %cst_251 = arith.constant dense<0.000000e+00> : vector<8x32xf32>
    %444 = tpu.matmul %441, %443, %cst_251 {dimension_numbers = #tpu.dot_dimension_numbers<[1], [0], [0], [1], [0, 0, 1, 1], [], []>} : vector<8x32xf32>, vector<32x32xf32>, vector<8x32xf32> -> vector<8x32xf32>
    %c2_252 = arith.constant 2 : index
    %c0_253 = arith.constant 0 : index
    %c0_254 = arith.constant 0 : index
    %445 = vector.load %arg11[%c2_252, %c0_253, %c0_254] : memref<3x1x32xf32, #tpu.memory_space<vmem>>, vector<1x1x32xf32>
    %446 = vector.shape_cast %445 : vector<1x1x32xf32> to vector<1x32xf32>
    %447 = vector.broadcast %446 : vector<1x32xf32> to vector<8x32xf32>
    %448 = arith.addf %444, %447 : vector<8x32xf32>
    %449 = arith.addf %432, %448 : vector<8x32xf32>
    %450 = vector.extract_strided_slice %320 {offsets = [2, 0], sizes = [1, 32], strides = [1, 1]} : vector<4x32xf32> to vector<1x32xf32>
    %451 = vector.extract_strided_slice %320 {offsets = [3, 0], sizes = [1, 32], strides = [1, 1]} : vector<4x32xf32> to vector<1x32xf32>
    %cst_255 = arith.constant dense<0.000000e+00> : vector<8xf32>
    %452 = vector.multi_reduction <add>, %449, %cst_255 [1] : vector<8x32xf32> to vector<8xf32>
    %453 = vector.shape_cast %452 : vector<8xf32> to vector<8x1xf32>
    %cst_256 = arith.constant 3.200000e+01 : f32
    %454 = vector.broadcast %cst_256 : f32 to vector<8x1xf32>
    %455 = arith.divf %453, %454 : vector<8x1xf32>
    %456 = vector.broadcast %455 : vector<8x1xf32> to vector<8x32xf32>
    %457 = arith.subf %449, %456 : vector<8x32xf32>
    %458 = arith.mulf %457, %457 : vector<8x32xf32>
    %cst_257 = arith.constant dense<0.000000e+00> : vector<8xf32>
    %459 = vector.multi_reduction <add>, %458, %cst_257 [1] : vector<8x32xf32> to vector<8xf32>
    %460 = vector.shape_cast %459 : vector<8xf32> to vector<8x1xf32>
    %cst_258 = arith.constant 3.200000e+01 : f32
    %461 = vector.broadcast %cst_258 : f32 to vector<8x1xf32>
    %462 = arith.divf %460, %461 : vector<8x1xf32>
    %463 = vector.broadcast %455 : vector<8x1xf32> to vector<8x32xf32>
    %464 = arith.subf %449, %463 : vector<8x32xf32>
    %cst_259 = arith.constant 9.99999974E-6 : f32
    %465 = vector.broadcast %cst_259 : f32 to vector<8x1xf32>
    %466 = arith.addf %462, %465 : vector<8x1xf32>
    %467 = math.rsqrt %466 : vector<8x1xf32>
    %468 = vector.broadcast %467 : vector<8x1xf32> to vector<8x32xf32>
    %469 = arith.mulf %464, %468 : vector<8x32xf32>
    %470 = vector.broadcast %450 : vector<1x32xf32> to vector<8x32xf32>
    %471 = arith.mulf %469, %470 : vector<8x32xf32>
    %472 = vector.broadcast %451 : vector<1x32xf32> to vector<8x32xf32>
    %473 = arith.addf %471, %472 : vector<8x32xf32>
    %c0_260 = arith.constant 0 : index
    %c0_261 = arith.constant 0 : index
    %474 = vector.load %arg13[%c0_260, %c0_261] : memref<2x32xf32, #tpu.memory_space<vmem>>, vector<2x32xf32>
    %475 = vector.extract_strided_slice %474 {offsets = [0, 0], sizes = [1, 32], strides = [1, 1]} : vector<2x32xf32> to vector<1x32xf32>
    %476 = vector.extract_strided_slice %474 {offsets = [1, 0], sizes = [1, 32], strides = [1, 1]} : vector<2x32xf32> to vector<1x32xf32>
    %cst_262 = arith.constant dense<0.000000e+00> : vector<8xf32>
    %477 = vector.multi_reduction <add>, %473, %cst_262 [1] : vector<8x32xf32> to vector<8xf32>
    %478 = vector.shape_cast %477 : vector<8xf32> to vector<8x1xf32>
    %cst_263 = arith.constant 3.200000e+01 : f32
    %479 = vector.broadcast %cst_263 : f32 to vector<8x1xf32>
    %480 = arith.divf %478, %479 : vector<8x1xf32>
    %481 = vector.broadcast %480 : vector<8x1xf32> to vector<8x32xf32>
    %482 = arith.subf %473, %481 : vector<8x32xf32>
    %483 = arith.mulf %482, %482 : vector<8x32xf32>
    %cst_264 = arith.constant dense<0.000000e+00> : vector<8xf32>
    %484 = vector.multi_reduction <add>, %483, %cst_264 [1] : vector<8x32xf32> to vector<8xf32>
    %485 = vector.shape_cast %484 : vector<8xf32> to vector<8x1xf32>
    %cst_265 = arith.constant 3.200000e+01 : f32
    %486 = vector.broadcast %cst_265 : f32 to vector<8x1xf32>
    %487 = arith.divf %485, %486 : vector<8x1xf32>
    %488 = vector.broadcast %480 : vector<8x1xf32> to vector<8x32xf32>
    %489 = arith.subf %473, %488 : vector<8x32xf32>
    %cst_266 = arith.constant 9.99999974E-6 : f32
    %490 = vector.broadcast %cst_266 : f32 to vector<8x1xf32>
    %491 = arith.addf %487, %490 : vector<8x1xf32>
    %492 = math.rsqrt %491 : vector<8x1xf32>
    %493 = vector.broadcast %492 : vector<8x1xf32> to vector<8x32xf32>
    %494 = arith.mulf %489, %493 : vector<8x32xf32>
    %495 = vector.broadcast %475 : vector<1x32xf32> to vector<8x32xf32>
    %496 = arith.mulf %494, %495 : vector<8x32xf32>
    %497 = vector.broadcast %476 : vector<1x32xf32> to vector<8x32xf32>
    %498 = arith.addf %496, %497 : vector<8x32xf32>
    %499 = vector.shape_cast %498 : vector<8x32xf32> to vector<1x8x32xf32>
    %cst_267 = arith.constant dense<0xFF800000> : vector<1x32xf32>
    %500 = vector.multi_reduction <maximumf>, %499, %cst_267 [1] : vector<1x8x32xf32> to vector<1x32xf32>
    %cst_268 = arith.constant 0.000000e+00 : f32
    %501 = vector.broadcast %cst_268 : f32 to vector<1x32xf32>
    %502 = arith.maximumf %500, %501 : vector<1x32xf32>
    %c0_269 = arith.constant 0 : index
    %c0_270 = arith.constant 0 : index
    %503 = vector.load %arg14[%c0_269, %c0_270] : memref<32x128xf32, #tpu.memory_space<vmem>>, vector<32x128xf32>
    %cst_271 = arith.constant dense<0.000000e+00> : vector<1x128xf32>
    %504 = tpu.matmul %502, %503, %cst_271 {dimension_numbers = #tpu.dot_dimension_numbers<[1], [0], [0], [1], [0, 0, 1, 1], [], []>} : vector<1x32xf32>, vector<32x128xf32>, vector<1x128xf32> -> vector<1x128xf32>
    %c0_272 = arith.constant 0 : index
    %c0_273 = arith.constant 0 : index
    %505 = vector.load %arg15[%c0_272, %c0_273] : memref<1x128xf32, #tpu.memory_space<vmem>>, vector<1x128xf32>
    %506 = arith.addf %504, %505 : vector<1x128xf32>
    %507 = tpu.iota {dimensions = array<i32: 1>} : vector<1x128xi32>
    %c5_i32 = arith.constant 5 : i32
    %508 = vector.broadcast %c5_i32 : i32 to vector<1x128xi32>
    %509 = arith.cmpi slt, %507, %508 : vector<1x128xi32>
    %c5_i32_274 = arith.constant 5 : i32
    %510 = vector.broadcast %c5_i32_274 : i32 to vector<1x128xi32>
    %511 = arith.cmpi sge, %507, %510 : vector<1x128xi32>
    %c12_i32 = arith.constant 12 : i32
    %512 = vector.broadcast %c12_i32 : i32 to vector<1x128xi32>
    %513 = arith.cmpi slt, %507, %512 : vector<1x128xi32>
    %514 = arith.andi %511, %513 : vector<1x128xi1>
    %515 = arith.ori %509, %514 : vector<1x128xi1>
    %cst_275 = arith.constant -1.000000e+30 : f32
    %516 = vector.broadcast %cst_275 : f32 to vector<1x128xf32>
    %517 = arith.select %509, %506, %516 : vector<1x128xi1>, vector<1x128xf32>
    %cst_276 = arith.constant dense<0xFF800000> : vector<1xf32>
    %518 = vector.multi_reduction <maximumf>, %517, %cst_276 [1] : vector<1x128xf32> to vector<1xf32>
    %519 = vector.shape_cast %518 : vector<1xf32> to vector<1x1xf32>
    %cst_277 = arith.constant -1.000000e+30 : f32
    %520 = vector.broadcast %cst_277 : f32 to vector<1x128xf32>
    %521 = arith.select %514, %506, %520 : vector<1x128xi1>, vector<1x128xf32>
    %cst_278 = arith.constant dense<0xFF800000> : vector<1xf32>
    %522 = vector.multi_reduction <maximumf>, %521, %cst_278 [1] : vector<1x128xf32> to vector<1xf32>
    %523 = vector.shape_cast %522 : vector<1xf32> to vector<1x1xf32>
    %524 = vector.shape_cast %519 : vector<1x1xf32> to vector<1x1xf32>
    %525 = vector.broadcast %524 : vector<1x1xf32> to vector<1x128xf32>
    %526 = vector.shape_cast %523 : vector<1x1xf32> to vector<1x1xf32>
    %527 = vector.broadcast %526 : vector<1x1xf32> to vector<1x128xf32>
    %528 = arith.select %509, %525, %527 : vector<1x128xi1>, vector<1x128xf32>
    %cst_279 = arith.constant -1.000000e+30 : f32
    %529 = vector.broadcast %cst_279 : f32 to vector<1x128xf32>
    %530 = arith.select %515, %506, %529 : vector<1x128xi1>, vector<1x128xf32>
    %531 = arith.subf %530, %528 : vector<1x128xf32>
    %532 = math.exp %531 : vector<1x128xf32>
    %cst_280 = arith.constant 0.000000e+00 : f32
    %533 = vector.broadcast %cst_280 : f32 to vector<1x128xf32>
    %534 = arith.select %509, %532, %533 : vector<1x128xi1>, vector<1x128xf32>
    %cst_281 = arith.constant dense<0.000000e+00> : vector<1xf32>
    %535 = vector.multi_reduction <add>, %534, %cst_281 [1] : vector<1x128xf32> to vector<1xf32>
    %536 = vector.shape_cast %535 : vector<1xf32> to vector<1x1xf32>
    %cst_282 = arith.constant 0.000000e+00 : f32
    %537 = vector.broadcast %cst_282 : f32 to vector<1x128xf32>
    %538 = arith.select %514, %532, %537 : vector<1x128xi1>, vector<1x128xf32>
    %cst_283 = arith.constant dense<0.000000e+00> : vector<1xf32>
    %539 = vector.multi_reduction <add>, %538, %cst_283 [1] : vector<1x128xf32> to vector<1xf32>
    %540 = vector.shape_cast %539 : vector<1xf32> to vector<1x1xf32>
    %541 = vector.shape_cast %536 : vector<1x1xf32> to vector<1x1xf32>
    %542 = vector.broadcast %541 : vector<1x1xf32> to vector<1x128xf32>
    %543 = vector.shape_cast %540 : vector<1x1xf32> to vector<1x1xf32>
    %544 = vector.broadcast %543 : vector<1x1xf32> to vector<1x128xf32>
    %545 = arith.select %509, %542, %544 : vector<1x128xi1>, vector<1x128xf32>
    %546 = math.log %545 : vector<1x128xf32>
    %547 = arith.addf %528, %546 : vector<1x128xf32>
    %548 = arith.subf %506, %547 : vector<1x128xf32>
    %cst_284 = arith.constant 0.000000e+00 : f32
    %549 = vector.broadcast %cst_284 : f32 to vector<1x128xf32>
    %550 = arith.select %515, %548, %549 : vector<1x128xi1>, vector<1x128xf32>
    %551 = vector.shape_cast %550 : vector<1x128xf32> to vector<1x1x128xf32>
    %c0_285 = arith.constant 0 : index
    %c0_286 = arith.constant 0 : index
    %c0_287 = arith.constant 0 : index
    %552 = vector.load %arg16[%c0_285, %c0_286, %c0_287] : memref<1x1x128xf32, #tpu.memory_space<vmem>>, vector<1x1x128xf32>
    tpu.vector_store %arg16[%c0_285, %c0_286, %c0_287], %551 {strides = array<i32>} : memref<1x1x128xf32, #tpu.memory_space<vmem>>, vector<1x1x128xf32>,
    return
  }
  func.func @transform_0(%arg0: i32) -> (i32, i32, i32) {
    %c0_i32 = arith.constant 0 : i32
    %c0_i32_0 = arith.constant 0 : i32
    %c0_i32_1 = arith.constant 0 : i32
    return %arg0, %c0_i32, %c0_i32_0 : i32, i32, i32
  }
  func.func @transform_1(%arg0: i32) -> (i32, i32) {
    %c0_i32 = arith.constant 0 : i32
    %c0_i32_0 = arith.constant 0 : i32
    %c0_i32_1 = arith.constant 0 : i32
    return %c0_i32, %c0_i32_0 : i32, i32
  }
  func.func @transform_2(%arg0: i32) -> (i32, i32) {
    %c0_i32 = arith.constant 0 : i32
    %c0_i32_0 = arith.constant 0 : i32
    %c0_i32_1 = arith.constant 0 : i32
    return %c0_i32, %c0_i32_0 : i32, i32
  }
  func.func @transform_3(%arg0: i32) -> (i32, i32, i32) {
    %c0_i32 = arith.constant 0 : i32
    %c0_i32_0 = arith.constant 0 : i32
    %c0_i32_1 = arith.constant 0 : i32
    %c0_i32_2 = arith.constant 0 : i32
    return %c0_i32, %c0_i32_0, %c0_i32_1 : i32, i32, i32
  }
  func.func @transform_4(%arg0: i32) -> (i32, i32, i32) {
    %c0_i32 = arith.constant 0 : i32
    %c0_i32_0 = arith.constant 0 : i32
    %c0_i32_1 = arith.constant 0 : i32
    %c0_i32_2 = arith.constant 0 : i32
    return %c0_i32, %c0_i32_0, %c0_i32_1 : i32, i32, i32
  }
  func.func @transform_5(%arg0: i32) -> (i32, i32, i32) {
    %c0_i32 = arith.constant 0 : i32
    %c0_i32_0 = arith.constant 0 : i32
    %c0_i32_1 = arith.constant 0 : i32
    %c0_i32_2 = arith.constant 0 : i32
    return %c0_i32, %c0_i32_0, %c0_i32_1 : i32, i32, i32
  }
  func.func @transform_6(%arg0: i32) -> (i32, i32, i32) {
    %c0_i32 = arith.constant 0 : i32
    %c0_i32_0 = arith.constant 0 : i32
    %c0_i32_1 = arith.constant 0 : i32
    %c0_i32_2 = arith.constant 0 : i32
    return %c0_i32, %c0_i32_0, %c0_i32_1 : i32, i32, i32
  }
  func.func @transform_7(%arg0: i32) -> (i32, i32, i32) {
    %c0_i32 = arith.constant 0 : i32
    %c0_i32_0 = arith.constant 0 : i32
    %c0_i32_1 = arith.constant 0 : i32
    %c0_i32_2 = arith.constant 0 : i32
    return %c0_i32, %c0_i32_0, %c0_i32_1 : i32, i32, i32
  }
  func.func @transform_8(%arg0: i32) -> (i32, i32, i32) {
    %c0_i32 = arith.constant 0 : i32
    %c0_i32_0 = arith.constant 0 : i32
    %c0_i32_1 = arith.constant 0 : i32
    %c0_i32_2 = arith.constant 0 : i32
    return %c0_i32, %c0_i32_0, %c0_i32_1 : i32, i32, i32
  }
  func.func @transform_9(%arg0: i32) -> (i32, i32, i32) {
    %c0_i32 = arith.constant 0 : i32
    %c0_i32_0 = arith.constant 0 : i32
    %c0_i32_1 = arith.constant 0 : i32
    %c0_i32_2 = arith.constant 0 : i32
    return %c0_i32, %c0_i32_0, %c0_i32_1 : i32, i32, i32
  }
  func.func @transform_10(%arg0: i32) -> (i32, i32, i32) {
    %c0_i32 = arith.constant 0 : i32
    %c0_i32_0 = arith.constant 0 : i32
    %c0_i32_1 = arith.constant 0 : i32
    %c0_i32_2 = arith.constant 0 : i32
    return %c0_i32, %c0_i32_0, %c0_i32_1 : i32, i32, i32
  }
  func.func @transform_11(%arg0: i32) -> (i32, i32, i32) {
    %c0_i32 = arith.constant 0 : i32
    %c0_i32_0 = arith.constant 0 : i32
    %c0_i32_1 = arith.constant 0 : i32
    %c0_i32_2 = arith.constant 0 : i32
    return %c0_i32, %c0_i32_0, %c0_i32_1 : i32, i32, i32
  }
  func.func @transform_12(%arg0: i32) -> (i32, i32) {
    %c0_i32 = arith.constant 0 : i32
    %c0_i32_0 = arith.constant 0 : i32
    %c0_i32_1 = arith.constant 0 : i32
    return %c0_i32, %c0_i32_0 : i32, i32
  }
  func.func @transform_13(%arg0: i32) -> (i32, i32) {
    %c0_i32 = arith.constant 0 : i32
    %c0_i32_0 = arith.constant 0 : i32
    %c0_i32_1 = arith.constant 0 : i32
    return %c0_i32, %c0_i32_0 : i32, i32
  }
  func.func @transform_14(%arg0: i32) -> (i32, i32) {
    %c0_i32 = arith.constant 0 : i32
    %c0_i32_0 = arith.constant 0 : i32
    %c0_i32_1 = arith.constant 0 : i32
    return %c0_i32, %c0_i32_0 : i32, i32
  }
  func.func @transform_15(%arg0: i32) -> (i32, i32, i32) {
    %c0_i32 = arith.constant 0 : i32
    %c0_i32_0 = arith.constant 0 : i32
    %c0_i32_1 = arith.constant 0 : i32
    return %arg0, %c0_i32, %c0_i32_0 : i32, i32, i32
  }
}

</mosaic_0001>

<llo_original>
// kernel: tpu_custom_call.1
$region0: #{tpu_custom_call.1}
  #allocation0 [shape = 'u32[]', space=smem, size = 0x4, offset = 0x4, fixed_abs, tag = 'smem constant byte address 0x4 - core index']
  #allocation1 [shape = 'u32[72,128]{1,0:T(1,128)}', space=vmem, size = 0x9000, scoped, tag = 'internal scratch']
  %s0 = inlined_call_operand.vmem [shape: f32[2,8,12], index: 0, kind: input, shape index: {}]
  %s1 = inlined_call_operand.vmem [shape: f32[12,32], index: 1, kind: input, shape index: {}]
  %s2 = inlined_call_operand.vmem [shape: f32[1,32], index: 2, kind: input, shape index: {}]
  %s3 = inlined_call_operand.vmem [shape: f32[18,32,16], index: 3, kind: input, shape index: {}]
  %s4 = inlined_call_operand.vmem [shape: f32[18,1,16], index: 4, kind: input, shape index: {}]
  %s5 = inlined_call_operand.vmem [shape: f32[6,16,32], index: 5, kind: input, shape index: {}]
  %s6 = inlined_call_operand.vmem [shape: f32[3,1,32], index: 6, kind: input, shape index: {}]
  %s7 = inlined_call_operand.vmem [shape: f32[3,32,32], index: 7, kind: input, shape index: {}]
  %s8 = inlined_call_operand.vmem [shape: f32[3,1,32], index: 8, kind: input, shape index: {}]
  %s9 = inlined_call_operand.vmem [shape: f32[3,32,32], index: 9, kind: input, shape index: {}]
  %s10 = inlined_call_operand.vmem [shape: f32[3,1,32], index: 10, kind: input, shape index: {}]
  %s11 = inlined_call_operand.vmem [shape: f32[3,4,32], index: 11, kind: input, shape index: {}]
  %s12 = inlined_call_operand.vmem [shape: f32[2,32], index: 12, kind: input, shape index: {}]
  %s13 = inlined_call_operand.vmem [shape: f32[32,128], index: 13, kind: input, shape index: {}]
  %s14 = inlined_call_operand.vmem [shape: f32[1,128], index: 14, kind: input, shape index: {}]
  %s15 = inlined_call_operand.hbm [shape: f32[2,1,128], index: 15, kind: output, shape index: {}]
  %s16 = sld [smem:[#allocation0]]
  $region93: #{tpu_custom_call.1} parent=0
    _
  %s18 = ssub.s32 1, %s16
  %s19 = scalar_select 0, %s18, %s16
  $region1: #{tpu_custom_call.1} parent=0
    #allocation2 [shape = 'u8[1024]{0}', space=vmem, size = 0x400, scoped, tag = 'output window, operand 0']
    #allocation3 [shape = 's32[2]{0}', space=sflag, size = 0x8, scoped, tag = 'scoped memory for tpu_custom_call.1']
    %20 = vsyncpa [#allocation3], 0
    %s21 = scalar_lea.sflag [#allocation3], 1
    %22 = vsyncpa %s21, 0
    loop: start=0, step=1, limit=4
    $region2: #{tpu_custom_call.1} parent=1 // loop_pre_header
      _
    $region3: #{tpu_custom_call.1} parent=1 // loop_header
      %s24 = sphi 0, %s28
      %p25 = scmp.ge.s32.totalorder %s24, 4
      %s34 = sphi 0, %s36
      %s37 = sphi 0, %s34
      %s38 = sphi 0, %s37
      %s54 = sphi 0, %s38
      %s58 = sphi 0, %s58
      %s60 = sphi 0, %s58
      %s61 = sphi 0, %s60
      %s75 = sphi 0, %s61
      %s79 = sphi 0, %s79
      %s81 = sphi 0, %s79
      %s82 = sphi 0, %s81
      %s96 = sphi 0, %s82
      %s100 = sphi 0, %s100
      %s102 = sphi 0, %s100
      %s103 = sphi 0, %s102
      %s117 = sphi 0, %s103
      %s121 = sphi 0, %s121
      %s123 = sphi 0, %s121
      %s124 = sphi 0, %s123
      %s138 = sphi 0, %s124
      %s142 = sphi 0, %s142
      %s144 = sphi 0, %s142
      %s145 = sphi 0, %s144
      %s159 = sphi 0, %s145
      %s163 = sphi 0, %s163
      %s165 = sphi 0, %s163
      %s166 = sphi 0, %s165
      %s180 = sphi 0, %s166
      %s184 = sphi 0, %s184
      %s186 = sphi 0, %s184
      %s187 = sphi 0, %s186
      %s201 = sphi 0, %s187
      %s205 = sphi 0, %s205
      %s207 = sphi 0, %s205
      %s208 = sphi 0, %s207
      %s222 = sphi 0, %s208
      %s226 = sphi 0, %s226
      %s228 = sphi 0, %s226
      %s229 = sphi 0, %s228
      %s243 = sphi 0, %s229
      %s247 = sphi 0, %s247
      %s249 = sphi 0, %s247
      %s250 = sphi 0, %s249
      %s264 = sphi 0, %s250
      %s268 = sphi 0, %s268
      %s270 = sphi 0, %s268
      %s271 = sphi 0, %s270
      %s285 = sphi 0, %s271
      %s289 = sphi 0, %s289
      %s291 = sphi 0, %s289
      %s292 = sphi 0, %s291
      %s306 = sphi 0, %s292
      %s310 = sphi 0, %s310
      %s312 = sphi 0, %s310
      %s313 = sphi 0, %s312
      %s327 = sphi 0, %s313
      %s331 = sphi 0, %s331
      %s333 = sphi 0, %s331
      %s334 = sphi 0, %s333
      %s348 = sphi 0, %s334
      %s354 = sphi 0, %s356
      %s357 = sphi 0, %s354
      %s358 = sphi 0, %s357
      %s374 = sphi 0, %s358
    $region4: #{tpu_custom_call.1} parent=1 // loop_header_branch
      %27 = sbr.rel (%p25) target = $region8
    $region5: #{tpu_custom_call.1} parent=1 // loop_body
      %s29 = ssub.s32 %s24, 1
      %s30 = ssub.s32 %s24, 2
      %s31 = sadd.s32 %s24, 1
      %s32 = ssub.s32 %s24, %s31
      %p33 = scmp.eq.s32.totalorder %s32, 0
      %s35 = sadd.s32 %s34, 1
      %s36 = scalar_select %p33, %s34, %s35
      %p39 = pneg %p33
      %p40 = scmp.eq.s32.totalorder %s24, 1
      %p41 = por %p39, %p40
      %p42 = scmp.ne.s32.totalorder %s34, %s37
      %p43 = scmp.eq.s32.totalorder %s24, 0
      %p44 = por %p42, %p43
      %p45 = scmp.ne.s32.totalorder %s34, %s37
      %p46 = scmp.eq.s32.totalorder %s29, 1
      %p47 = por %p45, %p46
      %p48 = scmp.ne.s32.totalorder %s37, %s38
      %p49 = scmp.eq.s32.totalorder %s29, 0
      %p50 = por %p48, %p49
      %p51 = scmp.ne.s32.totalorder %s37, %s38
      %p52 = scmp.eq.s32.totalorder %s30, 1
      %p53 = por %p51, %p52
      %p55 = scmp.ne.s32.totalorder %s38, %s54
      %p56 = scmp.eq.s32.totalorder %s30, 0
      %p57 = por %p55, %p56
      %s59 = sadd.s32 %s58, 1
      %p62 = scmp.eq.s32.totalorder %s24, 1
      %p63 = scmp.ne.s32.totalorder %s58, %s60
      %p64 = scmp.eq.s32.totalorder %s24, 0
      %p65 = por %p63, %p64
      %p66 = scmp.ne.s32.totalorder %s58, %s60
      %p67 = scmp.eq.s32.totalorder %s29, 1
      %p68 = por %p66, %p67
      %p69 = scmp.ne.s32.totalorder %s60, %s61
      %p70 = scmp.eq.s32.totalorder %s29, 0
      %p71 = por %p69, %p70
      %p72 = scmp.ne.s32.totalorder %s60, %s61
      %p73 = scmp.eq.s32.totalorder %s30, 1
      %p74 = por %p72, %p73
      %p76 = scmp.ne.s32.totalorder %s61, %s75
      %p77 = scmp.eq.s32.totalorder %s30, 0
      %p78 = por %p76, %p77
      %s80 = sadd.s32 %s79, 1
      %p83 = scmp.eq.s32.totalorder %s24, 1
      %p84 = scmp.ne.s32.totalorder %s79, %s81
      %p85 = scmp.eq.s32.totalorder %s24, 0
      %p86 = por %p84, %p85
      %p87 = scmp.ne.s32.totalorder %s79, %s81
      %p88 = scmp.eq.s32.totalorder %s29, 1
      %p89 = por %p87, %p88
      %p90 = scmp.ne.s32.totalorder %s81, %s82
      %p91 = scmp.eq.s32.totalorder %s29, 0
      %p92 = por %p90, %p91
      %p93 = scmp.ne.s32.totalorder %s81, %s82
      %p94 = scmp.eq.s32.totalorder %s30, 1
      %p95 = por %p93, %p94
      %p97 = scmp.ne.s32.totalorder %s82, %s96
      %p98 = scmp.eq.s32.totalorder %s30, 0
      %p99 = por %p97, %p98
      %s101 = sadd.s32 %s100, 1
      %p104 = scmp.eq.s32.totalorder %s24, 1
      %p105 = scmp.ne.s32.totalorder %s100, %s102
      %p106 = scmp.eq.s32.totalorder %s24, 0
      %p107 = por %p105, %p106
      %p108 = scmp.ne.s32.totalorder %s100, %s102
      %p109 = scmp.eq.s32.totalorder %s29, 1
      %p110 = por %p108, %p109
      %p111 = scmp.ne.s32.totalorder %s102, %s103
      %p112 = scmp.eq.s32.totalorder %s29, 0
      %p113 = por %p111, %p112
      %p114 = scmp.ne.s32.totalorder %s102, %s103
      %p115 = scmp.eq.s32.totalorder %s30, 1
      %p116 = por %p114, %p115
      %p118 = scmp.ne.s32.totalorder %s103, %s117
      %p119 = scmp.eq.s32.totalorder %s30, 0
      %p120 = por %p118, %p119
      %s122 = sadd.s32 %s121, 1
      %p125 = scmp.eq.s32.totalorder %s24, 1
      %p126 = scmp.ne.s32.totalorder %s121, %s123
      %p127 = scmp.eq.s32.totalorder %s24, 0
      %p128 = por %p126, %p127
      %p129 = scmp.ne.s32.totalorder %s121, %s123
      %p130 = scmp.eq.s32.totalorder %s29, 1
      %p131 = por %p129, %p130
      %p132 = scmp.ne.s32.totalorder %s123, %s124
      %p133 = scmp.eq.s32.totalorder %s29, 0
      %p134 = por %p132, %p133
      %p135 = scmp.ne.s32.totalorder %s123, %s124
      %p136 = scmp.eq.s32.totalorder %s30, 1
      %p137 = por %p135, %p136
      %p139 = scmp.ne.s32.totalorder %s124, %s138
      %p140 = scmp.eq.s32.totalorder %s30, 0
      %p141 = por %p139, %p140
      %s143 = sadd.s32 %s142, 1
      %p146 = scmp.eq.s32.totalorder %s24, 1
      %p147 = scmp.ne.s32.totalorder %s142, %s144
      %p148 = scmp.eq.s32.totalorder %s24, 0
      %p149 = por %p147, %p148
      %p150 = scmp.ne.s32.totalorder %s142, %s144
      %p151 = scmp.eq.s32.totalorder %s29, 1
      %p152 = por %p150, %p151
      %p153 = scmp.ne.s32.totalorder %s144, %s145
      %p154 = scmp.eq.s32.totalorder %s29, 0
      %p155 = por %p153, %p154
      %p156 = scmp.ne.s32.totalorder %s144, %s145
      %p157 = scmp.eq.s32.totalorder %s30, 1
      %p158 = por %p156, %p157
      %p160 = scmp.ne.s32.totalorder %s145, %s159
      %p161 = scmp.eq.s32.totalorder %s30, 0
      %p162 = por %p160, %p161
      %s164 = sadd.s32 %s163, 1
      %p167 = scmp.eq.s32.totalorder %s24, 1
      %p168 = scmp.ne.s32.totalorder %s163, %s165
      %p169 = scmp.eq.s32.totalorder %s24, 0
      %p170 = por %p168, %p169
      %p171 = scmp.ne.s32.totalorder %s163, %s165
      %p172 = scmp.eq.s32.totalorder %s29, 1
      %p173 = por %p171, %p172
      %p174 = scmp.ne.s32.totalorder %s165, %s166
      %p175 = scmp.eq.s32.totalorder %s29, 0
      %p176 = por %p174, %p175
      %p177 = scmp.ne.s32.totalorder %s165, %s166
      %p178 = scmp.eq.s32.totalorder %s30, 1
      %p179 = por %p177, %p178
      %p181 = scmp.ne.s32.totalorder %s166, %s180
      %p182 = scmp.eq.s32.totalorder %s30, 0
      %p183 = por %p181, %p182
      %s185 = sadd.s32 %s184, 1
      %p188 = scmp.eq.s32.totalorder %s24, 1
      %p189 = scmp.ne.s32.totalorder %s184, %s186
      %p190 = scmp.eq.s32.totalorder %s24, 0
      %p191 = por %p189, %p190
      %p192 = scmp.ne.s32.totalorder %s184, %s186
      %p193 = scmp.eq.s32.totalorder %s29, 1
      %p194 = por %p192, %p193
      %p195 = scmp.ne.s32.totalorder %s186, %s187
      %p196 = scmp.eq.s32.totalorder %s29, 0
      %p197 = por %p195, %p196
      %p198 = scmp.ne.s32.totalorder %s186, %s187
      %p199 = scmp.eq.s32.totalorder %s30, 1
      %p200 = por %p198, %p199
      %p202 = scmp.ne.s32.totalorder %s187, %s201
      %p203 = scmp.eq.s32.totalorder %s30, 0
      %p204 = por %p202, %p203
      %s206 = sadd.s32 %s205, 1
      %p209 = scmp.eq.s32.totalorder %s24, 1
      %p210 = scmp.ne.s32.totalorder %s205, %s207
      %p211 = scmp.eq.s32.totalorder %s24, 0
      %p212 = por %p210, %p211
      %p213 = scmp.ne.s32.totalorder %s205, %s207
      %p214 = scmp.eq.s32.totalorder %s29, 1
      %p215 = por %p213, %p214
      %p216 = scmp.ne.s32.totalorder %s207, %s208
      %p217 = scmp.eq.s32.totalorder %s29, 0
      %p218 = por %p216, %p217
      %p219 = scmp.ne.s32.totalorder %s207, %s208
      %p220 = scmp.eq.s32.totalorder %s30, 1
      %p221 = por %p219, %p220
      %p223 = scmp.ne.s32.totalorder %s208, %s222
      %p224 = scmp.eq.s32.totalorder %s30, 0
      %p225 = por %p223, %p224
      %s227 = sadd.s32 %s226, 1
      %p230 = scmp.eq.s32.totalorder %s24, 1
      %p231 = scmp.ne.s32.totalorder %s226, %s228
      %p232 = scmp.eq.s32.totalorder %s24, 0
      %p233 = por %p231, %p232
      %p234 = scmp.ne.s32.totalorder %s226, %s228
      %p235 = scmp.eq.s32.totalorder %s29, 1
      %p236 = por %p234, %p235
      %p237 = scmp.ne.s32.totalorder %s228, %s229
      %p238 = scmp.eq.s32.totalorder %s29, 0
      %p239 = por %p237, %p238
      %p240 = scmp.ne.s32.totalorder %s228, %s229
      %p241 = scmp.eq.s32.totalorder %s30, 1
      %p242 = por %p240, %p241
      %p244 = scmp.ne.s32.totalorder %s229, %s243
      %p245 = scmp.eq.s32.totalorder %s30, 0
      %p246 = por %p244, %p245
      %s248 = sadd.s32 %s247, 1
      %p251 = scmp.eq.s32.totalorder %s24, 1
      %p252 = scmp.ne.s32.totalorder %s247, %s249
      %p253 = scmp.eq.s32.totalorder %s24, 0
      %p254 = por %p252, %p253
      %p255 = scmp.ne.s32.totalorder %s247, %s249
      %p256 = scmp.eq.s32.totalorder %s29, 1
      %p257 = por %p255, %p256
      %p258 = scmp.ne.s32.totalorder %s249, %s250
      %p259 = scmp.eq.s32.totalorder %s29, 0
      %p260 = por %p258, %p259
      %p261 = scmp.ne.s32.totalorder %s249, %s250
      %p262 = scmp.eq.s32.totalorder %s30, 1
      %p263 = por %p261, %p262
      %p265 = scmp.ne.s32.totalorder %s250, %s264
      %p266 = scmp.eq.s32.totalorder %s30, 0
      %p267 = por %p265, %p266
      %s269 = sadd.s32 %s268, 1
      %p272 = scmp.eq.s32.totalorder %s24, 1
      %p273 = scmp.ne.s32.totalorder %s268, %s270
      %p274 = scmp.eq.s32.totalorder %s24, 0
      %p275 = por %p273, %p274
      %p276 = scmp.ne.s32.totalorder %s268, %s270
      %p277 = scmp.eq.s32.totalorder %s29, 1
      %p278 = por %p276, %p277
      %p279 = scmp.ne.s32.totalorder %s270, %s271
      %p280 = scmp.eq.s32.totalorder %s29, 0
      %p281 = por %p279, %p280
      %p282 = scmp.ne.s32.totalorder %s270, %s271
      %p283 = scmp.eq.s32.totalorder %s30, 1
      %p284 = por %p282, %p283
      %p286 = scmp.ne.s32.totalorder %s271, %s285
      %p287 = scmp.eq.s32.totalorder %s30, 0
      %p288 = por %p286, %p287
      %s290 = sadd.s32 %s289, 1
      %p293 = scmp.eq.s32.totalorder %s24, 1
      %p294 = scmp.ne.s32.totalorder %s289, %s291
      %p295 = scmp.eq.s32.totalorder %s24, 0
      %p296 = por %p294, %p295
      %p297 = scmp.ne.s32.totalorder %s289, %s291
      %p298 = scmp.eq.s32.totalorder %s29, 1
      %p299 = por %p297, %p298
      %p300 = scmp.ne.s32.totalorder %s291, %s292
      %p301 = scmp.eq.s32.totalorder %s29, 0
      %p302 = por %p300, %p301
      %p303 = scmp.ne.s32.totalorder %s291, %s292
      %p304 = scmp.eq.s32.totalorder %s30, 1
      %p305 = por %p303, %p304
      %p307 = scmp.ne.s32.totalorder %s292, %s306
      %p308 = scmp.eq.s32.totalorder %s30, 0
      %p309 = por %p307, %p308
      %s311 = sadd.s32 %s310, 1
      %p314 = scmp.eq.s32.totalorder %s24, 1
      %p315 = scmp.ne.s32.totalorder %s310, %s312
      %p316 = scmp.eq.s32.totalorder %s24, 0
      %p317 = por %p315, %p316
      %p318 = scmp.ne.s32.totalorder %s310, %s312
      %p319 = scmp.eq.s32.totalorder %s29, 1
      %p320 = por %p318, %p319
      %p321 = scmp.ne.s32.totalorder %s312, %s313
      %p322 = scmp.eq.s32.totalorder %s29, 0
      %p323 = por %p321, %p322
      %p324 = scmp.ne.s32.totalorder %s312, %s313
      %p325 = scmp.eq.s32.totalorder %s30, 1
      %p326 = por %p324, %p325
      %p328 = scmp.ne.s32.totalorder %s313, %s327
      %p329 = scmp.eq.s32.totalorder %s30, 0
      %p330 = por %p328, %p329
      %s332 = sadd.s32 %s331, 1
      %p335 = scmp.eq.s32.totalorder %s24, 1
      %p336 = scmp.ne.s32.totalorder %s331, %s333
      %p337 = scmp.eq.s32.totalorder %s24, 0
      %p338 = por %p336, %p337
      %p339 = scmp.ne.s32.totalorder %s331, %s333
      %p340 = scmp.eq.s32.totalorder %s29, 1
      %p341 = por %p339, %p340
      %p342 = scmp.ne.s32.totalorder %s333, %s334
      %p343 = scmp.eq.s32.totalorder %s29, 0
      %p344 = por %p342, %p343
      %p345 = scmp.ne.s32.totalorder %s333, %s334
      %p346 = scmp.eq.s32.totalorder %s30, 1
      %p347 = por %p345, %p346
      %p349 = scmp.ne.s32.totalorder %s334, %s348
      %p350 = scmp.eq.s32.totalorder %s30, 0
      %p351 = por %p349, %p350
      %s352 = ssub.s32 %s24, %s31
      %p353 = scmp.eq.s32.totalorder %s352, 0
      %s355 = sadd.s32 %s354, 1
      %s356 = scalar_select %p353, %s354, %s355
      %p359 = pneg %p353
      %p360 = scmp.eq.s32.totalorder %s24, 1
      %p361 = por %p359, %p360
      %p362 = scmp.ne.s32.totalorder %s354, %s357
      %p363 = scmp.eq.s32.totalorder %s24, 0
      %p364 = por %p362, %p363
      %p365 = scmp.ne.s32.totalorder %s354, %s357
      %p366 = scmp.eq.s32.totalorder %s29, 1
      %p367 = por %p365, %p366
      %p368 = scmp.ne.s32.totalorder %s357, %s358
      %p369 = scmp.eq.s32.totalorder %s29, 0
      %p370 = por %p368, %p369
      %p371 = scmp.ne.s32.totalorder %s357, %s358
      %p372 = scmp.eq.s32.totalorder %s30, 1
      %p373 = por %p371, %p372
      %p375 = scmp.ne.s32.totalorder %s358, %s374
      %p376 = scmp.eq.s32.totalorder %s30, 0
      %p377 = por %p375, %p376
      %p378 = scmp.le.s32.totalorder 1, %s24
      %p379 = scmp.lt.s32.totalorder %s24, 3
      %p380 = pnand %p378, %p379
      %p381 = pneg %p380
      // Predicated region
      $region9: #{tpu_custom_call.1} parent=5 // pred_check
        _
      $region10: #{tpu_custom_call.1} parent=5 // pred_check_branch
        %383 = sbr.rel (%p380) target = $region12
      $region11: #{tpu_custom_call.1} parent=5 // pred_region
        %s384 = ssub.s32 %s24, 1
        // Predicated region
        $region13: #{tpu_custom_call.1} parent=11 // pred_check
          %p385 = pneg %p71
        $region14: #{tpu_custom_call.1} parent=11 // pred_check_branch
          %387 = sbr.rel (%p385) target = $region16
        $region15: #{tpu_custom_call.1} parent=11 // pred_region
          _
        $region16: #{tpu_custom_call.1} parent=11 // pred_fallthru
          _
        // Predicated region
        $region17: #{tpu_custom_call.1} parent=11 // pred_check
          %p388 = pneg %p92
        $region18: #{tpu_custom_call.1} parent=11 // pred_check_branch
          %390 = sbr.rel (%p388) target = $region20
        $region19: #{tpu_custom_call.1} parent=11 // pred_region
          _
        $region20: #{tpu_custom_call.1} parent=11 // pred_fallthru
          _
        // Predicated region
        $region21: #{tpu_custom_call.1} parent=11 // pred_check
          %p391 = pneg %p113
        $region22: #{tpu_custom_call.1} parent=11 // pred_check_branch
          %393 = sbr.rel (%p391) target = $region24
        $region23: #{tpu_custom_call.1} parent=11 // pred_region
          _
        $region24: #{tpu_custom_call.1} parent=11 // pred_fallthru
          _
        // Predicated region
        $region25: #{tpu_custom_call.1} parent=11 // pred_check
          %p394 = pneg %p134
        $region26: #{tpu_custom_call.1} parent=11 // pred_check_branch
          %396 = sbr.rel (%p394) target = $region28
        $region27: #{tpu_custom_call.1} parent=11 // pred_region
          _
        $region28: #{tpu_custom_call.1} parent=11 // pred_fallthru
          _
        // Predicated region
        $region29: #{tpu_custom_call.1} parent=11 // pred_check
          %p397 = pneg %p155
        $region30: #{tpu_custom_call.1} parent=11 // pred_check_branch
          %399 = sbr.rel (%p397) target = $region32
        $region31: #{tpu_custom_call.1} parent=11 // pred_region
          _
        $region32: #{tpu_custom_call.1} parent=11 // pred_fallthru
          _
        // Predicated region
        $region33: #{tpu_custom_call.1} parent=11 // pred_check
          %p400 = pneg %p176
        $region34: #{tpu_custom_call.1} parent=11 // pred_check_branch
          %402 = sbr.rel (%p400) target = $region36
        $region35: #{tpu_custom_call.1} parent=11 // pred_region
          _
        $region36: #{tpu_custom_call.1} parent=11 // pred_fallthru
          _
        // Predicated region
        $region37: #{tpu_custom_call.1} parent=11 // pred_check
          %p403 = pneg %p197
        $region38: #{tpu_custom_call.1} parent=11 // pred_check_branch
          %405 = sbr.rel (%p403) target = $region40
        $region39: #{tpu_custom_call.1} parent=11 // pred_region
          _
        $region40: #{tpu_custom_call.1} parent=11 // pred_fallthru
          _
        // Predicated region
        $region41: #{tpu_custom_call.1} parent=11 // pred_check
          %p406 = pneg %p218
        $region42: #{tpu_custom_call.1} parent=11 // pred_check_branch
          %408 = sbr.rel (%p406) target = $region44
        $region43: #{tpu_custom_call.1} parent=11 // pred_region
          _
        $region44: #{tpu_custom_call.1} parent=11 // pred_fallthru
          _
        // Predicated region
        $region45: #{tpu_custom_call.1} parent=11 // pred_check
          %p409 = pneg %p239
        $region46: #{tpu_custom_call.1} parent=11 // pred_check_branch
          %411 = sbr.rel (%p409) target = $region48
        $region47: #{tpu_custom_call.1} parent=11 // pred_region
          _
        $region48: #{tpu_custom_call.1} parent=11 // pred_fallthru
          _
        // Predicated region
        $region49: #{tpu_custom_call.1} parent=11 // pred_check
          %p412 = pneg %p260
        $region50: #{tpu_custom_call.1} parent=11 // pred_check_branch
          %414 = sbr.rel (%p412) target = $region52
        $region51: #{tpu_custom_call.1} parent=11 // pred_region
          _
        $region52: #{tpu_custom_call.1} parent=11 // pred_fallthru
          _
        // Predicated region
        $region53: #{tpu_custom_call.1} parent=11 // pred_check
          %p415 = pneg %p281
        $region54: #{tpu_custom_call.1} parent=11 // pred_check_branch
          %417 = sbr.rel (%p415) target = $region56
        $region55: #{tpu_custom_call.1} parent=11 // pred_region
          _
        $region56: #{tpu_custom_call.1} parent=11 // pred_fallthru
          _
        // Predicated region
        $region57: #{tpu_custom_call.1} parent=11 // pred_check
          %p418 = pneg %p302
        $region58: #{tpu_custom_call.1} parent=11 // pred_check_branch
          %420 = sbr.rel (%p418) target = $region60
        $region59: #{tpu_custom_call.1} parent=11 // pred_region
          _
        $region60: #{tpu_custom_call.1} parent=11 // pred_fallthru
          _
        // Predicated region
        $region61: #{tpu_custom_call.1} parent=11 // pred_check
          %p421 = pneg %p323
        $region62: #{tpu_custom_call.1} parent=11 // pred_check_branch
          %423 = sbr.rel (%p421) target = $region64
        $region63: #{tpu_custom_call.1} parent=11 // pred_region
          _
        $region64: #{tpu_custom_call.1} parent=11 // pred_fallthru
          _
        // Predicated region
        $region65: #{tpu_custom_call.1} parent=11 // pred_check
          %p424 = pneg %p344
        $region66: #{tpu_custom_call.1} parent=11 // pred_check_branch
          %426 = sbr.rel (%p424) target = $region68
        $region67: #{tpu_custom_call.1} parent=11 // pred_region
          _
        $region68: #{tpu_custom_call.1} parent=11 // pred_fallthru
          _
      $region12: #{tpu_custom_call.1} parent=5 // pred_fallthru
        _
      %p427 = scmp.lt.s32.totalorder %s24, 2
      // Predicated region
      $region69: #{tpu_custom_call.1} parent=5 // pred_check
        %p428 = pneg %p427
      $region70: #{tpu_custom_call.1} parent=5 // pred_check_branch
        %430 = sbr.rel (%p428) target = $region72
      $region71: #{tpu_custom_call.1} parent=5 // pred_region
        // Predicated region
        $region73: #{tpu_custom_call.1} parent=71 // pred_check
          %p431 = pneg %p44
        $region74: #{tpu_custom_call.1} parent=71 // pred_check_branch
          %433 = sbr.rel (%p431) target = $region76
        $region75: #{tpu_custom_call.1} parent=71 // pred_region
          %p434 = scmp.lt.s32.totalorder %s24, 1
          %s435 = scalar_select %p434, %s24, 1
          %s436 = smul.addr %s435, 8
          %s437 = scalar_lea.vmem %s0, %s436
        $region76: #{tpu_custom_call.1} parent=71 // pred_fallthru
          _
      $region72: #{tpu_custom_call.1} parent=5 // pred_fallthru
        _
      %p438 = scmp.le.s32.totalorder 1, %s24
      %p439 = scmp.lt.s32.totalorder %s24, 3
      %p440 = pnand %p438, %p439
      %p441 = pneg %p440
      // Predicated region
      $region77: #{tpu_custom_call.1} parent=5 // pred_check
        _
      $region78: #{tpu_custom_call.1} parent=5 // pred_check_branch
        %443 = sbr.rel (%p440) target = $region80
      $region79: #{tpu_custom_call.1} parent=5 // pred_region
        %s444 = ssub.s32 %s24, 1
        %p445 = scmp.lt.s32.totalorder %s29, 1
        %s446 = scalar_select %p445, %s29, 1
        %s447 = smul.addr %s446, 8
        %s448 = scalar_lea.vmem %s0, %s447
        %p449 = pneg %p50
        %p450 = pneg %p47
        %p451 = pneg %p71
        %p452 = pneg %p68
        %p453 = pneg %p92
        %p454 = pneg %p89
        %p455 = pneg %p113
        %p456 = pneg %p110
        %p457 = pneg %p134
        %p458 = pneg %p131
        %p459 = pneg %p155
        %p460 = pneg %p152
        %p461 = pneg %p176
        %p462 = pneg %p173
        %p463 = pneg %p197
        %p464 = pneg %p194
        %p465 = pneg %p218
        %p466 = pneg %p215
        %p467 = pneg %p239
        %p468 = pneg %p236
        %p469 = pneg %p260
        %p470 = pneg %p257
        %p471 = pneg %p281
        %p472 = pneg %p278
        %p473 = pneg %p302
        %p474 = pneg %p299
        %p475 = pneg %p323
        %p476 = pneg %p320
        %p477 = pneg %p344
        %p478 = pneg %p341
        %p479 = pneg %p370
        %p480 = pneg %p367
        %s481 = sand.u32 %s357, 1
        %s482 = scalar_lea.sflag [#allocation3], %s481
        %s483 = sand.u32 %s357, 1
        %s484 = scalar_lea.vmem [#allocation2], %s483
        %p485 = scmp.lt.s32.totalorder %s29, 1
        %s486 = scalar_select %p485, %s29, 1
        %s487 = smul.addr %s486, 8
        %s488 = scalar_lea.vmem %s0, %s487
        %v489 = vld [vmem:[%s488] sm:$0xff]
        %v490 = vld [vmem:[%s1] sm:$0xff]
        %v491 = vld [vmem:[%s1 + $0x8] sm:$0xf]
        %v492 = vld [vmem:[%s2] sm:$0x1]
        %v494 = vperm.slane %v492, 0
        %vm496 = vcmask 97280
        %v498 = vsel %vm496, %v489, 0
        %vm500 = vcmask 1043456
        %v502 = vsel %vm500, %v491, 0
        %504 = vmatpush.msra.mxu0 0.0
        %505 = vmatpush.msra.mxu0 0.0
        %506 = vmatpush.msra.mxu0 0.0
        %507 = vmatpush.msra.mxu0 0.0
        %508 = vmatpush.msra.mxu0 0.0
        %509 = vmatpush.msra.mxu0 0.0
        %510 = vmatpush.msra.mxu0 0.0
        %511 = vmatpush.msra.mxu0 0.0
        %512 = vmatpush.msra.mxu0 0.0
        %513 = vmatpush.msra.mxu0 0.0
        %514 = vmatpush.msra.mxu0 0.0
        %515 = vmatpush.msra.mxu0 0.0
        %516 = vmatpush.msra.mxu0 0.0
        %517 = vmatpush.msra.mxu0 0.0
        %518 = vmatpush.msra.mxu0 %v502
        %519 = vmatpush.msra.mxu0 %v490
        %520 = vmatmul.f32.gmra.mxu0 %v498
        %v521 = vpop.f32.mrf.mxu0
        %v522 = vadd.f32 %v494, %v521
        %523 = vdwg.mxu0
        %v524 = vmax.f32 %v522, 0.0
        %v525 = vld [vmem:[%s11] sm:$0xf]
        %v526 = vld [vmem:[%s3] sm:$0xff]
        %v527 = vld [vmem:[%s3 + $0x8] sm:$0xff]
        %v528 = vld [vmem:[%s3 + $0x10] sm:$0xff]
        %v529 = vld [vmem:[%s3 + $0x18] sm:$0xff]
        %v530 = vld [vmem:[%s4] sm:$0x1]
        %v532 = vperm.slane %v530, 0
        %vm534 = vcmask 261120
        %v536 = vsel %vm534, %v524, 0
        %538 = vmatpush.msra.mxu0 0.0
        %539 = vmatpush.msra.mxu0 0.0
        %540 = vmatpush.msra.mxu0 0.0
        %541 = vmatpush.msra.mxu0 0.0
        %542 = vmatpush.msra.mxu0 0.0
        %543 = vmatpush.msra.mxu0 0.0
        %544 = vmatpush.msra.mxu0 0.0
        %545 = vmatpush.msra.mxu0 0.0
        %546 = vmatpush.msra.mxu0 0.0
        %547 = vmatpush.msra.mxu0 0.0
        %548 = vmatpush.msra.mxu0 0.0
        %549 = vmatpush.msra.mxu0 0.0
        %550 = vmatpush.msra.mxu0 %v529
        %551 = vmatpush.msra.mxu0 %v528
        %552 = vmatpush.msra.mxu0 %v527
        %553 = vmatpush.msra.mxu0 %v526
        %554 = vmatmul.f32.gmra.mxu0 %v536
        %v555 = vpop.f32.mrf.mxu0
        %v556 = vadd.f32 %v532, %v555
        %557 = vdwg.mxu0
        %s558 = scalar_lea.vmem %s3, 64
        %v559 = vld [vmem:[%s558] sm:$0xff]
        %v560 = vld [vmem:[%s558 + $0x8] sm:$0xff]
        %v561 = vld [vmem:[%s558 + $0x10] sm:$0xff]
        %v562 = vld [vmem:[%s558 + $0x18] sm:$0xff]
        %s563 = scalar_lea.vmem %s4, 2
        %v564 = vld [vmem:[%s563] sm:$0x1]
        %v566 = vperm.slane %v564, 0
        %568 = vmatpush.msra.mxu0 0.0
        %569 = vmatpush.msra.mxu0 0.0
        %570 = vmatpush.msra.mxu0 0.0
        %571 = vmatpush.msra.mxu0 0.0
        %572 = vmatpush.msra.mxu0 0.0
        %573 = vmatpush.msra.mxu0 0.0
        %574 = vmatpush.msra.mxu0 0.0
        %575 = vmatpush.msra.mxu0 0.0
        %576 = vmatpush.msra.mxu0 0.0
        %577 = vmatpush.msra.mxu0 0.0
        %578 = vmatpush.msra.mxu0 0.0
        %579 = vmatpush.msra.mxu0 0.0
        %580 = vmatpush.msra.mxu0 %v562
        %581 = vmatpush.msra.mxu0 %v561
        %582 = vmatpush.msra.mxu0 %v560
        %583 = vmatpush.msra.mxu0 %v559
        %584 = vmatmul.f32.gmra.mxu0 %v536
        %v585 = vpop.f32.mrf.mxu0
        %v586 = vadd.f32 %v566, %v585
        %587 = vdwg.mxu0
        %s588 = scalar_lea.vmem %s3, 128
        %v589 = vld [vmem:[%s588] sm:$0xff]
        %v590 = vld [vmem:[%s588 + $0x8] sm:$0xff]
        %v591 = vld [vmem:[%s588 + $0x10] sm:$0xff]
        %v592 = vld [vmem:[%s588 + $0x18] sm:$0xff]
        %s593 = scalar_lea.vmem %s4, 4
        %v594 = vld [vmem:[%s593] sm:$0x1]
        %v596 = vperm.slane %v594, 0
        %598 = vmatpush.msra.mxu0 0.0
        %599 = vmatpush.msra.mxu0 0.0
        %600 = vmatpush.msra.mxu0 0.0
        %601 = vmatpush.msra.mxu0 0.0
        %602 = vmatpush.msra.mxu0 0.0
        %603 = vmatpush.msra.mxu0 0.0
        %604 = vmatpush.msra.mxu0 0.0
        %605 = vmatpush.msra.mxu0 0.0
        %606 = vmatpush.msra.mxu0 0.0
        %607 = vmatpush.msra.mxu0 0.0
        %608 = vmatpush.msra.mxu0 0.0
        %609 = vmatpush.msra.mxu0 0.0
        %610 = vmatpush.msra.mxu0 %v592
        %611 = vmatpush.msra.mxu0 %v591
        %612 = vmatpush.msra.mxu0 %v590
        %613 = vmatpush.msra.mxu0 %v589
        %614 = vmatmul.f32.gmra.mxu0 %v536
        %v615 = vpop.f32.mrf.mxu0
        %v616 = vadd.f32 %v596, %v615
        %617 = vdwg.mxu0
        %vm618 = vcmask 130048
        %v620 = vsel %vm618, %v556, 0
        %v623 = vsel %vm618, %v586, 0
        %625 = vmatpush.xpose.msra.mxu0 0.0
        %626 = vmatpush.xpose.msra.mxu0 0.0
        %627 = vmatpush.xpose.msra.mxu0 0.0
        %628 = vmatpush.xpose.msra.mxu0 0.0
        %629 = vmatpush.xpose.msra.mxu0 0.0
        %630 = vmatpush.xpose.msra.mxu0 0.0
        %631 = vmatpush.xpose.msra.mxu0 0.0
        %632 = vmatpush.xpose.msra.mxu0 0.0
        %633 = vmatpush.xpose.msra.mxu0 0.0
        %634 = vmatpush.xpose.msra.mxu0 0.0
        %635 = vmatpush.xpose.msra.mxu0 0.0
        %636 = vmatpush.xpose.msra.mxu0 0.0
        %637 = vmatpush.xpose.msra.mxu0 0.0
        %638 = vmatpush.xpose.msra.mxu0 0.0
        %639 = vmatpush.xpose.msra.mxu0 0.0
        %640 = vmatpush.xpose.msra.mxu0 %v623
        %641 = vmatmul.f32.gmra.mxu0 %v620
        %v642 = vpop.f32.mrf.mxu0
        %v643 = vadd.f32 0.0, %v642
        %644 = vdwg.mxu0
        %vm645 = vcmask 64512
        %v646 = vsel %vm645, %v643, -inf
        %647 = vmax.xlane.f32.xlu0 %v646
        %v648 = vpop.xlane.xlu0 %647
        %v649 = vsub.f32 %v643, %v648
        %v650 = vmul.f32 %v649, 1.442695
        %v651 = vpow.pop %v650
        %v652 = vsel %vm645, %v651, 0.0
        %653 = vadd.xlane.f32.xlu0 %v652
        %v654 = vpop.xlane.xlu0 %653
        %v655 = vrcp.pop %v654
        %v656 = vmul.f32 %v654, %v655
        %v657 = vsub.f32 1.0, %v656
        %v658 = vmul.f32 %v655, %v657
        %v659 = vadd.f32 %v655, %v658
        %vm660 = vweird.f32 %v654
        %vm661 = vweird.f32 %v655
        %vm662 = vmor %vm660, %vm661
        %v663 = vsel %vm662, %v655, %v659
        %v664 = vand.u32 2147483647, %v654
        %vm665 = vcmp.eq.f32.partialorder %v664, 8.507059e+37
        %v666 = vand.u32 %v654, 2147483648
        %v667 = vor.u32 1.1754944e-38, %v666
        %v668 = vsel %vm665, %v667, %v663
        %v669 = vmul.f32 %v651, %v668
        %v671 = vsel %vm645, %v669, 0
        %673 = vmatpush.msra.mxu0 0.0
        %674 = vmatpush.msra.mxu0 0.0
        %675 = vmatpush.msra.mxu0 0.0
        %676 = vmatpush.msra.mxu0 0.0
        %677 = vmatpush.msra.mxu0 0.0
        %678 = vmatpush.msra.mxu0 0.0
        %679 = vmatpush.msra.mxu0 0.0
        %680 = vmatpush.msra.mxu0 0.0
        %681 = vmatpush.msra.mxu0 0.0
        %682 = vmatpush.msra.mxu0 0.0
        %683 = vmatpush.msra.mxu0 0.0
        %684 = vmatpush.msra.mxu0 0.0
        %685 = vmatpush.msra.mxu0 0.0
        %686 = vmatpush.msra.mxu0 0.0
        %687 = vmatpush.msra.mxu0 0.0
        %688 = vmatpush.msra.mxu0 %v616
        %689 = vmatmul.f32.gmra.mxu0 %v671
        %v690 = vpop.f32.mrf.mxu0
        %v691 = vadd.f32 0.0, %v690
        %692 = vdwg.mxu0
        %v693 = vld [vmem:[%s5] sm:$0xff]
        %v694 = vld [vmem:[%s5 + $0x8] sm:$0xff]
        %s695 = scalar_lea.vmem %s3, 32
        %v696 = vld [vmem:[%s695] sm:$0xff]
        %v697 = vld [vmem:[%s695 + $0x8] sm:$0xff]
        %v698 = vld [vmem:[%s695 + $0x10] sm:$0xff]
        %v699 = vld [vmem:[%s695 + $0x18] sm:$0xff]
        %s700 = scalar_lea.vmem %s4, 1
        %v701 = vld [vmem:[%s700] sm:$0x1]
        %v703 = vperm.slane %v701, 0
        %705 = vmatpush.msra.mxu0 0.0
        %706 = vmatpush.msra.mxu0 0.0
        %707 = vmatpush.msra.mxu0 0.0
        %708 = vmatpush.msra.mxu0 0.0
        %709 = vmatpush.msra.mxu0 0.0
        %710 = vmatpush.msra.mxu0 0.0
        %711 = vmatpush.msra.mxu0 0.0
        %712 = vmatpush.msra.mxu0 0.0
        %713 = vmatpush.msra.mxu0 0.0
        %714 = vmatpush.msra.mxu0 0.0
        %715 = vmatpush.msra.mxu0 0.0
        %716 = vmatpush.msra.mxu0 0.0
        %717 = vmatpush.msra.mxu0 %v699
        %718 = vmatpush.msra.mxu0 %v698
        %719 = vmatpush.msra.mxu0 %v697
        %720 = vmatpush.msra.mxu0 %v696
        %721 = vmatmul.f32.gmra.mxu0 %v536
        %v722 = vpop.f32.mrf.mxu0
        %v723 = vadd.f32 %v703, %v722
        %724 = vdwg.mxu0
        %s725 = scalar_lea.vmem %s3, 96
        %v726 = vld [vmem:[%s725] sm:$0xff]
        %v727 = vld [vmem:[%s725 + $0x8] sm:$0xff]
        %v728 = vld [vmem:[%s725 + $0x10] sm:$0xff]
        %v729 = vld [vmem:[%s725 + $0x18] sm:$0xff]
        %s730 = scalar_lea.vmem %s4, 3
        %v731 = vld [vmem:[%s730] sm:$0x1]
        %v733 = vperm.slane %v731, 0
        %735 = vmatpush.msra.mxu0 0.0
        %736 = vmatpush.msra.mxu0 0.0
        %737 = vmatpush.msra.mxu0 0.0
        %738 = vmatpush.msra.mxu0 0.0
        %739 = vmatpush.msra.mxu0 0.0
        %740 = vmatpush.msra.mxu0 0.0
        %741 = vmatpush.msra.mxu0 0.0
        %742 = vmatpush.msra.mxu0 0.0
        %743 = vmatpush.msra.mxu0 0.0
        %744 = vmatpush.msra.mxu0 0.0
        %745 = vmatpush.msra.mxu0 0.0
        %746 = vmatpush.msra.mxu0 0.0
        %747 = vmatpush.msra.mxu0 %v729
        %748 = vmatpush.msra.mxu0 %v728
        %749 = vmatpush.msra.mxu0 %v727
        %750 = vmatpush.msra.mxu0 %v726
        %751 = vmatmul.f32.gmra.mxu0 %v536
        %v752 = vpop.f32.mrf.mxu0
        %v753 = vadd.f32 %v733, %v752
        %754 = vdwg.mxu0
        %s755 = scalar_lea.vmem %s3, 160
        %v756 = vld [vmem:[%s755] sm:$0xff]
        %v757 = vld [vmem:[%s755 + $0x8] sm:$0xff]
        %v758 = vld [vmem:[%s755 + $0x10] sm:$0xff]
        %v759 = vld [vmem:[%s755 + $0x18] sm:$0xff]
        %s760 = scalar_lea.vmem %s4, 5
        %v761 = vld [vmem:[%s760] sm:$0x1]
        %v763 = vperm.slane %v761, 0
        %765 = vmatpush.msra.mxu0 0.0
        %766 = vmatpush.msra.mxu0 0.0
        %767 = vmatpush.msra.mxu0 0.0
        %768 = vmatpush.msra.mxu0 0.0
        %769 = vmatpush.msra.mxu0 0.0
        %770 = vmatpush.msra.mxu0 0.0
        %771 = vmatpush.msra.mxu0 0.0
        %772 = vmatpush.msra.mxu0 0.0
        %773 = vmatpush.msra.mxu0 0.0
        %774 = vmatpush.msra.mxu0 0.0
        %775 = vmatpush.msra.mxu0 0.0
        %776 = vmatpush.msra.mxu0 0.0
        %777 = vmatpush.msra.mxu0 %v759
        %778 = vmatpush.msra.mxu0 %v758
        %779 = vmatpush.msra.mxu0 %v757
        %780 = vmatpush.msra.mxu0 %v756
        %781 = vmatmul.f32.gmra.mxu0 %v536
        %v782 = vpop.f32.mrf.mxu0
        %v783 = vadd.f32 %v763, %v782
        %784 = vdwg.mxu0
        %v786 = vsel %vm618, %v723, 0
        %v789 = vsel %vm618, %v753, 0
        %791 = vmatpush.xpose.msra.mxu0 0.0
        %792 = vmatpush.xpose.msra.mxu0 0.0
        %793 = vmatpush.xpose.msra.mxu0 0.0
        %794 = vmatpush.xpose.msra.mxu0 0.0
        %795 = vmatpush.xpose.msra.mxu0 0.0
        %796 = vmatpush.xpose.msra.mxu0 0.0
        %797 = vmatpush.xpose.msra.mxu0 0.0
        %798 = vmatpush.xpose.msra.mxu0 0.0
        %799 = vmatpush.xpose.msra.mxu0 0.0
        %800 = vmatpush.xpose.msra.mxu0 0.0
        %801 = vmatpush.xpose.msra.mxu0 0.0
        %802 = vmatpush.xpose.msra.mxu0 0.0
        %803 = vmatpush.xpose.msra.mxu0 0.0
        %804 = vmatpush.xpose.msra.mxu0 0.0
        %805 = vmatpush.xpose.msra.mxu0 0.0
        %806 = vmatpush.xpose.msra.mxu0 %v789
        %807 = vmatmul.f32.gmra.mxu0 %v786
        %v808 = vpop.f32.mrf.mxu0
        %v809 = vadd.f32 0.0, %v808
        %810 = vdwg.mxu0
        %v811 = vsel %vm645, %v809, -inf
        %812 = vmax.xlane.f32.xlu0 %v811
        %v813 = vpop.xlane.xlu0 %812
        %v814 = vsub.f32 %v809, %v813
        %v815 = vmul.f32 %v814, 1.442695
        %v816 = vpow.pop %v815
        %v817 = vsel %vm645, %v816, 0.0
        %818 = vadd.xlane.f32.xlu0 %v817
        %v819 = vpop.xlane.xlu0 %818
        %v820 = vrcp.pop %v819
        %v821 = vmul.f32 %v819, %v820
        %v822 = vsub.f32 1.0, %v821
        %v823 = vmul.f32 %v820, %v822
        %v824 = vadd.f32 %v820, %v823
        %vm825 = vweird.f32 %v819
        %vm826 = vweird.f32 %v820
        %vm827 = vmor %vm825, %vm826
        %v828 = vsel %vm827, %v820, %v824
        %v829 = vand.u32 2147483647, %v819
        %vm830 = vcmp.eq.f32.partialorder %v829, 8.507059e+37
        %v831 = vand.u32 %v819, 2147483648
        %v832 = vor.u32 1.1754944e-38, %v831
        %v833 = vsel %vm830, %v832, %v828
        %v834 = vmul.f32 %v816, %v833
        %v836 = vsel %vm645, %v834, 0
        %838 = vmatpush.msra.mxu0 0.0
        %839 = vmatpush.msra.mxu0 0.0
        %840 = vmatpush.msra.mxu0 0.0
        %841 = vmatpush.msra.mxu0 0.0
        %842 = vmatpush.msra.mxu0 0.0
        %843 = vmatpush.msra.mxu0 0.0
        %844 = vmatpush.msra.mxu0 0.0
        %845 = vmatpush.msra.mxu0 0.0
        %846 = vmatpush.msra.mxu0 0.0
        %847 = vmatpush.msra.mxu0 0.0
        %848 = vmatpush.msra.mxu0 0.0
        %849 = vmatpush.msra.mxu0 0.0
        %850 = vmatpush.msra.mxu0 0.0
        %851 = vmatpush.msra.mxu0 0.0
        %852 = vmatpush.msra.mxu0 0.0
        %853 = vmatpush.msra.mxu0 %v783
        %854 = vmatmul.f32.gmra.mxu0 %v836
        %v855 = vpop.f32.mrf.mxu0
        %v856 = vadd.f32 0.0, %v855
        %857 = vdwg.mxu0
        %s858 = scalar_lea.vmem %s5, 16
        %v859 = vld [vmem:[%s858] sm:$0xff]
        %v860 = vld [vmem:[%s858 + $0x8] sm:$0xff]
        %v862 = vsel %vm618, %v856, 0
        %864 = vmatpush.msra.mxu0 0.0
        %865 = vmatpush.msra.mxu0 0.0
        %866 = vmatpush.msra.mxu0 0.0
        %867 = vmatpush.msra.mxu0 0.0
        %868 = vmatpush.msra.mxu0 0.0
        %869 = vmatpush.msra.mxu0 0.0
        %870 = vmatpush.msra.mxu0 0.0
        %871 = vmatpush.msra.mxu0 0.0
        %872 = vmatpush.msra.mxu0 0.0
        %873 = vmatpush.msra.mxu0 0.0
        %874 = vmatpush.msra.mxu0 0.0
        %875 = vmatpush.msra.mxu0 0.0
        %876 = vmatpush.msra.mxu0 0.0
        %877 = vmatpush.msra.mxu0 0.0
        %878 = vmatpush.msra.mxu0 %v860
        %879 = vmatpush.msra.mxu0 %v859
        %880 = vmatmul.f32.gmra.mxu0 %v862
        %v881 = vpop.f32.mrf.mxu0
        %v882 = vadd.f32 0.0, %v881
        %883 = vdwg.mxu0
        %v885 = vsel %vm618, %v691, 0
        %887 = vmatpush.msra.mxu0 0.0
        %888 = vmatpush.msra.mxu0 0.0
        %889 = vmatpush.msra.mxu0 0.0
        %890 = vmatpush.msra.mxu0 0.0
        %891 = vmatpush.msra.mxu0 0.0
        %892 = vmatpush.msra.mxu0 0.0
        %893 = vmatpush.msra.mxu0 0.0
        %894 = vmatpush.msra.mxu0 0.0
        %895 = vmatpush.msra.mxu0 0.0
        %896 = vmatpush.msra.mxu0 0.0
        %897 = vmatpush.msra.mxu0 0.0
        %898 = vmatpush.msra.mxu0 0.0
        %899 = vmatpush.msra.mxu0 0.0
        %900 = vmatpush.msra.mxu0 0.0
        %901 = vmatpush.msra.mxu0 %v694
        %902 = vmatpush.msra.mxu0 %v693
        %903 = vmatmul.f32.gmra.mxu0 %v885
        %v904 = vpop.f32.mrf.mxu0
        %v905 = vadd.f32 %v882, %v904
        %906 = vdwg.mxu0
        %v907 = vld [vmem:[%s6] sm:$0x1]
        %v909 = vperm.slane %v907, 0
        %v911 = vadd.f32 %v905, %v909
        %v912 = vadd.f32 %v524, %v911
        %v913 = vsel %vm534, %v912, 0.0
        %914 = vadd.xlane.f32.xlu0 %v913
        %v915 = vpop.xlane.xlu0 %914
        %v916 = vrcp.pop 32.0
        %v917 = vmul.f32 32.0, %v916
        %v918 = vsub.f32 1.0, %v917
        %v919 = vmul.f32 %v916, %v918
        %v920 = vadd.f32 %v916, %v919
        %vm921 = vweird.f32 %v916
        %v922 = vsel %vm921, %v916, %v920
        %v923 = vmul.f32 %v915, %v922
        %v924 = vsub.f32 %v912, %v923
        %v925 = vmul.f32 %v924, %v924
        %v926 = vsel %vm534, %v925, 0.0
        %927 = vadd.xlane.f32.xlu0 %v926
        %v928 = vpop.xlane.xlu0 %927
        %v929 = vmul.f32 %v928, %v922
        %v930 = vadd.f32 %v929, 1e-05
        %v931 = vrsqrt.pop %v930
        %v932 = vmul.f32 %v931, %v930
        %v933 = vmul.f32 %v932, %v931
        %v934 = vmul.f32 0.5, %v933
        %v935 = vsub.f32 1.5, %v934
        %v936 = vmul.f32 %v931, %v935
        %vm937 = vweird.f32 %v930
        %vm938 = vweird.f32 %v931
        %vm939 = vmor %vm937, %vm938
        %v940 = vsel %vm939, %v931, %v936
        %v941 = vmul.f32 %v924, %v940
        %v942 = vperm.slane %v525, 0
        %v943 = vmul.f32 %v941, %v942
        %v944 = vperm.slane %v525, 1
        %v945 = vadd.f32 %v943, %v944
        %v946 = vld [vmem:[%s7] sm:$0xff]
        %v947 = vld [vmem:[%s7 + $0x8] sm:$0xff]
        %v948 = vld [vmem:[%s7 + $0x10] sm:$0xff]
        %v949 = vld [vmem:[%s7 + $0x18] sm:$0xff]
        %v950 = vld [vmem:[%s8] sm:$0x1]
        %v952 = vperm.slane %v950, 0
        %v955 = vsel %vm534, %v945, 0
        %957 = vmatpush.msra.mxu0 0.0
        %958 = vmatpush.msra.mxu0 0.0
        %959 = vmatpush.msra.mxu0 0.0
        %960 = vmatpush.msra.mxu0 0.0
        %961 = vmatpush.msra.mxu0 0.0
        %962 = vmatpush.msra.mxu0 0.0
        %963 = vmatpush.msra.mxu0 0.0
        %964 = vmatpush.msra.mxu0 0.0
        %965 = vmatpush.msra.mxu0 0.0
        %966 = vmatpush.msra.mxu0 0.0
        %967 = vmatpush.msra.mxu0 0.0
        %968 = vmatpush.msra.mxu0 0.0
        %969 = vmatpush.msra.mxu0 %v949
        %970 = vmatpush.msra.mxu0 %v948
        %971 = vmatpush.msra.mxu0 %v947
        %972 = vmatpush.msra.mxu0 %v946
        %973 = vmatmul.f32.gmra.mxu0 %v955
        %v974 = vpop.f32.mrf.mxu0
        %v975 = vadd.f32 %v952, %v974
        %976 = vdwg.mxu0
        %v977 = vmax.f32 %v975, 0.0
        %v978 = vld [vmem:[%s9] sm:$0xff]
        %v979 = vld [vmem:[%s9 + $0x8] sm:$0xff]
        %v980 = vld [vmem:[%s9 + $0x10] sm:$0xff]
        %v981 = vld [vmem:[%s9 + $0x18] sm:$0xff]
        %v982 = vld [vmem:[%s10] sm:$0x1]
        %v984 = vperm.slane %v982, 0
        %v987 = vsel %vm534, %v977, 0
        %989 = vmatpush.msra.mxu0 0.0
        %990 = vmatpush.msra.mxu0 0.0
        %991 = vmatpush.msra.mxu0 0.0
        %992 = vmatpush.msra.mxu0 0.0
        %993 = vmatpush.msra.mxu0 0.0
        %994 = vmatpush.msra.mxu0 0.0
        %995 = vmatpush.msra.mxu0 0.0
        %996 = vmatpush.msra.mxu0 0.0
        %997 = vmatpush.msra.mxu0 0.0
        %998 = vmatpush.msra.mxu0 0.0
        %999 = vmatpush.msra.mxu0 0.0
        %1000 = vmatpush.msra.mxu0 0.0
        %1001 = vmatpush.msra.mxu0 %v981
        %1002 = vmatpush.msra.mxu0 %v980
        %1003 = vmatpush.msra.mxu0 %v979
        %1004 = vmatpush.msra.mxu0 %v978
        %1005 = vmatmul.f32.gmra.mxu0 %v987
        %v1006 = vpop.f32.mrf.mxu0
        %v1007 = vadd.f32 %v984, %v1006
        %1008 = vdwg.mxu0
        %v1009 = vadd.f32 %v945, %v1007
        %v1010 = vsel %vm534, %v1009, 0.0
        %1011 = vadd.xlane.f32.xlu0 %v1010
        %v1012 = vpop.xlane.xlu0 %1011
        %v1013 = vmul.f32 %v1012, %v922
        %v1014 = vsub.f32 %v1009, %v1013
        %v1015 = vmul.f32 %v1014, %v1014
        %v1016 = vsel %vm534, %v1015, 0.0
        %1017 = vadd.xlane.f32.xlu0 %v1016
        %v1018 = vpop.xlane.xlu0 %1017
        %v1019 = vmul.f32 %v1018, %v922
        %v1020 = vadd.f32 %v1019, 1e-05
        %v1021 = vrsqrt.pop %v1020
        %v1022 = vmul.f32 %v1021, %v1020
        %v1023 = vmul.f32 %v1022, %v1021
        %v1024 = vmul.f32 0.5, %v1023
        %v1025 = vsub.f32 1.5, %v1024
        %v1026 = vmul.f32 %v1021, %v1025
        %vm1027 = vweird.f32 %v1020
        %vm1028 = vweird.f32 %v1021
        %vm1029 = vmor %vm1027, %vm1028
        %v1030 = vsel %vm1029, %v1021, %v1026
        %v1031 = vmul.f32 %v1014, %v1030
        %v1032 = vperm.slane %v525, 2
        %v1033 = vmul.f32 %v1031, %v1032
        %v1034 = vperm.slane %v525, 3
        %v1035 = vadd.f32 %v1033, %v1034
        %s1036 = scalar_lea.vmem %s11, 4
        %v1037 = vld [vmem:[%s1036] sm:$0xf]
        %s1038 = scalar_lea.vmem %s3, 192
        %v1039 = vld [vmem:[%s1038] sm:$0xff]
        %v1040 = vld [vmem:[%s1038 + $0x8] sm:$0xff]
        %v1041 = vld [vmem:[%s1038 + $0x10] sm:$0xff]
        %v1042 = vld [vmem:[%s1038 + $0x18] sm:$0xff]
        %s1043 = scalar_lea.vmem %s4, 6
        %v1044 = vld [vmem:[%s1043] sm:$0x1]
        %v1046 = vperm.slane %v1044, 0
        %v1049 = vsel %vm534, %v1035, 0
        %1051 = vmatpush.msra.mxu0 0.0
        %1052 = vmatpush.msra.mxu0 0.0
        %1053 = vmatpush.msra.mxu0 0.0
        %1054 = vmatpush.msra.mxu0 0.0
        %1055 = vmatpush.msra.mxu0 0.0
        %1056 = vmatpush.msra.mxu0 0.0
        %1057 = vmatpush.msra.mxu0 0.0
        %1058 = vmatpush.msra.mxu0 0.0
        %1059 = vmatpush.msra.mxu0 0.0
        %1060 = vmatpush.msra.mxu0 0.0
        %1061 = vmatpush.msra.mxu0 0.0
        %1062 = vmatpush.msra.mxu0 0.0
        %1063 = vmatpush.msra.mxu0 %v1042
        %1064 = vmatpush.msra.mxu0 %v1041
        %1065 = vmatpush.msra.mxu0 %v1040
        %1066 = vmatpush.msra.mxu0 %v1039
        %1067 = vmatmul.f32.gmra.mxu0 %v1049
        %v1068 = vpop.f32.mrf.mxu0
        %v1069 = vadd.f32 %v1046, %v1068
        %1070 = vdwg.mxu0
        %s1071 = scalar_lea.vmem %s3, 256
        %v1072 = vld [vmem:[%s1071] sm:$0xff]
        %v1073 = vld [vmem:[%s1071 + $0x8] sm:$0xff]
        %v1074 = vld [vmem:[%s1071 + $0x10] sm:$0xff]
        %v1075 = vld [vmem:[%s1071 + $0x18] sm:$0xff]
        %s1076 = scalar_lea.vmem %s4, 8
        %v1077 = vld [vmem:[%s1076] sm:$0x1]
        %v1079 = vperm.slane %v1077, 0
        %1081 = vmatpush.msra.mxu0 0.0
        %1082 = vmatpush.msra.mxu0 0.0
        %1083 = vmatpush.msra.mxu0 0.0
        %1084 = vmatpush.msra.mxu0 0.0
        %1085 = vmatpush.msra.mxu0 0.0
        %1086 = vmatpush.msra.mxu0 0.0
        %1087 = vmatpush.msra.mxu0 0.0
        %1088 = vmatpush.msra.mxu0 0.0
        %1089 = vmatpush.msra.mxu0 0.0
        %1090 = vmatpush.msra.mxu0 0.0
        %1091 = vmatpush.msra.mxu0 0.0
        %1092 = vmatpush.msra.mxu0 0.0
        %1093 = vmatpush.msra.mxu0 %v1075
        %1094 = vmatpush.msra.mxu0 %v1074
        %1095 = vmatpush.msra.mxu0 %v1073
        %1096 = vmatpush.msra.mxu0 %v1072
        %1097 = vmatmul.f32.gmra.mxu0 %v1049
        %v1098 = vpop.f32.mrf.mxu0
        %v1099 = vadd.f32 %v1079, %v1098
        %1100 = vdwg.mxu0
        %s1101 = scalar_lea.vmem %s3, 320
        %v1102 = vld [vmem:[%s1101] sm:$0xff]
        %v1103 = vld [vmem:[%s1101 + $0x8] sm:$0xff]
        %v1104 = vld [vmem:[%s1101 + $0x10] sm:$0xff]
        %v1105 = vld [vmem:[%s1101 + $0x18] sm:$0xff]
        %s1106 = scalar_lea.vmem %s4, 10
        %v1107 = vld [vmem:[%s1106] sm:$0x1]
        %v1109 = vperm.slane %v1107, 0
        %1111 = vmatpush.msra.mxu0 0.0
        %1112 = vmatpush.msra.mxu0 0.0
        %1113 = vmatpush.msra.mxu0 0.0
        %1114 = vmatpush.msra.mxu0 0.0
        %1115 = vmatpush.msra.mxu0 0.0
        %1116 = vmatpush.msra.mxu0 0.0
        %1117 = vmatpush.msra.mxu0 0.0
        %1118 = vmatpush.msra.mxu0 0.0
        %1119 = vmatpush.msra.mxu0 0.0
        %1120 = vmatpush.msra.mxu0 0.0
        %1121 = vmatpush.msra.mxu0 0.0
        %1122 = vmatpush.msra.mxu0 0.0
        %1123 = vmatpush.msra.mxu0 %v1105
        %1124 = vmatpush.msra.mxu0 %v1104
        %1125 = vmatpush.msra.mxu0 %v1103
        %1126 = vmatpush.msra.mxu0 %v1102
        %1127 = vmatmul.f32.gmra.mxu0 %v1049
        %v1128 = vpop.f32.mrf.mxu0
        %v1129 = vadd.f32 %v1109, %v1128
        %1130 = vdwg.mxu0
        %v1132 = vsel %vm618, %v1069, 0
        %v1135 = vsel %vm618, %v1099, 0
        %1137 = vmatpush.xpose.msra.mxu0 0.0
        %1138 = vmatpush.xpose.msra.mxu0 0.0
        %1139 = vmatpush.xpose.msra.mxu0 0.0
        %1140 = vmatpush.xpose.msra.mxu0 0.0
        %1141 = vmatpush.xpose.msra.mxu0 0.0
        %1142 = vmatpush.xpose.msra.mxu0 0.0
        %1143 = vmatpush.xpose.msra.mxu0 0.0
        %1144 = vmatpush.xpose.msra.mxu0 0.0
        %1145 = vmatpush.xpose.msra.mxu0 0.0
        %1146 = vmatpush.xpose.msra.mxu0 0.0
        %1147 = vmatpush.xpose.msra.mxu0 0.0
        %1148 = vmatpush.xpose.msra.mxu0 0.0
        %1149 = vmatpush.xpose.msra.mxu0 0.0
        %1150 = vmatpush.xpose.msra.mxu0 0.0
        %1151 = vmatpush.xpose.msra.mxu0 0.0
        %1152 = vmatpush.xpose.msra.mxu0 %v1135
        %1153 = vmatmul.f32.gmra.mxu0 %v1132
        %v1154 = vpop.f32.mrf.mxu0
        %v1155 = vadd.f32 0.0, %v1154
        %1156 = vdwg.mxu0
        %v1157 = vsel %vm645, %v1155, -inf
        %1158 = vmax.xlane.f32.xlu0 %v1157
        %v1159 = vpop.xlane.xlu0 %1158
        %v1160 = vsub.f32 %v1155, %v1159
        %v1161 = vmul.f32 %v1160, 1.442695
        %v1162 = vpow.pop %v1161
        %v1163 = vsel %vm645, %v1162, 0.0
        %1164 = vadd.xlane.f32.xlu0 %v1163
        %v1165 = vpop.xlane.xlu0 %1164
        %v1166 = vrcp.pop %v1165
        %v1167 = vmul.f32 %v1165, %v1166
        %v1168 = vsub.f32 1.0, %v1167
        %v1169 = vmul.f32 %v1166, %v1168
        %v1170 = vadd.f32 %v1166, %v1169
        %vm1171 = vweird.f32 %v1165
        %vm1172 = vweird.f32 %v1166
        %vm1173 = vmor %vm1171, %vm1172
        %v1174 = vsel %vm1173, %v1166, %v1170
        %v1175 = vand.u32 2147483647, %v1165
        %vm1176 = vcmp.eq.f32.partialorder %v1175, 8.507059e+37
        %v1177 = vand.u32 %v1165, 2147483648
        %v1178 = vor.u32 1.1754944e-38, %v1177
        %v1179 = vsel %vm1176, %v1178, %v1174
        %v1180 = vmul.f32 %v1162, %v1179
        %v1182 = vsel %vm645, %v1180, 0
        %1184 = vmatpush.msra.mxu0 0.0
        %1185 = vmatpush.msra.mxu0 0.0
        %1186 = vmatpush.msra.mxu0 0.0
        %1187 = vmatpush.msra.mxu0 0.0
        %1188 = vmatpush.msra.mxu0 0.0
        %1189 = vmatpush.msra.mxu0 0.0
        %1190 = vmatpush.msra.mxu0 0.0
        %1191 = vmatpush.msra.mxu0 0.0
        %1192 = vmatpush.msra.mxu0 0.0
        %1193 = vmatpush.msra.mxu0 0.0
        %1194 = vmatpush.msra.mxu0 0.0
        %1195 = vmatpush.msra.mxu0 0.0
        %1196 = vmatpush.msra.mxu0 0.0
        %1197 = vmatpush.msra.mxu0 0.0
        %1198 = vmatpush.msra.mxu0 0.0
        %1199 = vmatpush.msra.mxu0 %v1129
        %1200 = vmatmul.f32.gmra.mxu0 %v1182
        %v1201 = vpop.f32.mrf.mxu0
        %v1202 = vadd.f32 0.0, %v1201
        %1203 = vdwg.mxu0
        %s1204 = scalar_lea.vmem %s5, 32
        %v1205 = vld [vmem:[%s1204] sm:$0xff]
        %v1206 = vld [vmem:[%s1204 + $0x8] sm:$0xff]
        %s1207 = scalar_lea.vmem %s3, 224
        %v1208 = vld [vmem:[%s1207] sm:$0xff]
        %v1209 = vld [vmem:[%s1207 + $0x8] sm:$0xff]
        %v1210 = vld [vmem:[%s1207 + $0x10] sm:$0xff]
        %v1211 = vld [vmem:[%s1207 + $0x18] sm:$0xff]
        %s1212 = scalar_lea.vmem %s4, 7
        %v1213 = vld [vmem:[%s1212] sm:$0x1]
        %v1215 = vperm.slane %v1213, 0
        %1217 = vmatpush.msra.mxu0 0.0
        %1218 = vmatpush.msra.mxu0 0.0
        %1219 = vmatpush.msra.mxu0 0.0
        %1220 = vmatpush.msra.mxu0 0.0
        %1221 = vmatpush.msra.mxu0 0.0
        %1222 = vmatpush.msra.mxu0 0.0
        %1223 = vmatpush.msra.mxu0 0.0
        %1224 = vmatpush.msra.mxu0 0.0
        %1225 = vmatpush.msra.mxu0 0.0
        %1226 = vmatpush.msra.mxu0 0.0
        %1227 = vmatpush.msra.mxu0 0.0
        %1228 = vmatpush.msra.mxu0 0.0
        %1229 = vmatpush.msra.mxu0 %v1211
        %1230 = vmatpush.msra.mxu0 %v1210
        %1231 = vmatpush.msra.mxu0 %v1209
        %1232 = vmatpush.msra.mxu0 %v1208
        %1233 = vmatmul.f32.gmra.mxu0 %v1049
        %v1234 = vpop.f32.mrf.mxu0
        %v1235 = vadd.f32 %v1215, %v1234
        %1236 = vdwg.mxu0
        %s1237 = scalar_lea.vmem %s3, 288
        %v1238 = vld [vmem:[%s1237] sm:$0xff]
        %v1239 = vld [vmem:[%s1237 + $0x8] sm:$0xff]
        %v1240 = vld [vmem:[%s1237 + $0x10] sm:$0xff]
        %v1241 = vld [vmem:[%s1237 + $0x18] sm:$0xff]
        %s1242 = scalar_lea.vmem %s4, 9
        %v1243 = vld [vmem:[%s1242] sm:$0x1]
        %v1245 = vperm.slane %v1243, 0
        %1247 = vmatpush.msra.mxu0 0.0
        %1248 = vmatpush.msra.mxu0 0.0
        %1249 = vmatpush.msra.mxu0 0.0
        %1250 = vmatpush.msra.mxu0 0.0
        %1251 = vmatpush.msra.mxu0 0.0
        %1252 = vmatpush.msra.mxu0 0.0
        %1253 = vmatpush.msra.mxu0 0.0
        %1254 = vmatpush.msra.mxu0 0.0
        %1255 = vmatpush.msra.mxu0 0.0
        %1256 = vmatpush.msra.mxu0 0.0
        %1257 = vmatpush.msra.mxu0 0.0
        %1258 = vmatpush.msra.mxu0 0.0
        %1259 = vmatpush.msra.mxu0 %v1241
        %1260 = vmatpush.msra.mxu0 %v1240
        %1261 = vmatpush.msra.mxu0 %v1239
        %1262 = vmatpush.msra.mxu0 %v1238
        %1263 = vmatmul.f32.gmra.mxu0 %v1049
        %v1264 = vpop.f32.mrf.mxu0
        %v1265 = vadd.f32 %v1245, %v1264
        %1266 = vdwg.mxu0
        %s1267 = scalar_lea.vmem %s3, 352
        %v1268 = vld [vmem:[%s1267] sm:$0xff]
        %v1269 = vld [vmem:[%s1267 + $0x8] sm:$0xff]
        %v1270 = vld [vmem:[%s1267 + $0x10] sm:$0xff]
        %v1271 = vld [vmem:[%s1267 + $0x18] sm:$0xff]
        %s1272 = scalar_lea.vmem %s4, 11
        %v1273 = vld [vmem:[%s1272] sm:$0x1]
        %v1275 = vperm.slane %v1273, 0
        %1277 = vmatpush.msra.mxu0 0.0
        %1278 = vmatpush.msra.mxu0 0.0
        %1279 = vmatpush.msra.mxu0 0.0
        %1280 = vmatpush.msra.mxu0 0.0
        %1281 = vmatpush.msra.mxu0 0.0
        %1282 = vmatpush.msra.mxu0 0.0
        %1283 = vmatpush.msra.mxu0 0.0
        %1284 = vmatpush.msra.mxu0 0.0
        %1285 = vmatpush.msra.mxu0 0.0
        %1286 = vmatpush.msra.mxu0 0.0
        %1287 = vmatpush.msra.mxu0 0.0
        %1288 = vmatpush.msra.mxu0 0.0
        %1289 = vmatpush.msra.mxu0 %v1271
        %1290 = vmatpush.msra.mxu0 %v1270
        %1291 = vmatpush.msra.mxu0 %v1269
        %1292 = vmatpush.msra.mxu0 %v1268
        %1293 = vmatmul.f32.gmra.mxu0 %v1049
        %v1294 = vpop.f32.mrf.mxu0
        %v1295 = vadd.f32 %v1275, %v1294
        %1296 = vdwg.mxu0
        %v1298 = vsel %vm618, %v1235, 0
        %v1301 = vsel %vm618, %v1265, 0
        %1303 = vmatpush.xpose.msra.mxu0 0.0
        %1304 = vmatpush.xpose.msra.mxu0 0.0
        %1305 = vmatpush.xpose.msra.mxu0 0.0
        %1306 = vmatpush.xpose.msra.mxu0 0.0
        %1307 = vmatpush.xpose.msra.mxu0 0.0
        %1308 = vmatpush.xpose.msra.mxu0 0.0
        %1309 = vmatpush.xpose.msra.mxu0 0.0
        %1310 = vmatpush.xpose.msra.mxu0 0.0
        %1311 = vmatpush.xpose.msra.mxu0 0.0
        %1312 = vmatpush.xpose.msra.mxu0 0.0
        %1313 = vmatpush.xpose.msra.mxu0 0.0
        %1314 = vmatpush.xpose.msra.mxu0 0.0
        %1315 = vmatpush.xpose.msra.mxu0 0.0
        %1316 = vmatpush.xpose.msra.mxu0 0.0
        %1317 = vmatpush.xpose.msra.mxu0 0.0
        %1318 = vmatpush.xpose.msra.mxu0 %v1301
        %1319 = vmatmul.f32.gmra.mxu0 %v1298
        %v1320 = vpop.f32.mrf.mxu0
        %v1321 = vadd.f32 0.0, %v1320
        %1322 = vdwg.mxu0
        %v1323 = vsel %vm645, %v1321, -inf
        %1324 = vmax.xlane.f32.xlu0 %v1323
        %v1325 = vpop.xlane.xlu0 %1324
        %v1326 = vsub.f32 %v1321, %v1325
        %v1327 = vmul.f32 %v1326, 1.442695
        %v1328 = vpow.pop %v1327
        %v1329 = vsel %vm645, %v1328, 0.0
        %1330 = vadd.xlane.f32.xlu0 %v1329
        %v1331 = vpop.xlane.xlu0 %1330
        %v1332 = vrcp.pop %v1331
        %v1333 = vmul.f32 %v1331, %v1332
        %v1334 = vsub.f32 1.0, %v1333
        %v1335 = vmul.f32 %v1332, %v1334
        %v1336 = vadd.f32 %v1332, %v1335
        %vm1337 = vweird.f32 %v1331
        %vm1338 = vweird.f32 %v1332
        %vm1339 = vmor %vm1337, %vm1338
        %v1340 = vsel %vm1339, %v1332, %v1336
        %v1341 = vand.u32 2147483647, %v1331
        %vm1342 = vcmp.eq.f32.partialorder %v1341, 8.507059e+37
        %v1343 = vand.u32 %v1331, 2147483648
        %v1344 = vor.u32 1.1754944e-38, %v1343
        %v1345 = vsel %vm1342, %v1344, %v1340
        %v1346 = vmul.f32 %v1328, %v1345
        %v1348 = vsel %vm645, %v1346, 0
        %1350 = vmatpush.msra.mxu0 0.0
        %1351 = vmatpush.msra.mxu0 0.0
        %1352 = vmatpush.msra.mxu0 0.0
        %1353 = vmatpush.msra.mxu0 0.0
        %1354 = vmatpush.msra.mxu0 0.0
        %1355 = vmatpush.msra.mxu0 0.0
        %1356 = vmatpush.msra.mxu0 0.0
        %1357 = vmatpush.msra.mxu0 0.0
        %1358 = vmatpush.msra.mxu0 0.0
        %1359 = vmatpush.msra.mxu0 0.0
        %1360 = vmatpush.msra.mxu0 0.0
        %1361 = vmatpush.msra.mxu0 0.0
        %1362 = vmatpush.msra.mxu0 0.0
        %1363 = vmatpush.msra.mxu0 0.0
        %1364 = vmatpush.msra.mxu0 0.0
        %1365 = vmatpush.msra.mxu0 %v1295
        %1366 = vmatmul.f32.gmra.mxu0 %v1348
        %v1367 = vpop.f32.mrf.mxu0
        %v1368 = vadd.f32 0.0, %v1367
        %1369 = vdwg.mxu0
        %s1370 = scalar_lea.vmem %s5, 48
        %v1371 = vld [vmem:[%s1370] sm:$0xff]
        %v1372 = vld [vmem:[%s1370 + $0x8] sm:$0xff]
        %v1374 = vsel %vm618, %v1368, 0
        %1376 = vmatpush.msra.mxu0 0.0
        %1377 = vmatpush.msra.mxu0 0.0
        %1378 = vmatpush.msra.mxu0 0.0
        %1379 = vmatpush.msra.mxu0 0.0
        %1380 = vmatpush.msra.mxu0 0.0
        %1381 = vmatpush.msra.mxu0 0.0
        %1382 = vmatpush.msra.mxu0 0.0
        %1383 = vmatpush.msra.mxu0 0.0
        %1384 = vmatpush.msra.mxu0 0.0
        %1385 = vmatpush.msra.mxu0 0.0
        %1386 = vmatpush.msra.mxu0 0.0
        %1387 = vmatpush.msra.mxu0 0.0
        %1388 = vmatpush.msra.mxu0 0.0
        %1389 = vmatpush.msra.mxu0 0.0
        %1390 = vmatpush.msra.mxu0 %v1372
        %1391 = vmatpush.msra.mxu0 %v1371
        %1392 = vmatmul.f32.gmra.mxu0 %v1374
        %v1393 = vpop.f32.mrf.mxu0
        %v1394 = vadd.f32 0.0, %v1393
        %1395 = vdwg.mxu0
        %v1397 = vsel %vm618, %v1202, 0
        %1399 = vmatpush.msra.mxu0 0.0
        %1400 = vmatpush.msra.mxu0 0.0
        %1401 = vmatpush.msra.mxu0 0.0
        %1402 = vmatpush.msra.mxu0 0.0
        %1403 = vmatpush.msra.mxu0 0.0
        %1404 = vmatpush.msra.mxu0 0.0
        %1405 = vmatpush.msra.mxu0 0.0
        %1406 = vmatpush.msra.mxu0 0.0
        %1407 = vmatpush.msra.mxu0 0.0
        %1408 = vmatpush.msra.mxu0 0.0
        %1409 = vmatpush.msra.mxu0 0.0
        %1410 = vmatpush.msra.mxu0 0.0
        %1411 = vmatpush.msra.mxu0 0.0
        %1412 = vmatpush.msra.mxu0 0.0
        %1413 = vmatpush.msra.mxu0 %v1206
        %1414 = vmatpush.msra.mxu0 %v1205
        %1415 = vmatmul.f32.gmra.mxu0 %v1397
        %v1416 = vpop.f32.mrf.mxu0
        %v1417 = vadd.f32 %v1394, %v1416
        %1418 = vdwg.mxu0
        %s1419 = scalar_lea.vmem %s6, 1
        %v1420 = vld [vmem:[%s1419] sm:$0x1]
        %v1422 = vperm.slane %v1420, 0
        %v1424 = vadd.f32 %v1417, %v1422
        %v1425 = vadd.f32 %v1035, %v1424
        %v1426 = vsel %vm534, %v1425, 0.0
        %1427 = vadd.xlane.f32.xlu0 %v1426
        %v1428 = vpop.xlane.xlu0 %1427
        %v1429 = vmul.f32 %v1428, %v922
        %v1430 = vsub.f32 %v1425, %v1429
        %v1431 = vmul.f32 %v1430, %v1430
        %v1432 = vsel %vm534, %v1431, 0.0
        %1433 = vadd.xlane.f32.xlu0 %v1432
        %v1434 = vpop.xlane.xlu0 %1433
        %v1435 = vmul.f32 %v1434, %v922
        %v1436 = vadd.f32 %v1435, 1e-05
        %v1437 = vrsqrt.pop %v1436
        %v1438 = vmul.f32 %v1437, %v1436
        %v1439 = vmul.f32 %v1438, %v1437
        %v1440 = vmul.f32 0.5, %v1439
        %v1441 = vsub.f32 1.5, %v1440
        %v1442 = vmul.f32 %v1437, %v1441
        %vm1443 = vweird.f32 %v1436
        %vm1444 = vweird.f32 %v1437
        %vm1445 = vmor %vm1443, %vm1444
        %v1446 = vsel %vm1445, %v1437, %v1442
        %v1447 = vmul.f32 %v1430, %v1446
        %v1448 = vperm.slane %v1037, 0
        %v1449 = vmul.f32 %v1447, %v1448
        %v1450 = vperm.slane %v1037, 1
        %v1451 = vadd.f32 %v1449, %v1450
        %s1452 = scalar_lea.vmem %s7, 32
        %v1453 = vld [vmem:[%s1452] sm:$0xff]
        %v1454 = vld [vmem:[%s1452 + $0x8] sm:$0xff]
        %v1455 = vld [vmem:[%s1452 + $0x10] sm:$0xff]
        %v1456 = vld [vmem:[%s1452 + $0x18] sm:$0xff]
        %s1457 = scalar_lea.vmem %s8, 1
        %v1458 = vld [vmem:[%s1457] sm:$0x1]
        %v1460 = vperm.slane %v1458, 0
        %v1463 = vsel %vm534, %v1451, 0
        %1465 = vmatpush.msra.mxu0 0.0
        %1466 = vmatpush.msra.mxu0 0.0
        %1467 = vmatpush.msra.mxu0 0.0
        %1468 = vmatpush.msra.mxu0 0.0
        %1469 = vmatpush.msra.mxu0 0.0
        %1470 = vmatpush.msra.mxu0 0.0
        %1471 = vmatpush.msra.mxu0 0.0
        %1472 = vmatpush.msra.mxu0 0.0
        %1473 = vmatpush.msra.mxu0 0.0
        %1474 = vmatpush.msra.mxu0 0.0
        %1475 = vmatpush.msra.mxu0 0.0
        %1476 = vmatpush.msra.mxu0 0.0
        %1477 = vmatpush.msra.mxu0 %v1456
        %1478 = vmatpush.msra.mxu0 %v1455
        %1479 = vmatpush.msra.mxu0 %v1454
        %1480 = vmatpush.msra.mxu0 %v1453
        %1481 = vmatmul.f32.gmra.mxu0 %v1463
        %v1482 = vpop.f32.mrf.mxu0
        %v1483 = vadd.f32 %v1460, %v1482
        %1484 = vdwg.mxu0
        %v1485 = vmax.f32 %v1483, 0.0
        %s1486 = scalar_lea.vmem %s9, 32
        %v1487 = vld [vmem:[%s1486] sm:$0xff]
        %v1488 = vld [vmem:[%s1486 + $0x8] sm:$0xff]
        %v1489 = vld [vmem:[%s1486 + $0x10] sm:$0xff]
        %v1490 = vld [vmem:[%s1486 + $0x18] sm:$0xff]
        %s1491 = scalar_lea.vmem %s10, 1
        %v1492 = vld [vmem:[%s1491] sm:$0x1]
        %v1494 = vperm.slane %v1492, 0
        %v1497 = vsel %vm534, %v1485, 0
        %1499 = vmatpush.msra.mxu0 0.0
        %1500 = vmatpush.msra.mxu0 0.0
        %1501 = vmatpush.msra.mxu0 0.0
        %1502 = vmatpush.msra.mxu0 0.0
        %1503 = vmatpush.msra.mxu0 0.0
        %1504 = vmatpush.msra.mxu0 0.0
        %1505 = vmatpush.msra.mxu0 0.0
        %1506 = vmatpush.msra.mxu0 0.0
        %1507 = vmatpush.msra.mxu0 0.0
        %1508 = vmatpush.msra.mxu0 0.0
        %1509 = vmatpush.msra.mxu0 0.0
        %1510 = vmatpush.msra.mxu0 0.0
        %1511 = vmatpush.msra.mxu0 %v1490
        %1512 = vmatpush.msra.mxu0 %v1489
        %1513 = vmatpush.msra.mxu0 %v1488
        %1514 = vmatpush.msra.mxu0 %v1487
        %1515 = vmatmul.f32.gmra.mxu0 %v1497
        %v1516 = vpop.f32.mrf.mxu0
        %v1517 = vadd.f32 %v1494, %v1516
        %1518 = vdwg.mxu0
        %v1519 = vadd.f32 %v1451, %v1517
        %v1520 = vsel %vm534, %v1519, 0.0
        %1521 = vadd.xlane.f32.xlu0 %v1520
        %v1522 = vpop.xlane.xlu0 %1521
        %v1523 = vmul.f32 %v1522, %v922
        %v1524 = vsub.f32 %v1519, %v1523
        %v1525 = vmul.f32 %v1524, %v1524
        %v1526 = vsel %vm534, %v1525, 0.0
        %1527 = vadd.xlane.f32.xlu0 %v1526
        %v1528 = vpop.xlane.xlu0 %1527
        %v1529 = vmul.f32 %v1528, %v922
        %v1530 = vadd.f32 %v1529, 1e-05
        %v1531 = vrsqrt.pop %v1530
        %v1532 = vmul.f32 %v1531, %v1530
        %v1533 = vmul.f32 %v1532, %v1531
        %v1534 = vmul.f32 0.5, %v1533
        %v1535 = vsub.f32 1.5, %v1534
        %v1536 = vmul.f32 %v1531, %v1535
        %vm1537 = vweird.f32 %v1530
        %vm1538 = vweird.f32 %v1531
        %vm1539 = vmor %vm1537, %vm1538
        %v1540 = vsel %vm1539, %v1531, %v1536
        %v1541 = vmul.f32 %v1524, %v1540
        %v1542 = vperm.slane %v1037, 2
        %v1543 = vmul.f32 %v1541, %v1542
        %v1544 = vperm.slane %v1037, 3
        %v1545 = vadd.f32 %v1543, %v1544
        %s1546 = scalar_lea.vmem %s11, 8
        %v1547 = vld [vmem:[%s1546] sm:$0xf]
        %s1548 = scalar_lea.vmem %s3, 384
        %v1549 = vld [vmem:[%s1548] sm:$0xff]
        %v1550 = vld [vmem:[%s1548 + $0x8] sm:$0xff]
        %v1551 = vld [vmem:[%s1548 + $0x10] sm:$0xff]
        %v1552 = vld [vmem:[%s1548 + $0x18] sm:$0xff]
        %s1553 = scalar_lea.vmem %s4, 12
        %v1554 = vld [vmem:[%s1553] sm:$0x1]
        %v1556 = vperm.slane %v1554, 0
        %v1559 = vsel %vm534, %v1545, 0
        %1561 = vmatpush.msra.mxu0 0.0
        %1562 = vmatpush.msra.mxu0 0.0
        %1563 = vmatpush.msra.mxu0 0.0
        %1564 = vmatpush.msra.mxu0 0.0
        %1565 = vmatpush.msra.mxu0 0.0
        %1566 = vmatpush.msra.mxu0 0.0
        %1567 = vmatpush.msra.mxu0 0.0
        %1568 = vmatpush.msra.mxu0 0.0
        %1569 = vmatpush.msra.mxu0 0.0
        %1570 = vmatpush.msra.mxu0 0.0
        %1571 = vmatpush.msra.mxu0 0.0
        %1572 = vmatpush.msra.mxu0 0.0
        %1573 = vmatpush.msra.mxu0 %v1552
        %1574 = vmatpush.msra.mxu0 %v1551
        %1575 = vmatpush.msra.mxu0 %v1550
        %1576 = vmatpush.msra.mxu0 %v1549
        %1577 = vmatmul.f32.gmra.mxu0 %v1559
        %v1578 = vpop.f32.mrf.mxu0
        %v1579 = vadd.f32 %v1556, %v1578
        %1580 = vdwg.mxu0
        %s1581 = scalar_lea.vmem %s3, 448
        %v1582 = vld [vmem:[%s1581] sm:$0xff]
        %v1583 = vld [vmem:[%s1581 + $0x8] sm:$0xff]
        %v1584 = vld [vmem:[%s1581 + $0x10] sm:$0xff]
        %v1585 = vld [vmem:[%s1581 + $0x18] sm:$0xff]
        %s1586 = scalar_lea.vmem %s4, 14
        %v1587 = vld [vmem:[%s1586] sm:$0x1]
        %v1589 = vperm.slane %v1587, 0
        %1591 = vmatpush.msra.mxu0 0.0
        %1592 = vmatpush.msra.mxu0 0.0
        %1593 = vmatpush.msra.mxu0 0.0
        %1594 = vmatpush.msra.mxu0 0.0
        %1595 = vmatpush.msra.mxu0 0.0
        %1596 = vmatpush.msra.mxu0 0.0
        %1597 = vmatpush.msra.mxu0 0.0
        %1598 = vmatpush.msra.mxu0 0.0
        %1599 = vmatpush.msra.mxu0 0.0
        %1600 = vmatpush.msra.mxu0 0.0
        %1601 = vmatpush.msra.mxu0 0.0
        %1602 = vmatpush.msra.mxu0 0.0
        %1603 = vmatpush.msra.mxu0 %v1585
        %1604 = vmatpush.msra.mxu0 %v1584
        %1605 = vmatpush.msra.mxu0 %v1583
        %1606 = vmatpush.msra.mxu0 %v1582
        %1607 = vmatmul.f32.gmra.mxu0 %v1559
        %v1608 = vpop.f32.mrf.mxu0
        %v1609 = vadd.f32 %v1589, %v1608
        %1610 = vdwg.mxu0
        %s1611 = scalar_lea.vmem %s3, 512
        %v1612 = vld [vmem:[%s1611] sm:$0xff]
        %v1613 = vld [vmem:[%s1611 + $0x8] sm:$0xff]
        %v1614 = vld [vmem:[%s1611 + $0x10] sm:$0xff]
        %v1615 = vld [vmem:[%s1611 + $0x18] sm:$0xff]
        %s1616 = scalar_lea.vmem %s4, 16
        %v1617 = vld [vmem:[%s1616] sm:$0x1]
        %v1619 = vperm.slane %v1617, 0
        %1621 = vmatpush.msra.mxu0 0.0
        %1622 = vmatpush.msra.mxu0 0.0
        %1623 = vmatpush.msra.mxu0 0.0
        %1624 = vmatpush.msra.mxu0 0.0
        %1625 = vmatpush.msra.mxu0 0.0
        %1626 = vmatpush.msra.mxu0 0.0
        %1627 = vmatpush.msra.mxu0 0.0
        %1628 = vmatpush.msra.mxu0 0.0
        %1629 = vmatpush.msra.mxu0 0.0
        %1630 = vmatpush.msra.mxu0 0.0
        %1631 = vmatpush.msra.mxu0 0.0
        %1632 = vmatpush.msra.mxu0 0.0
        %1633 = vmatpush.msra.mxu0 %v1615
        %1634 = vmatpush.msra.mxu0 %v1614
        %1635 = vmatpush.msra.mxu0 %v1613
        %1636 = vmatpush.msra.mxu0 %v1612
        %1637 = vmatmul.f32.gmra.mxu0 %v1559
        %v1638 = vpop.f32.mrf.mxu0
        %v1639 = vadd.f32 %v1619, %v1638
        %1640 = vdwg.mxu0
        %v1642 = vsel %vm618, %v1579, 0
        %v1645 = vsel %vm618, %v1609, 0
        %1647 = vmatpush.xpose.msra.mxu0 0.0
        %1648 = vmatpush.xpose.msra.mxu0 0.0
        %1649 = vmatpush.xpose.msra.mxu0 0.0
        %1650 = vmatpush.xpose.msra.mxu0 0.0
        %1651 = vmatpush.xpose.msra.mxu0 0.0
        %1652 = vmatpush.xpose.msra.mxu0 0.0
        %1653 = vmatpush.xpose.msra.mxu0 0.0
        %1654 = vmatpush.xpose.msra.mxu0 0.0
        %1655 = vmatpush.xpose.msra.mxu0 0.0
        %1656 = vmatpush.xpose.msra.mxu0 0.0
        %1657 = vmatpush.xpose.msra.mxu0 0.0
        %1658 = vmatpush.xpose.msra.mxu0 0.0
        %1659 = vmatpush.xpose.msra.mxu0 0.0
        %1660 = vmatpush.xpose.msra.mxu0 0.0
        %1661 = vmatpush.xpose.msra.mxu0 0.0
        %1662 = vmatpush.xpose.msra.mxu0 %v1645
        %1663 = vmatmul.f32.gmra.mxu0 %v1642
        %v1664 = vpop.f32.mrf.mxu0
        %v1665 = vadd.f32 0.0, %v1664
        %1666 = vdwg.mxu0
        %v1667 = vsel %vm645, %v1665, -inf
        %1668 = vmax.xlane.f32.xlu0 %v1667
        %v1669 = vpop.xlane.xlu0 %1668
        %v1670 = vsub.f32 %v1665, %v1669
        %v1671 = vmul.f32 %v1670, 1.442695
        %v1672 = vpow.pop %v1671
        %v1673 = vsel %vm645, %v1672, 0.0
        %1674 = vadd.xlane.f32.xlu0 %v1673
        %v1675 = vpop.xlane.xlu0 %1674
        %v1676 = vrcp.pop %v1675
        %v1677 = vmul.f32 %v1675, %v1676
        %v1678 = vsub.f32 1.0, %v1677
        %v1679 = vmul.f32 %v1676, %v1678
        %v1680 = vadd.f32 %v1676, %v1679
        %vm1681 = vweird.f32 %v1675
        %vm1682 = vweird.f32 %v1676
        %vm1683 = vmor %vm1681, %vm1682
        %v1684 = vsel %vm1683, %v1676, %v1680
        %v1685 = vand.u32 2147483647, %v1675
        %vm1686 = vcmp.eq.f32.partialorder %v1685, 8.507059e+37
        %v1687 = vand.u32 %v1675, 2147483648
        %v1688 = vor.u32 1.1754944e-38, %v1687
        %v1689 = vsel %vm1686, %v1688, %v1684
        %v1690 = vmul.f32 %v1672, %v1689
        %v1692 = vsel %vm645, %v1690, 0
        %1694 = vmatpush.msra.mxu0 0.0
        %1695 = vmatpush.msra.mxu0 0.0
        %1696 = vmatpush.msra.mxu0 0.0
        %1697 = vmatpush.msra.mxu0 0.0
        %1698 = vmatpush.msra.mxu0 0.0
        %1699 = vmatpush.msra.mxu0 0.0
        %1700 = vmatpush.msra.mxu0 0.0
        %1701 = vmatpush.msra.mxu0 0.0
        %1702 = vmatpush.msra.mxu0 0.0
        %1703 = vmatpush.msra.mxu0 0.0
        %1704 = vmatpush.msra.mxu0 0.0
        %1705 = vmatpush.msra.mxu0 0.0
        %1706 = vmatpush.msra.mxu0 0.0
        %1707 = vmatpush.msra.mxu0 0.0
        %1708 = vmatpush.msra.mxu0 0.0
        %1709 = vmatpush.msra.mxu0 %v1639
        %1710 = vmatmul.f32.gmra.mxu0 %v1692
        %v1711 = vpop.f32.mrf.mxu0
        %v1712 = vadd.f32 0.0, %v1711
        %1713 = vdwg.mxu0
        %s1714 = scalar_lea.vmem %s5, 64
        %v1715 = vld [vmem:[%s1714] sm:$0xff]
        %v1716 = vld [vmem:[%s1714 + $0x8] sm:$0xff]
        %s1717 = scalar_lea.vmem %s3, 416
        %v1718 = vld [vmem:[%s1717] sm:$0xff]
        %v1719 = vld [vmem:[%s1717 + $0x8] sm:$0xff]
        %v1720 = vld [vmem:[%s1717 + $0x10] sm:$0xff]
        %v1721 = vld [vmem:[%s1717 + $0x18] sm:$0xff]
        %s1722 = scalar_lea.vmem %s4, 13
        %v1723 = vld [vmem:[%s1722] sm:$0x1]
        %v1725 = vperm.slane %v1723, 0
        %1727 = vmatpush.msra.mxu0 0.0
        %1728 = vmatpush.msra.mxu0 0.0
        %1729 = vmatpush.msra.mxu0 0.0
        %1730 = vmatpush.msra.mxu0 0.0
        %1731 = vmatpush.msra.mxu0 0.0
        %1732 = vmatpush.msra.mxu0 0.0
        %1733 = vmatpush.msra.mxu0 0.0
        %1734 = vmatpush.msra.mxu0 0.0
        %1735 = vmatpush.msra.mxu0 0.0
        %1736 = vmatpush.msra.mxu0 0.0
        %1737 = vmatpush.msra.mxu0 0.0
        %1738 = vmatpush.msra.mxu0 0.0
        %1739 = vmatpush.msra.mxu0 %v1721
        %1740 = vmatpush.msra.mxu0 %v1720
        %1741 = vmatpush.msra.mxu0 %v1719
        %1742 = vmatpush.msra.mxu0 %v1718
        %1743 = vmatmul.f32.gmra.mxu0 %v1559
        %v1744 = vpop.f32.mrf.mxu0
        %v1745 = vadd.f32 %v1725, %v1744
        %1746 = vdwg.mxu0
        %s1747 = scalar_lea.vmem %s3, 480
        %v1748 = vld [vmem:[%s1747] sm:$0xff]
        %v1749 = vld [vmem:[%s1747 + $0x8] sm:$0xff]
        %v1750 = vld [vmem:[%s1747 + $0x10] sm:$0xff]
        %v1751 = vld [vmem:[%s1747 + $0x18] sm:$0xff]
        %s1752 = scalar_lea.vmem %s4, 15
        %v1753 = vld [vmem:[%s1752] sm:$0x1]
        %v1755 = vperm.slane %v1753, 0
        %1757 = vmatpush.msra.mxu0 0.0
        %1758 = vmatpush.msra.mxu0 0.0
        %1759 = vmatpush.msra.mxu0 0.0
        %1760 = vmatpush.msra.mxu0 0.0
        %1761 = vmatpush.msra.mxu0 0.0
        %1762 = vmatpush.msra.mxu0 0.0
        %1763 = vmatpush.msra.mxu0 0.0
        %1764 = vmatpush.msra.mxu0 0.0
        %1765 = vmatpush.msra.mxu0 0.0
        %1766 = vmatpush.msra.mxu0 0.0
        %1767 = vmatpush.msra.mxu0 0.0
        %1768 = vmatpush.msra.mxu0 0.0
        %1769 = vmatpush.msra.mxu0 %v1751
        %1770 = vmatpush.msra.mxu0 %v1750
        %1771 = vmatpush.msra.mxu0 %v1749
        %1772 = vmatpush.msra.mxu0 %v1748
        %1773 = vmatmul.f32.gmra.mxu0 %v1559
        %v1774 = vpop.f32.mrf.mxu0
        %v1775 = vadd.f32 %v1755, %v1774
        %1776 = vdwg.mxu0
        %s1777 = scalar_lea.vmem %s3, 544
        %v1778 = vld [vmem:[%s1777] sm:$0xff]
        %v1779 = vld [vmem:[%s1777 + $0x8] sm:$0xff]
        %v1780 = vld [vmem:[%s1777 + $0x10] sm:$0xff]
        %v1781 = vld [vmem:[%s1777 + $0x18] sm:$0xff]
        %s1782 = scalar_lea.vmem %s4, 17
        %v1783 = vld [vmem:[%s1782] sm:$0x1]
        %v1785 = vperm.slane %v1783, 0
        %1787 = vmatpush.msra.mxu0 0.0
        %1788 = vmatpush.msra.mxu0 0.0
        %1789 = vmatpush.msra.mxu0 0.0
        %1790 = vmatpush.msra.mxu0 0.0
        %1791 = vmatpush.msra.mxu0 0.0
        %1792 = vmatpush.msra.mxu0 0.0
        %1793 = vmatpush.msra.mxu0 0.0
        %1794 = vmatpush.msra.mxu0 0.0
        %1795 = vmatpush.msra.mxu0 0.0
        %1796 = vmatpush.msra.mxu0 0.0
        %1797 = vmatpush.msra.mxu0 0.0
        %1798 = vmatpush.msra.mxu0 0.0
        %1799 = vmatpush.msra.mxu0 %v1781
        %1800 = vmatpush.msra.mxu0 %v1780
        %1801 = vmatpush.msra.mxu0 %v1779
        %1802 = vmatpush.msra.mxu0 %v1778
        %1803 = vmatmul.f32.gmra.mxu0 %v1559
        %v1804 = vpop.f32.mrf.mxu0
        %v1805 = vadd.f32 %v1785, %v1804
        %1806 = vdwg.mxu0
        %v1808 = vsel %vm618, %v1745, 0
        %v1811 = vsel %vm618, %v1775, 0
        %1813 = vmatpush.xpose.msra.mxu0 0.0
        %1814 = vmatpush.xpose.msra.mxu0 0.0
        %1815 = vmatpush.xpose.msra.mxu0 0.0
        %1816 = vmatpush.xpose.msra.mxu0 0.0
        %1817 = vmatpush.xpose.msra.mxu0 0.0
        %1818 = vmatpush.xpose.msra.mxu0 0.0
        %1819 = vmatpush.xpose.msra.mxu0 0.0
        %1820 = vmatpush.xpose.msra.mxu0 0.0
        %1821 = vmatpush.xpose.msra.mxu0 0.0
        %1822 = vmatpush.xpose.msra.mxu0 0.0
        %1823 = vmatpush.xpose.msra.mxu0 0.0
        %1824 = vmatpush.xpose.msra.mxu0 0.0
        %1825 = vmatpush.xpose.msra.mxu0 0.0
        %1826 = vmatpush.xpose.msra.mxu0 0.0
        %1827 = vmatpush.xpose.msra.mxu0 0.0
        %1828 = vmatpush.xpose.msra.mxu0 %v1811
        %1829 = vmatmul.f32.gmra.mxu0 %v1808
        %v1830 = vpop.f32.mrf.mxu0
        %v1831 = vadd.f32 0.0, %v1830
        %1832 = vdwg.mxu0
        %v1833 = vsel %vm645, %v1831, -inf
        %1834 = vmax.xlane.f32.xlu0 %v1833
        %v1835 = vpop.xlane.xlu0 %1834
        %v1836 = vsub.f32 %v1831, %v1835
        %v1837 = vmul.f32 %v1836, 1.442695
        %v1838 = vpow.pop %v1837
        %v1839 = vsel %vm645, %v1838, 0.0
        %1840 = vadd.xlane.f32.xlu0 %v1839
        %v1841 = vpop.xlane.xlu0 %1840
        %v1842 = vrcp.pop %v1841
        %v1843 = vmul.f32 %v1841, %v1842
        %v1844 = vsub.f32 1.0, %v1843
        %v1845 = vmul.f32 %v1842, %v1844
        %v1846 = vadd.f32 %v1842, %v1845
        %vm1847 = vweird.f32 %v1841
        %vm1848 = vweird.f32 %v1842
        %vm1849 = vmor %vm1847, %vm1848
        %v1850 = vsel %vm1849, %v1842, %v1846
        %v1851 = vand.u32 2147483647, %v1841
        %vm1852 = vcmp.eq.f32.partialorder %v1851, 8.507059e+37
        %v1853 = vand.u32 %v1841, 2147483648
        %v1854 = vor.u32 1.1754944e-38, %v1853
        %v1855 = vsel %vm1852, %v1854, %v1850
        %v1856 = vmul.f32 %v1838, %v1855
        %v1858 = vsel %vm645, %v1856, 0
        %1860 = vmatpush.msra.mxu0 0.0
        %1861 = vmatpush.msra.mxu0 0.0
        %1862 = vmatpush.msra.mxu0 0.0
        %1863 = vmatpush.msra.mxu0 0.0
        %1864 = vmatpush.msra.mxu0 0.0
        %1865 = vmatpush.msra.mxu0 0.0
        %1866 = vmatpush.msra.mxu0 0.0
        %1867 = vmatpush.msra.mxu0 0.0
        %1868 = vmatpush.msra.mxu0 0.0
        %1869 = vmatpush.msra.mxu0 0.0
        %1870 = vmatpush.msra.mxu0 0.0
        %1871 = vmatpush.msra.mxu0 0.0
        %1872 = vmatpush.msra.mxu0 0.0
        %1873 = vmatpush.msra.mxu0 0.0
        %1874 = vmatpush.msra.mxu0 0.0
        %1875 = vmatpush.msra.mxu0 %v1805
        %1876 = vmatmul.f32.gmra.mxu0 %v1858
        %v1877 = vpop.f32.mrf.mxu0
        %v1878 = vadd.f32 0.0, %v1877
        %1879 = vdwg.mxu0
        %s1880 = scalar_lea.vmem %s5, 80
        %v1881 = vld [vmem:[%s1880] sm:$0xff]
        %v1882 = vld [vmem:[%s1880 + $0x8] sm:$0xff]
        %v1884 = vsel %vm618, %v1878, 0
        %1886 = vmatpush.msra.mxu0 0.0
        %1887 = vmatpush.msra.mxu0 0.0
        %1888 = vmatpush.msra.mxu0 0.0
        %1889 = vmatpush.msra.mxu0 0.0
        %1890 = vmatpush.msra.mxu0 0.0
        %1891 = vmatpush.msra.mxu0 0.0
        %1892 = vmatpush.msra.mxu0 0.0
        %1893 = vmatpush.msra.mxu0 0.0
        %1894 = vmatpush.msra.mxu0 0.0
        %1895 = vmatpush.msra.mxu0 0.0
        %1896 = vmatpush.msra.mxu0 0.0
        %1897 = vmatpush.msra.mxu0 0.0
        %1898 = vmatpush.msra.mxu0 0.0
        %1899 = vmatpush.msra.mxu0 0.0
        %1900 = vmatpush.msra.mxu0 %v1882
        %1901 = vmatpush.msra.mxu0 %v1881
        %1902 = vmatmul.f32.gmra.mxu0 %v1884
        %v1903 = vpop.f32.mrf.mxu0
        %v1904 = vadd.f32 0.0, %v1903
        %1905 = vdwg.mxu0
        %v1907 = vsel %vm618, %v1712, 0
        %1909 = vmatpush.msra.mxu0 0.0
        %1910 = vmatpush.msra.mxu0 0.0
        %1911 = vmatpush.msra.mxu0 0.0
        %1912 = vmatpush.msra.mxu0 0.0
        %1913 = vmatpush.msra.mxu0 0.0
        %1914 = vmatpush.msra.mxu0 0.0
        %1915 = vmatpush.msra.mxu0 0.0
        %1916 = vmatpush.msra.mxu0 0.0
        %1917 = vmatpush.msra.mxu0 0.0
        %1918 = vmatpush.msra.mxu0 0.0
        %1919 = vmatpush.msra.mxu0 0.0
        %1920 = vmatpush.msra.mxu0 0.0
        %1921 = vmatpush.msra.mxu0 0.0
        %1922 = vmatpush.msra.mxu0 0.0
        %1923 = vmatpush.msra.mxu0 %v1716
        %1924 = vmatpush.msra.mxu0 %v1715
        %1925 = vmatmul.f32.gmra.mxu0 %v1907
        %v1926 = vpop.f32.mrf.mxu0
        %v1927 = vadd.f32 %v1904, %v1926
        %1928 = vdwg.mxu0
        %s1929 = scalar_lea.vmem %s6, 2
        %v1930 = vld [vmem:[%s1929] sm:$0x1]
        %v1932 = vperm.slane %v1930, 0
        %v1934 = vadd.f32 %v1927, %v1932
        %v1935 = vadd.f32 %v1545, %v1934
        %v1936 = vsel %vm534, %v1935, 0.0
        %1937 = vadd.xlane.f32.xlu0 %v1936
        %v1938 = vpop.xlane.xlu0 %1937
        %v1939 = vmul.f32 %v1938, %v922
        %v1940 = vsub.f32 %v1935, %v1939
        %v1941 = vmul.f32 %v1940, %v1940
        %v1942 = vsel %vm534, %v1941, 0.0
        %1943 = vadd.xlane.f32.xlu0 %v1942
        %v1944 = vpop.xlane.xlu0 %1943
        %v1945 = vmul.f32 %v1944, %v922
        %v1946 = vadd.f32 %v1945, 1e-05
        %v1947 = vrsqrt.pop %v1946
        %v1948 = vmul.f32 %v1947, %v1946
        %v1949 = vmul.f32 %v1948, %v1947
        %v1950 = vmul.f32 0.5, %v1949
        %v1951 = vsub.f32 1.5, %v1950
        %v1952 = vmul.f32 %v1947, %v1951
        %vm1953 = vweird.f32 %v1946
        %vm1954 = vweird.f32 %v1947
        %vm1955 = vmor %vm1953, %vm1954
        %v1956 = vsel %vm1955, %v1947, %v1952
        %v1957 = vmul.f32 %v1940, %v1956
        %v1958 = vperm.slane %v1547, 0
        %v1959 = vmul.f32 %v1957, %v1958
        %v1960 = vperm.slane %v1547, 1
        %v1961 = vadd.f32 %v1959, %v1960
        %s1962 = scalar_lea.vmem %s7, 64
        %v1963 = vld [vmem:[%s1962] sm:$0xff]
        %v1964 = vld [vmem:[%s1962 + $0x8] sm:$0xff]
        %v1965 = vld [vmem:[%s1962 + $0x10] sm:$0xff]
        %v1966 = vld [vmem:[%s1962 + $0x18] sm:$0xff]
        %s1967 = scalar_lea.vmem %s8, 2
        %v1968 = vld [vmem:[%s1967] sm:$0x1]
        %v1970 = vperm.slane %v1968, 0
        %v1973 = vsel %vm534, %v1961, 0
        %1975 = vmatpush.msra.mxu0 0.0
        %1976 = vmatpush.msra.mxu0 0.0
        %1977 = vmatpush.msra.mxu0 0.0
        %1978 = vmatpush.msra.mxu0 0.0
        %1979 = vmatpush.msra.mxu0 0.0
        %1980 = vmatpush.msra.mxu0 0.0
        %1981 = vmatpush.msra.mxu0 0.0
        %1982 = vmatpush.msra.mxu0 0.0
        %1983 = vmatpush.msra.mxu0 0.0
        %1984 = vmatpush.msra.mxu0 0.0
        %1985 = vmatpush.msra.mxu0 0.0
        %1986 = vmatpush.msra.mxu0 0.0
        %1987 = vmatpush.msra.mxu0 %v1966
        %1988 = vmatpush.msra.mxu0 %v1965
        %1989 = vmatpush.msra.mxu0 %v1964
        %1990 = vmatpush.msra.mxu0 %v1963
        %1991 = vmatmul.f32.gmra.mxu0 %v1973
        %v1992 = vpop.f32.mrf.mxu0
        %v1993 = vadd.f32 %v1970, %v1992
        %1994 = vdwg.mxu0
        %v1995 = vmax.f32 %v1993, 0.0
        %s1996 = scalar_lea.vmem %s9, 64
        %v1997 = vld [vmem:[%s1996] sm:$0xff]
        %v1998 = vld [vmem:[%s1996 + $0x8] sm:$0xff]
        %v1999 = vld [vmem:[%s1996 + $0x10] sm:$0xff]
        %v2000 = vld [vmem:[%s1996 + $0x18] sm:$0xff]
        %s2001 = scalar_lea.vmem %s10, 2
        %v2002 = vld [vmem:[%s2001] sm:$0x1]
        %v2004 = vperm.slane %v2002, 0
        %v2007 = vsel %vm534, %v1995, 0
        %2009 = vmatpush.msra.mxu0 0.0
        %2010 = vmatpush.msra.mxu0 0.0
        %2011 = vmatpush.msra.mxu0 0.0
        %2012 = vmatpush.msra.mxu0 0.0
        %2013 = vmatpush.msra.mxu0 0.0
        %2014 = vmatpush.msra.mxu0 0.0
        %2015 = vmatpush.msra.mxu0 0.0
        %2016 = vmatpush.msra.mxu0 0.0
        %2017 = vmatpush.msra.mxu0 0.0
        %2018 = vmatpush.msra.mxu0 0.0
        %2019 = vmatpush.msra.mxu0 0.0
        %2020 = vmatpush.msra.mxu0 0.0
        %2021 = vmatpush.msra.mxu0 %v2000
        %2022 = vmatpush.msra.mxu0 %v1999
        %2023 = vmatpush.msra.mxu0 %v1998
        %2024 = vmatpush.msra.mxu0 %v1997
        %2025 = vmatmul.f32.gmra.mxu0 %v2007
        %v2026 = vpop.f32.mrf.mxu0
        %v2027 = vadd.f32 %v2004, %v2026
        %2028 = vdwg.mxu0
        %v2029 = vadd.f32 %v1961, %v2027
        %v2030 = vsel %vm534, %v2029, 0.0
        %2031 = vadd.xlane.f32.xlu0 %v2030
        %v2032 = vpop.xlane.xlu0 %2031
        %v2033 = vmul.f32 %v2032, %v922
        %v2034 = vsub.f32 %v2029, %v2033
        %v2035 = vmul.f32 %v2034, %v2034
        %v2036 = vsel %vm534, %v2035, 0.0
        %2037 = vadd.xlane.f32.xlu0 %v2036
        %v2038 = vpop.xlane.xlu0 %2037
        %v2039 = vmul.f32 %v2038, %v922
        %v2040 = vadd.f32 %v2039, 1e-05
        %v2041 = vrsqrt.pop %v2040
        %v2042 = vmul.f32 %v2041, %v2040
        %v2043 = vmul.f32 %v2042, %v2041
        %v2044 = vmul.f32 0.5, %v2043
        %v2045 = vsub.f32 1.5, %v2044
        %v2046 = vmul.f32 %v2041, %v2045
        %vm2047 = vweird.f32 %v2040
        %vm2048 = vweird.f32 %v2041
        %vm2049 = vmor %vm2047, %vm2048
        %v2050 = vsel %vm2049, %v2041, %v2046
        %v2051 = vmul.f32 %v2034, %v2050
        %v2052 = vperm.slane %v1547, 2
        %v2053 = vmul.f32 %v2051, %v2052
        %v2054 = vperm.slane %v1547, 3
        %v2055 = vadd.f32 %v2053, %v2054
        %v2056 = vld [vmem:[%s12] sm:$0x3]
        %v2057 = vsel %vm534, %v2055, 0.0
        %2058 = vadd.xlane.f32.xlu0 %v2057
        %v2059 = vpop.xlane.xlu0 %2058
        %v2060 = vmul.f32 %v2059, %v922
        %v2061 = vsub.f32 %v2055, %v2060
        %v2062 = vmul.f32 %v2061, %v2061
        %v2063 = vsel %vm534, %v2062, 0.0
        %2064 = vadd.xlane.f32.xlu0 %v2063
        %v2065 = vpop.xlane.xlu0 %2064
        %v2066 = vmul.f32 %v2065, %v922
        %v2067 = vadd.f32 %v2066, 1e-05
        %v2068 = vrsqrt.pop %v2067
        %v2069 = vmul.f32 %v2068, %v2067
        %v2070 = vmul.f32 %v2069, %v2068
        %v2071 = vmul.f32 0.5, %v2070
        %v2072 = vsub.f32 1.5, %v2071
        %v2073 = vmul.f32 %v2068, %v2072
        %vm2074 = vweird.f32 %v2067
        %vm2075 = vweird.f32 %v2068
        %vm2076 = vmor %vm2074, %vm2075
        %v2077 = vsel %vm2076, %v2068, %v2073
        %v2078 = vmul.f32 %v2061, %v2077
        %v2079 = vperm.slane %v2056, 0
        %v2080 = vmul.f32 %v2078, %v2079
        %v2081 = vperm.slane %v2056, 1
        %v2082 = vadd.f32 %v2080, %v2081
        %v2083 = vsel %vm534, %v2082, -inf
        %v2084 = vrot.slane %v2083, 4
        %v2085 = vmax.f32 %v2083, %v2084
        %v2086 = vrot.slane %v2085, 2
        %v2087 = vmax.f32 %v2085, %v2086
        %v2088 = vrot.slane %v2087, 1
        %v2089 = vmax.f32 %v2087, %v2088
        %v2090 = vmax.f32 %v2089, 0.0
        %v2091 = vld [vmem:[%s13] sm:$0xff]
        %v2092 = vld [vmem:[%s13 + $0x8] sm:$0xff]
        %v2093 = vld [vmem:[%s13 + $0x10] sm:$0xff]
        %v2094 = vld [vmem:[%s13 + $0x18] sm:$0xff]
        %v2095 = vld [vmem:[%s14] sm:$0x1]
        %v2097 = vsel %vm534, %v2090, 0
        %2099 = vmatpush.msra.mxu0 0.0
        %2100 = vmatpush.msra.mxu0 0.0
        %2101 = vmatpush.msra.mxu0 0.0
        %2102 = vmatpush.msra.mxu0 0.0
        %2103 = vmatpush.msra.mxu0 0.0
        %2104 = vmatpush.msra.mxu0 0.0
        %2105 = vmatpush.msra.mxu0 0.0
        %2106 = vmatpush.msra.mxu0 0.0
        %2107 = vmatpush.msra.mxu0 0.0
        %2108 = vmatpush.msra.mxu0 0.0
        %2109 = vmatpush.msra.mxu0 0.0
        %2110 = vmatpush.msra.mxu0 0.0
        %2111 = vmatpush.msra.mxu0 %v2094
        %2112 = vmatpush.msra.mxu0 %v2093
        %2113 = vmatpush.msra.mxu0 %v2092
        %2114 = vmatpush.msra.mxu0 %v2091
        %2115 = vmatmul.f32.gmra.mxu0 %v2097
        %v2116 = vpop.f32.mrf.mxu0
        %v2117 = vadd.f32 %v2095, %v2116
        %2118 = vdwg.mxu0
        %v2119 = vlaneseq
        %v2120 = vand.u32 %v2119, 127
        %vm2121 = vcmp.lt.s32.totalorder %v2120, 5
        %vm2122 = vcmp.ge.s32.totalorder %v2120, 5
        %vm2123 = vcmp.lt.s32.totalorder %v2120, 12
        %vm2124 = vmand %vm2122, %vm2123
        %vm2125 = vmor %vm2121, %vm2124
        %v2126 = vsel %vm2121, %v2117, -1e+30
        %vm2127 = vcmask 1040384
        %v2128 = vsel %vm2127, %v2126, -inf
        %2129 = vmax.xlane.f32.xlu0 %v2128
        %v2130 = vpop.xlane.xlu0 %2129
        %v2131 = vsel %vm2124, %v2117, -1e+30
        %v2132 = vsel %vm2127, %v2131, -inf
        %2133 = vmax.xlane.f32.xlu0 %v2132
        %v2134 = vpop.xlane.xlu0 %2133
        %v2135 = vsel %vm2121, %v2130, %v2134
        %v2136 = vsel %vm2125, %v2117, -1e+30
        %v2137 = vsub.f32 %v2136, %v2135
        %v2138 = vmul.f32 %v2137, 1.442695
        %v2139 = vpow.pop %v2138
        %v2140 = vsel %vm2121, %v2139, 0.0
        %v2141 = vsel %vm2127, %v2140, 0.0
        %2142 = vadd.xlane.f32.xlu0 %v2141
        %v2143 = vpop.xlane.xlu0 %2142
        %v2144 = vsel %vm2124, %v2139, 0.0
        %v2145 = vsel %vm2127, %v2144, 0.0
        %2146 = vadd.xlane.f32.xlu0 %v2145
        %v2147 = vpop.xlane.xlu0 %2146
        %v2148 = vsel %vm2121, %v2143, %v2147
        %v2149 = vlog2.pop %v2148
        %v2150 = vmul.f32 %v2149, 0.6931472
        %v2151 = vadd.f32 %v2135, %v2150
        %v2152 = vsub.f32 %v2117, %v2151
        %v2153 = vsel %vm2125, %v2152, 0.0
        %2154 = vst [vmem:[%s484] sm:$0x1] %v2153
        %s2155 = sand.u32 %s357, 1
        %s2156 = scalar_lea.sflag [#allocation3], %s2155
        %s2157 = sand.u32 %s357, 1
        %s2158 = scalar_lea.vmem [#allocation2], %s2157
        // Predicated region
        $region81: #{tpu_custom_call.1} parent=79 // pred_check
          %p2159 = pneg %p367
        $region82: #{tpu_custom_call.1} parent=79 // pred_check_branch
          %2161 = sbr.rel (%p2159) target = $region84
        $region83: #{tpu_custom_call.1} parent=79 // pred_region
          %2163 = vsyncadd %s2156, 0
          %s2164 = scalar_lea.hbm %s15, %s29
          %s2166 = sshll.u32 %s2158, 4
          %s2167 = int_to_ptr.vmem [resolvable:$true] %s2166
          %s2168 = sshll.u32 %s2164, 4
          %s2169 = int_to_ptr.hbm [resolvable:$true] %s2168
          %2171 = dma.vmem_to_hbm [thread:$0]  %s2167, 16, %s2169, %s2156
        $region84: #{tpu_custom_call.1} parent=79 // pred_fallthru
          _
      $region80: #{tpu_custom_call.1} parent=5 // pred_fallthru
        _
      %p2172 = scmp.le.s32.totalorder 2, %s24
      // Predicated region
      $region85: #{tpu_custom_call.1} parent=5 // pred_check
        %p2173 = pneg %p2172
      $region86: #{tpu_custom_call.1} parent=5 // pred_check_branch
        %2175 = sbr.rel (%p2173) target = $region88
      $region87: #{tpu_custom_call.1} parent=5 // pred_region
        %s2176 = ssub.s32 %s24, 2
        // Predicated region
        $region89: #{tpu_custom_call.1} parent=87 // pred_check
          %p2177 = pneg %p373
        $region90: #{tpu_custom_call.1} parent=87 // pred_check_branch
          %2179 = sbr.rel (%p2177) target = $region92
        $region91: #{tpu_custom_call.1} parent=87 // pred_region
          %s2180 = sand.u32 %s358, 1
          %s2181 = scalar_lea.sflag [#allocation3], %s2180
          %s2182 = sand.u32 %s358, 1
          %s2183 = scalar_lea.vmem [#allocation2], %s2182
          %2185 = dma.done %s2181, 16
        $region92: #{tpu_custom_call.1} parent=87 // pred_fallthru
          _
      $region88: #{tpu_custom_call.1} parent=5 // pred_fallthru
        _
    $region6: #{tpu_custom_call.1} parent=1 // loop_footer
      %s28 = sadd.s32 1, %s24
    $region7: #{tpu_custom_call.1} parent=1 // loop_footer_branch
      %23 = sbr.rel target = $region3
    $region8: #{tpu_custom_call.1} parent=1 // loop_exit
      _
    %2186 = vsyncpa [#allocation3], 1
    %s2187 = scalar_lea.sflag [#allocation3], 1
    %2188 = vsyncpa %s2187, 1

</llo_original>
